<compile_context>
chip_gen: v5e
topology: v5e:2x2
jax: 0.10.0
libtpu: 0.0.40
codegen_flags: <defaults>
</compile_context>

<pallas_src>
import functools

import jax
import jax.numpy as jnp
from jax.experimental import pallas as pl
from jax.experimental.pallas import tpu as pltpu


# ---------------------------------------------------------------------------
# Fused transformer-block kernel (one grid step = one batch element)
# ---------------------------------------------------------------------------

def _block_kernel(x_ref, a_ref,
                  wqkv_ref, bqkv_ref, wos_ref, bos_ref, ln1g_ref, ln1b_ref,
                  wqc_ref, bqc_ref, wkvc_ref, bkvc_ref, woc_ref, boc_ref,
                  ln2g_ref, ln2b_ref,
                  w1_ref, b1_ref, w2_ref, b2_ref, ln3g_ref, ln3b_ref,
                  o_ref, *, num_heads, eps):
    x = x_ref[...].astype(jnp.float32)        # (S, D)   smiles activations
    a = a_ref[...].astype(jnp.float32)        # (Skv, D) af2 embedding
    D = x.shape[-1]
    hd = D // num_heads
    scale = 1.0 / float(hd) ** 0.5

    # Per-head lane masks, hoisted once per kernel invocation and reused by
    # both the self- and cross-attention (VPU work done once, not per attn).
    lane = jax.lax.broadcasted_iota(jnp.int32, (1, D), 1)
    masks = [((lane >= h * hd) & (lane < (h + 1) * hd)).astype(jnp.float32)
             for h in range(num_heads)]

    def mm(lhs, w, b=None):
        # bf16 operands into the MXU, f32 accumulation.
        out = jnp.dot(lhs.astype(jnp.bfloat16), w, preferred_element_type=jnp.float32)
        if b is not None:
            out = out + b.astype(jnp.float32)
        return out

    def attn(q, k, v):
        # All heads in one pass; head selection via lane masks (statically
        # unrolled loop) -> per-head contributions have disjoint column
        # support, so their sum equals the concatenated multi-head output.
        # Masking Q alone is enough for the score matmul (zeroed Q lanes kill
        # the cross-head contractions); V is masked to keep output columns
        # disjoint.  K is cast to bf16 exactly once.
        kb = k.astype(jnp.bfloat16)
        ctx = jnp.zeros(q.shape, jnp.float32)
        for h in range(num_heads):
            msk = masks[h]
            qh = (q * msk).astype(jnp.bfloat16)
            s = jax.lax.dot_general(qh, kb, (((1,), (1,)), ((), ())),
                                    preferred_element_type=jnp.float32) * scale
            s = s - jnp.max(s, axis=-1, keepdims=True)
            p = jnp.exp(s)
            p = p * pl.reciprocal(jnp.sum(p, axis=-1, keepdims=True), approx=True)
            ctx = ctx + jnp.dot(p.astype(jnp.bfloat16),
                                (v * msk).astype(jnp.bfloat16),
                                preferred_element_type=jnp.float32)
        return ctx

    def add_ln(y, res, g, b):
        z = y + res
        mu = jnp.mean(z, axis=-1, keepdims=True)
        c = z - mu
        var = jnp.mean(c * c, axis=-1, keepdims=True)
        return (c * jax.lax.rsqrt(var + eps) * g.astype(jnp.float32)
                + b.astype(jnp.float32))

    # ---- self attention (Q/K/V weights packed into one (D, 3D) slab) ----
    q = mm(x, wqkv_ref[:, 0:D],         bqkv_ref[:, 0:D])
    k = mm(x, wqkv_ref[:, D:2 * D],     bqkv_ref[:, D:2 * D])
    v = mm(x, wqkv_ref[:, 2 * D:3 * D], bqkv_ref[:, 2 * D:3 * D])
    sa = mm(attn(q, k, v), wos_ref[...], bos_ref[...])
    x = add_ln(sa, x, ln1g_ref[...], ln1b_ref[...])

    # ---- cross attention: query = smiles, key/value = af2 (packed (D, 2D)) ----
    qc = mm(x, wqc_ref[...], bqc_ref[...])
    kc = mm(a, wkvc_ref[:, 0:D],     bkvc_ref[:, 0:D])
    vc = mm(a, wkvc_ref[:, D:2 * D], bkvc_ref[:, D:2 * D])
    ca = mm(attn(qc, kc, vc), woc_ref[...], boc_ref[...])
    x = add_ln(ca, x, ln2g_ref[...], ln2b_ref[...])

    # ---- feed-forward ----
    h = jnp.maximum(mm(x, w1_ref[...], b1_ref[...]), 0.0)
    h = mm(h, w2_ref[...], b2_ref[...])
    x = add_ln(h, x, ln3g_ref[...], ln3b_ref[...])

    o_ref[...] = x.astype(o_ref.dtype)


def transformer_block(smiles, af2, packed, num_heads, eps=1e-5):
    """One fused pallas_call for the whole transformer block. packed: 20 arrays."""
    B, S, D = smiles.shape
    Skv = af2.shape[1]
    F = packed[14].shape[1]

    def const_spec(arr):
        nd = arr.ndim
        return pl.BlockSpec(tuple(arr.shape), lambda *_: (0,) * nd)

    in_specs = ([pl.BlockSpec((None, S, D), lambda b: (b, 0, 0)),
                 pl.BlockSpec((None, Skv, D), lambda b: (b, 0, 0))]
                + [const_spec(p) for p in packed])

    mm_flops = (2 * S * D * 3 * D + 2 * S * D * D                       # self qkv + out
                + 2 * S * D * D + 2 * Skv * D * 2 * D + 2 * S * D * D   # cross q/kv/out
                + 2 * S * D * F + 2 * S * F * D)                        # ffn
    attn_flops = 4 * S * S * D + 4 * S * Skv * D
    flops = int(B * (mm_flops + attn_flops))
    transcendentals = int(B * num_heads * S * (S + Skv))
    bytes_accessed = int(sum(int(p.size) * p.dtype.itemsize for p in packed)
                         + (2 * int(smiles.size) + int(af2.size)) * 4)

    kern = functools.partial(_block_kernel, num_heads=num_heads, eps=eps)
    return pl.pallas_call(
        kern,
        out_shape=jax.ShapeDtypeStruct((B, S, D), jnp.float32),
        grid=(B,),
        in_specs=in_specs,
        out_specs=pl.BlockSpec((None, S, D), lambda b: (b, 0, 0)),
        compiler_params=pltpu.CompilerParams(
            dimension_semantics=("parallel",),          # v7x: 2 TCs split the batch
            vmem_limit_bytes=32 * 1024 * 1024),
        cost_estimate=pl.CostEstimate(flops=flops,
                                      transcendentals=transcendentals,
                                      bytes_accessed=bytes_accessed),
    )(smiles, af2, *packed)


# ---------------------------------------------------------------------------
# Regressor kernel: K-tiled reduction grid + VMEM accumulator, both linears fused
# ---------------------------------------------------------------------------

def _regressor_kernel(x_ref, w1_ref, w2_ref, b2_ref, o_ref, acc_ref):
    k = pl.program_id(0)

    @pl.when(k == 0)
    def _init():
        acc_ref[...] = jnp.zeros_like(acc_ref)

    acc_ref[...] += jnp.dot(x_ref[...].astype(jnp.bfloat16), w1_ref[...],
                            preferred_element_type=jnp.float32)

    @pl.when(k == pl.num_programs(0) - 1)
    def _finalize():
        h = jnp.maximum(acc_ref[...], 0.0).astype(jnp.bfloat16)
        o_ref[...] = (jnp.dot(h, w2_ref[...], preferred_element_type=jnp.float32)
                      + b2_ref[...].astype(jnp.float32)).astype(o_ref.dtype)


def _pick_tk(K):
    for t in (512, 256, 128):
        if K % t == 0:
            return t
    return K


def regressor(flat, w1, w2, b2):
    """flat: (B, S*D) f32; w1: (S*D, H) bf16; w2: (H, 1) bf16; b2: (1, 1) f32."""
    B, K = flat.shape
    Hreg = w1.shape[1]
    tk = _pick_tk(K)
    nk = K // tk
    flops = int(2 * B * K * Hreg + 2 * B * Hreg)
    bytes_accessed = int(flat.size * 4 + w1.size * 2 + w2.size * 2 + B * 4)
    return pl.pallas_call(
        _regressor_kernel,
        out_shape=jax.ShapeDtypeStruct((B, 1), jnp.float32),
        grid=(nk,),
        in_specs=[
            pl.BlockSpec((B, tk), lambda k: (0, k)),
            pl.BlockSpec((tk, Hreg), lambda k: (k, 0)),
            pl.BlockSpec((Hreg, 1), lambda k: (0, 0)),
            pl.BlockSpec((1, 1), lambda k: (0, 0)),
        ],
        out_specs=pl.BlockSpec((B, 1), lambda k: (0, 0)),
        scratch_shapes=[pltpu.VMEM((B, Hreg), jnp.float32)],
        compiler_params=pltpu.CompilerParams(
            dimension_semantics=("arbitrary",),
            vmem_limit_bytes=32 * 1024 * 1024),
        cost_estimate=pl.CostEstimate(flops=flops, transcendentals=0,
                                      bytes_accessed=bytes_accessed),
    )(flat, w1, w2, b2)


# ---------------------------------------------------------------------------
# Model: 1 pallas_call per block + 1 for the regressor
# ---------------------------------------------------------------------------

def docking_score_predictor(smiles_emb, af2_emb, packed, num_heads):
    x = smiles_emb
    for blk in packed["blocks"]:
        x = transformer_block(x, af2_emb, blk, num_heads)
    B, S, D = x.shape
    flat = x.reshape(B, S * D)                        # lane-dense (B, S*D) slab
    return regressor(flat, packed["reg_w1"], packed["reg_w2"], packed["reg_b2"])


# ---------------------------------------------------------------------------
# Parameter construction / packing (weights pre-cast to bf16 once, host side)
# ---------------------------------------------------------------------------

def _init_mha(key, D):
    ks = jax.random.split(key, 8)
    s = 0.05
    return {
        "wq": jax.random.normal(ks[0], (D, D), jnp.float32) * s,
        "bq": jax.random.normal(ks[1], (1, D), jnp.float32) * s,
        "wk": jax.random.normal(ks[2], (D, D), jnp.float32) * s,
        "bk": jax.random.normal(ks[3], (1, D), jnp.float32) * s,
        "wv": jax.random.normal(ks[4], (D, D), jnp.float32) * s,
        "bv": jax.random.normal(ks[5], (1, D), jnp.float32) * s,
        "wo": jax.random.normal(ks[6], (D, D), jnp.float32) * s,
        "bo": jax.random.normal(ks[7], (1, D), jnp.float32) * s,
    }


def init_params(key, embed_dim, ffn_hidden_dim, num_blocks, smiles_max_len,
                regressor_hidden_dim):
    D, F = embed_dim, ffn_hidden_dim
    s = 0.05
    blocks = []
    keys = jax.random.split(key, num_blocks + 1)
    for bkey in keys[:num_blocks]:
        bk = jax.random.split(bkey, 6)
        blocks.append({
            "self_attn": _init_mha(bk[0], D),
            "cross_attn": _init_mha(bk[1], D),
            "ffn_w1": jax.random.normal(bk[2], (D, F), jnp.float32) * s,
            "ffn_b1": jax.random.normal(bk[3], (1, F), jnp.float32) * s,
            "ffn_w2": jax.random.normal(bk[4], (F, D), jnp.float32) * s,
            "ffn_b2": jax.random.normal(bk[5], (1, D), jnp.float32) * s,
            "ln1_g": jnp.ones((1, D), jnp.float32), "ln1_b": jnp.zeros((1, D), jnp.float32),
            "ln2_g": jnp.ones((1, D), jnp.float32), "ln2_b": jnp.zeros((1, D), jnp.float32),
            "ln3_g": jnp.ones((1, D), jnp.float32), "ln3_b": jnp.zeros((1, D), jnp.float32),
        })
    rk = jax.random.split(keys[-1], 3)
    return {
        "blocks": blocks,
        "reg_w1": jax.random.normal(rk[0], (D * smiles_max_len, regressor_hidden_dim),
                                    jnp.float32) * s,
        "reg_w2": jax.random.normal(rk[1], (regressor_hidden_dim, 1), jnp.float32) * s,
        "reg_b2": jax.random.normal(rk[2], (1, 1), jnp.float32) * s,
    }


def pack_block_params(bp):
    """Pack per-block weights for the fused kernel (matmul weights -> bf16)."""
    sa, ca = bp["self_attn"], bp["cross_attn"]
    bf = lambda w: w.astype(jnp.bfloat16)
    return [
        bf(jnp.concatenate([sa["wq"], sa["wk"], sa["wv"]], axis=1)),   # (D, 3D)
        jnp.concatenate([sa["bq"], sa["bk"], sa["bv"]], axis=1),       # (1, 3D)
        bf(sa["wo"]), sa["bo"],
        bp["ln1_g"], bp["ln1_b"],
        bf(ca["wq"]), ca["bq"],
        bf(jnp.concatenate([ca["wk"], ca["wv"]], axis=1)),             # (D, 2D)
        jnp.concatenate([ca["bk"], ca["bv"]], axis=1),                 # (1, 2D)
        bf(ca["wo"]), ca["bo"],
        bp["ln2_g"], bp["ln2_b"],
        bf(bp["ffn_w1"]), bp["ffn_b1"], bf(bp["ffn_w2"]), bp["ffn_b2"],
        bp["ln3_g"], bp["ln3_b"],
    ]


def pack_params(params):
    return {
        "blocks": [pack_block_params(bp) for bp in params["blocks"]],
        "reg_w1": params["reg_w1"].astype(jnp.bfloat16),
        "reg_w2": params["reg_w2"].astype(jnp.bfloat16),
        "reg_b2": params["reg_b2"],
    }


# ---------------------------------------------------------------------------
# Pure-jnp f32 reference (sanity check of the Pallas path)
# ---------------------------------------------------------------------------

def _ref_ln(y, g, b, eps=1e-5):
    m = jnp.mean(y, -1, keepdims=True)
    v = jnp.mean((y - m) ** 2, -1, keepdims=True)
    return (y - m) * jax.lax.rsqrt(v + eps) * g + b


def _ref_mha(xq, xkv, p, H):
    B, Sq, D = xq.shape
    Sk = xkv.shape[1]
    hd = D // H
    q = (xq.reshape(B * Sq, D) @ p["wq"] + p["bq"]).reshape(B, Sq, H, hd).transpose(0, 2, 1, 3)
    k = (xkv.reshape(B * Sk, D) @ p["wk"] + p["bk"]).reshape(B, Sk, H, hd).transpose(0, 2, 1, 3)
    v = (xkv.reshape(B * Sk, D) @ p["wv"] + p["bv"]).reshape(B, Sk, H, hd).transpose(0, 2, 1, 3)
    s = jnp.einsum("bhqd,bhkd->bhqk", q, k) / jnp.sqrt(hd).astype(jnp.float32)
    a = jax.nn.softmax(s, axis=-1)
    o = jnp.einsum("bhqk,bhkd->bhqd", a, v).transpose(0, 2, 1, 3).reshape(B * Sq, D)
    return (o @ p["wo"] + p["bo"]).reshape(B, Sq, D)


def reference_forward(smiles, af2, params, H):
    x = smiles
    for p in params["blocks"]:
        B, S, D = x.shape
        x = _ref_ln(x + _ref_mha(x, x, p["self_attn"], H), p["ln1_g"], p["ln1_b"])
        x = _ref_ln(x + _ref_mha(x, af2, p["cross_attn"], H), p["ln2_g"], p["ln2_b"])
        h = jnp.maximum(x.reshape(B * S, D) @ p["ffn_w1"] + p["ffn_b1"], 0.0)
        h = (h @ p["ffn_w2"] + p["ffn_b2"]).reshape(B, S, D)
        x = _ref_ln(x + h, p["ln3_g"], p["ln3_b"])
    B, S, D = x.shape
    flat = x.reshape(B, S * D)
    h = jnp.maximum(flat @ params["reg_w1"], 0.0)
    return h @ params["reg_w2"] + params["reg_b2"]


# ---------------------------------------------------------------------------

if __name__ == "__main__":
    batch = 2
    embed_dim = 32
    num_heads = 4
    ffn_hidden_dim = 64
    num_transformer_blocks = 2
    smiles_max_len = 8            # smiles sequence length
    af2_len = 8                   # af2 sequence length
    regressor_hidden_dim = 64

    key = jax.random.PRNGKey(0)
    kp, ks, ka = jax.random.split(key, 3)
    params = init_params(kp, embed_dim, ffn_hidden_dim, num_transformer_blocks,
                         smiles_max_len, regressor_hidden_dim)
    packed = pack_params(params)
    smiles_embedding = jax.random.normal(ks, (batch, smiles_max_len, embed_dim), jnp.float32)
    af2_embedding = jax.random.normal(ka, (batch, af2_len, embed_dim), jnp.float32)

    fwd = jax.jit(functools.partial(docking_score_predictor, num_heads=num_heads))
    score = fwd(smiles_embedding, af2_embedding, packed)
    score = jax.block_until_ready(score)
    assert score.shape == (batch, 1)

    # f32 reference vs bf16-MXU/approx-reciprocal kernel path -> loosened tolerance.
    ref = reference_forward(smiles_embedding, af2_embedding, params, num_heads)
    assert jnp.allclose(score, ref, atol=3e-2, rtol=3e-2), (score, ref)

    # TODO(synk): return_attn_wts=True branch (per-block attention weight lists)
    # is not exercised; dropout is inference-mode identity.
    print("KERNEL_OK")
</pallas_src>

<mosaic_0001>
module attributes {stable_mosaic.version = 11 : i64} {
  func.func @_block_kernel(%arg0: i32, %arg1: memref<1x8x32xf32, #tpu.memory_space<vmem>>, %arg2: memref<1x8x32xf32, #tpu.memory_space<vmem>>, %arg3: memref<32x96xbf16, #tpu.memory_space<vmem>>, %arg4: memref<1x96xf32, #tpu.memory_space<vmem>>, %arg5: memref<32x32xbf16, #tpu.memory_space<vmem>>, %arg6: memref<1x32xf32, #tpu.memory_space<vmem>>, %arg7: memref<1x32xf32, #tpu.memory_space<vmem>>, %arg8: memref<1x32xf32, #tpu.memory_space<vmem>>, %arg9: memref<32x32xbf16, #tpu.memory_space<vmem>>, %arg10: memref<1x32xf32, #tpu.memory_space<vmem>>, %arg11: memref<32x64xbf16, #tpu.memory_space<vmem>>, %arg12: memref<1x64xf32, #tpu.memory_space<vmem>>, %arg13: memref<32x32xbf16, #tpu.memory_space<vmem>>, %arg14: memref<1x32xf32, #tpu.memory_space<vmem>>, %arg15: memref<1x32xf32, #tpu.memory_space<vmem>>, %arg16: memref<1x32xf32, #tpu.memory_space<vmem>>, %arg17: memref<32x64xbf16, #tpu.memory_space<vmem>>, %arg18: memref<1x64xf32, #tpu.memory_space<vmem>>, %arg19: memref<64x32xbf16, #tpu.memory_space<vmem>>, %arg20: memref<1x32xf32, #tpu.memory_space<vmem>>, %arg21: memref<1x32xf32, #tpu.memory_space<vmem>>, %arg22: memref<1x32xf32, #tpu.memory_space<vmem>>, %arg23: memref<1x8x32xf32, #tpu.memory_space<vmem>>) attributes {dimension_semantics = [#tpu.dimension_semantics<parallel>], iteration_bounds = array<i64: 2>, scalar_prefetch = 0 : i64, scratch_operands = 0 : i64, tpu.core_type = #tpu.core_type<tc>, window_params = [{transform_indices = @transform_0, window_bounds = array<i64: 1, 8, 32>}, {transform_indices = @transform_1, window_bounds = array<i64: 1, 8, 32>}, {pipeline_mode = #tpu.pipeline_mode<synchronous>, transform_indices = @transform_2, window_bounds = array<i64: 32, 96>}, {pipeline_mode = #tpu.pipeline_mode<synchronous>, transform_indices = @transform_3, window_bounds = array<i64: 1, 96>}, {pipeline_mode = #tpu.pipeline_mode<synchronous>, transform_indices = @transform_4, window_bounds = array<i64: 32, 32>}, {pipeline_mode = #tpu.pipeline_mode<synchronous>, transform_indices = @transform_5, window_bounds = array<i64: 1, 32>}, {pipeline_mode = #tpu.pipeline_mode<synchronous>, transform_indices = @transform_6, window_bounds = array<i64: 1, 32>}, {pipeline_mode = #tpu.pipeline_mode<synchronous>, transform_indices = @transform_7, window_bounds = array<i64: 1, 32>}, {pipeline_mode = #tpu.pipeline_mode<synchronous>, transform_indices = @transform_8, window_bounds = array<i64: 32, 32>}, {pipeline_mode = #tpu.pipeline_mode<synchronous>, transform_indices = @transform_9, window_bounds = array<i64: 1, 32>}, {pipeline_mode = #tpu.pipeline_mode<synchronous>, transform_indices = @transform_10, window_bounds = array<i64: 32, 64>}, {pipeline_mode = #tpu.pipeline_mode<synchronous>, transform_indices = @transform_11, window_bounds = array<i64: 1, 64>}, {pipeline_mode = #tpu.pipeline_mode<synchronous>, transform_indices = @transform_12, window_bounds = array<i64: 32, 32>}, {pipeline_mode = #tpu.pipeline_mode<synchronous>, transform_indices = @transform_13, window_bounds = array<i64: 1, 32>}, {pipeline_mode = #tpu.pipeline_mode<synchronous>, transform_indices = @transform_14, window_bounds = array<i64: 1, 32>}, {pipeline_mode = #tpu.pipeline_mode<synchronous>, transform_indices = @transform_15, window_bounds = array<i64: 1, 32>}, {pipeline_mode = #tpu.pipeline_mode<synchronous>, transform_indices = @transform_16, window_bounds = array<i64: 32, 64>}, {pipeline_mode = #tpu.pipeline_mode<synchronous>, transform_indices = @transform_17, window_bounds = array<i64: 1, 64>}, {pipeline_mode = #tpu.pipeline_mode<synchronous>, transform_indices = @transform_18, window_bounds = array<i64: 64, 32>}, {pipeline_mode = #tpu.pipeline_mode<synchronous>, transform_indices = @transform_19, window_bounds = array<i64: 1, 32>}, {pipeline_mode = #tpu.pipeline_mode<synchronous>, transform_indices = @transform_20, window_bounds = array<i64: 1, 32>}, {pipeline_mode = #tpu.pipeline_mode<synchronous>, transform_indices = @transform_21, window_bounds = array<i64: 1, 32>}, {transform_indices = @transform_22, window_bounds = array<i64: 1, 8, 32>}]} {
    %c0 = arith.constant 0 : index
    %c0_0 = arith.constant 0 : index
    %c0_1 = arith.constant 0 : index
    %0 = vector.load %arg1[%c0, %c0_0, %c0_1] : memref<1x8x32xf32, #tpu.memory_space<vmem>>, vector<1x8x32xf32>
    %1 = vector.shape_cast %0 : vector<1x8x32xf32> to vector<8x32xf32>
    %c0_2 = arith.constant 0 : index
    %c0_3 = arith.constant 0 : index
    %c0_4 = arith.constant 0 : index
    %2 = vector.load %arg2[%c0_2, %c0_3, %c0_4] : memref<1x8x32xf32, #tpu.memory_space<vmem>>, vector<1x8x32xf32>
    %3 = vector.shape_cast %2 : vector<1x8x32xf32> to vector<8x32xf32>
    %4 = tpu.iota {dimensions = array<i32: 1>} : vector<1x32xi32>
    %c0_i32 = arith.constant 0 : i32
    %5 = vector.broadcast %c0_i32 : i32 to vector<1x32xi32>
    %6 = arith.cmpi sge, %4, %5 : vector<1x32xi32>
    %c8_i32 = arith.constant 8 : i32
    %7 = vector.broadcast %c8_i32 : i32 to vector<1x32xi32>
    %8 = arith.cmpi slt, %4, %7 : vector<1x32xi32>
    %9 = arith.andi %6, %8 : vector<1x32xi1>
    %10 = arith.extui %9 : vector<1x32xi1> to vector<1x32xi32>
    %11 = arith.sitofp %10 : vector<1x32xi32> to vector<1x32xf32>
    %c8_i32_5 = arith.constant 8 : i32
    %12 = vector.broadcast %c8_i32_5 : i32 to vector<1x32xi32>
    %13 = arith.cmpi sge, %4, %12 : vector<1x32xi32>
    %c16_i32 = arith.constant 16 : i32
    %14 = vector.broadcast %c16_i32 : i32 to vector<1x32xi32>
    %15 = arith.cmpi slt, %4, %14 : vector<1x32xi32>
    %16 = arith.andi %13, %15 : vector<1x32xi1>
    %17 = arith.extui %16 : vector<1x32xi1> to vector<1x32xi32>
    %18 = arith.sitofp %17 : vector<1x32xi32> to vector<1x32xf32>
    %c16_i32_6 = arith.constant 16 : i32
    %19 = vector.broadcast %c16_i32_6 : i32 to vector<1x32xi32>
    %20 = arith.cmpi sge, %4, %19 : vector<1x32xi32>
    %c24_i32 = arith.constant 24 : i32
    %21 = vector.broadcast %c24_i32 : i32 to vector<1x32xi32>
    %22 = arith.cmpi slt, %4, %21 : vector<1x32xi32>
    %23 = arith.andi %20, %22 : vector<1x32xi1>
    %24 = arith.extui %23 : vector<1x32xi1> to vector<1x32xi32>
    %25 = arith.sitofp %24 : vector<1x32xi32> to vector<1x32xf32>
    %c24_i32_7 = arith.constant 24 : i32
    %26 = vector.broadcast %c24_i32_7 : i32 to vector<1x32xi32>
    %27 = arith.cmpi sge, %4, %26 : vector<1x32xi32>
    %c32_i32 = arith.constant 32 : i32
    %28 = vector.broadcast %c32_i32 : i32 to vector<1x32xi32>
    %29 = arith.cmpi slt, %4, %28 : vector<1x32xi32>
    %30 = arith.andi %27, %29 : vector<1x32xi1>
    %31 = arith.extui %30 : vector<1x32xi1> to vector<1x32xi32>
    %32 = arith.sitofp %31 : vector<1x32xi32> to vector<1x32xf32>
    %c0_8 = arith.constant 0 : index
    %c0_9 = arith.constant 0 : index
    %33 = vector.load %arg3[%c0_8, %c0_9] : memref<32x96xbf16, #tpu.memory_space<vmem>>, vector<32x32xbf16>
    %c0_10 = arith.constant 0 : index
    %c0_11 = arith.constant 0 : index
    %34 = vector.load %arg4[%c0_10, %c0_11] : memref<1x96xf32, #tpu.memory_space<vmem>>, vector<1x32xf32>
    %35 = arith.truncf %1 : vector<8x32xf32> to vector<8x32xbf16>
    %cst = arith.constant dense<0.000000e+00> : vector<8x32xf32>
    %36 = tpu.matmul %35, %33, %cst {dimension_numbers = #tpu.dot_dimension_numbers<[1], [0], [0], [1], [0, 0, 1, 1], [], []>} : vector<8x32xbf16>, vector<32x32xbf16>, vector<8x32xf32> -> vector<8x32xf32>
    %37 = vector.broadcast %34 : vector<1x32xf32> to vector<8x32xf32>
    %38 = arith.addf %36, %37 : vector<8x32xf32>
    %c0_12 = arith.constant 0 : index
    %c32 = arith.constant 32 : index
    %39 = vector.load %arg3[%c0_12, %c32] : memref<32x96xbf16, #tpu.memory_space<vmem>>, vector<32x32xbf16>
    %c0_13 = arith.constant 0 : index
    %c32_14 = arith.constant 32 : index
    %40 = vector.load %arg4[%c0_13, %c32_14] : memref<1x96xf32, #tpu.memory_space<vmem>>, vector<1x32xf32>
    %41 = arith.truncf %1 : vector<8x32xf32> to vector<8x32xbf16>
    %cst_15 = arith.constant dense<0.000000e+00> : vector<8x32xf32>
    %42 = tpu.matmul %41, %39, %cst_15 {dimension_numbers = #tpu.dot_dimension_numbers<[1], [0], [0], [1], [0, 0, 1, 1], [], []>} : vector<8x32xbf16>, vector<32x32xbf16>, vector<8x32xf32> -> vector<8x32xf32>
    %43 = vector.broadcast %40 : vector<1x32xf32> to vector<8x32xf32>
    %44 = arith.addf %42, %43 : vector<8x32xf32>
    %c0_16 = arith.constant 0 : index
    %c64 = arith.constant 64 : index
    %45 = vector.load %arg3[%c0_16, %c64] : memref<32x96xbf16, #tpu.memory_space<vmem>>, vector<32x32xbf16>
    %c0_17 = arith.constant 0 : index
    %c64_18 = arith.constant 64 : index
    %46 = vector.load %arg4[%c0_17, %c64_18] : memref<1x96xf32, #tpu.memory_space<vmem>>, vector<1x32xf32>
    %47 = arith.truncf %1 : vector<8x32xf32> to vector<8x32xbf16>
    %cst_19 = arith.constant dense<0.000000e+00> : vector<8x32xf32>
    %48 = tpu.matmul %47, %45, %cst_19 {dimension_numbers = #tpu.dot_dimension_numbers<[1], [0], [0], [1], [0, 0, 1, 1], [], []>} : vector<8x32xbf16>, vector<32x32xbf16>, vector<8x32xf32> -> vector<8x32xf32>
    %49 = vector.broadcast %46 : vector<1x32xf32> to vector<8x32xf32>
    %50 = arith.addf %48, %49 : vector<8x32xf32>
    %51 = arith.truncf %44 : vector<8x32xf32> to vector<8x32xbf16>
    %cst_20 = arith.constant 0.000000e+00 : f32
    %52 = vector.broadcast %cst_20 : f32 to vector<8x32xf32>
    %53 = vector.broadcast %11 : vector<1x32xf32> to vector<8x32xf32>
    %54 = arith.mulf %38, %53 : vector<8x32xf32>
    %55 = arith.truncf %54 : vector<8x32xf32> to vector<8x32xbf16>
    %cst_21 = arith.constant dense<0.000000e+00> : vector<8x8xf32>
    %56 = tpu.matmul %55, %51, %cst_21 {dimension_numbers = #tpu.dot_dimension_numbers<[1], [1], [0], [0], [0, 0, 1, 0], [], []>} : vector<8x32xbf16>, vector<8x32xbf16>, vector<8x8xf32> -> vector<8x8xf32>
    %cst_22 = arith.constant 0.353553385 : f32
    %57 = vector.broadcast %cst_22 : f32 to vector<8x8xf32>
    %58 = arith.mulf %56, %57 : vector<8x8xf32>
    %cst_23 = arith.constant dense<0xFF800000> : vector<8xf32>
    %59 = vector.multi_reduction <maximumf>, %58, %cst_23 [1] : vector<8x8xf32> to vector<8xf32>
    %60 = vector.shape_cast %59 : vector<8xf32> to vector<8x1xf32>
    %61 = vector.broadcast %60 : vector<8x1xf32> to vector<8x8xf32>
    %62 = arith.subf %58, %61 : vector<8x8xf32>
    %63 = math.exp %62 : vector<8x8xf32>
    %cst_24 = arith.constant dense<0.000000e+00> : vector<8xf32>
    %64 = vector.multi_reduction <add>, %63, %cst_24 [1] : vector<8x8xf32> to vector<8xf32>
    %65 = vector.shape_cast %64 : vector<8xf32> to vector<8x1xf32>
    %66 = tpu.reciprocal %65 {approx = true} : vector<8x1xf32> -> vector<8x1xf32>
    %67 = vector.broadcast %66 : vector<8x1xf32> to vector<8x8xf32>
    %68 = arith.mulf %63, %67 : vector<8x8xf32>
    %69 = arith.truncf %68 : vector<8x8xf32> to vector<8x8xbf16>
    %70 = vector.broadcast %11 : vector<1x32xf32> to vector<8x32xf32>
    %71 = arith.mulf %50, %70 : vector<8x32xf32>
    %72 = arith.truncf %71 : vector<8x32xf32> to vector<8x32xbf16>
    %cst_25 = arith.constant dense<0.000000e+00> : vector<8x32xf32>
    %73 = tpu.matmul %69, %72, %cst_25 {dimension_numbers = #tpu.dot_dimension_numbers<[1], [0], [0], [1], [0, 0, 1, 1], [], []>} : vector<8x8xbf16>, vector<8x32xbf16>, vector<8x32xf32> -> vector<8x32xf32>
    %74 = arith.addf %52, %73 : vector<8x32xf32>
    %75 = vector.broadcast %18 : vector<1x32xf32> to vector<8x32xf32>
    %76 = arith.mulf %38, %75 : vector<8x32xf32>
    %77 = arith.truncf %76 : vector<8x32xf32> to vector<8x32xbf16>
    %cst_26 = arith.constant dense<0.000000e+00> : vector<8x8xf32>
    %78 = tpu.matmul %77, %51, %cst_26 {dimension_numbers = #tpu.dot_dimension_numbers<[1], [1], [0], [0], [0, 0, 1, 0], [], []>} : vector<8x32xbf16>, vector<8x32xbf16>, vector<8x8xf32> -> vector<8x8xf32>
    %cst_27 = arith.constant 0.353553385 : f32
    %79 = vector.broadcast %cst_27 : f32 to vector<8x8xf32>
    %80 = arith.mulf %78, %79 : vector<8x8xf32>
    %cst_28 = arith.constant dense<0xFF800000> : vector<8xf32>
    %81 = vector.multi_reduction <maximumf>, %80, %cst_28 [1] : vector<8x8xf32> to vector<8xf32>
    %82 = vector.shape_cast %81 : vector<8xf32> to vector<8x1xf32>
    %83 = vector.broadcast %82 : vector<8x1xf32> to vector<8x8xf32>
    %84 = arith.subf %80, %83 : vector<8x8xf32>
    %85 = math.exp %84 : vector<8x8xf32>
    %cst_29 = arith.constant dense<0.000000e+00> : vector<8xf32>
    %86 = vector.multi_reduction <add>, %85, %cst_29 [1] : vector<8x8xf32> to vector<8xf32>
    %87 = vector.shape_cast %86 : vector<8xf32> to vector<8x1xf32>
    %88 = tpu.reciprocal %87 {approx = true} : vector<8x1xf32> -> vector<8x1xf32>
    %89 = vector.broadcast %88 : vector<8x1xf32> to vector<8x8xf32>
    %90 = arith.mulf %85, %89 : vector<8x8xf32>
    %91 = arith.truncf %90 : vector<8x8xf32> to vector<8x8xbf16>
    %92 = vector.broadcast %18 : vector<1x32xf32> to vector<8x32xf32>
    %93 = arith.mulf %50, %92 : vector<8x32xf32>
    %94 = arith.truncf %93 : vector<8x32xf32> to vector<8x32xbf16>
    %cst_30 = arith.constant dense<0.000000e+00> : vector<8x32xf32>
    %95 = tpu.matmul %91, %94, %cst_30 {dimension_numbers = #tpu.dot_dimension_numbers<[1], [0], [0], [1], [0, 0, 1, 1], [], []>} : vector<8x8xbf16>, vector<8x32xbf16>, vector<8x32xf32> -> vector<8x32xf32>
    %96 = arith.addf %74, %95 : vector<8x32xf32>
    %97 = vector.broadcast %25 : vector<1x32xf32> to vector<8x32xf32>
    %98 = arith.mulf %38, %97 : vector<8x32xf32>
    %99 = arith.truncf %98 : vector<8x32xf32> to vector<8x32xbf16>
    %cst_31 = arith.constant dense<0.000000e+00> : vector<8x8xf32>
    %100 = tpu.matmul %99, %51, %cst_31 {dimension_numbers = #tpu.dot_dimension_numbers<[1], [1], [0], [0], [0, 0, 1, 0], [], []>} : vector<8x32xbf16>, vector<8x32xbf16>, vector<8x8xf32> -> vector<8x8xf32>
    %cst_32 = arith.constant 0.353553385 : f32
    %101 = vector.broadcast %cst_32 : f32 to vector<8x8xf32>
    %102 = arith.mulf %100, %101 : vector<8x8xf32>
    %cst_33 = arith.constant dense<0xFF800000> : vector<8xf32>
    %103 = vector.multi_reduction <maximumf>, %102, %cst_33 [1] : vector<8x8xf32> to vector<8xf32>
    %104 = vector.shape_cast %103 : vector<8xf32> to vector<8x1xf32>
    %105 = vector.broadcast %104 : vector<8x1xf32> to vector<8x8xf32>
    %106 = arith.subf %102, %105 : vector<8x8xf32>
    %107 = math.exp %106 : vector<8x8xf32>
    %cst_34 = arith.constant dense<0.000000e+00> : vector<8xf32>
    %108 = vector.multi_reduction <add>, %107, %cst_34 [1] : vector<8x8xf32> to vector<8xf32>
    %109 = vector.shape_cast %108 : vector<8xf32> to vector<8x1xf32>
    %110 = tpu.reciprocal %109 {approx = true} : vector<8x1xf32> -> vector<8x1xf32>
    %111 = vector.broadcast %110 : vector<8x1xf32> to vector<8x8xf32>
    %112 = arith.mulf %107, %111 : vector<8x8xf32>
    %113 = arith.truncf %112 : vector<8x8xf32> to vector<8x8xbf16>
    %114 = vector.broadcast %25 : vector<1x32xf32> to vector<8x32xf32>
    %115 = arith.mulf %50, %114 : vector<8x32xf32>
    %116 = arith.truncf %115 : vector<8x32xf32> to vector<8x32xbf16>
    %cst_35 = arith.constant dense<0.000000e+00> : vector<8x32xf32>
    %117 = tpu.matmul %113, %116, %cst_35 {dimension_numbers = #tpu.dot_dimension_numbers<[1], [0], [0], [1], [0, 0, 1, 1], [], []>} : vector<8x8xbf16>, vector<8x32xbf16>, vector<8x32xf32> -> vector<8x32xf32>
    %118 = arith.addf %96, %117 : vector<8x32xf32>
    %119 = vector.broadcast %32 : vector<1x32xf32> to vector<8x32xf32>
    %120 = arith.mulf %38, %119 : vector<8x32xf32>
    %121 = arith.truncf %120 : vector<8x32xf32> to vector<8x32xbf16>
    %cst_36 = arith.constant dense<0.000000e+00> : vector<8x8xf32>
    %122 = tpu.matmul %121, %51, %cst_36 {dimension_numbers = #tpu.dot_dimension_numbers<[1], [1], [0], [0], [0, 0, 1, 0], [], []>} : vector<8x32xbf16>, vector<8x32xbf16>, vector<8x8xf32> -> vector<8x8xf32>
    %cst_37 = arith.constant 0.353553385 : f32
    %123 = vector.broadcast %cst_37 : f32 to vector<8x8xf32>
    %124 = arith.mulf %122, %123 : vector<8x8xf32>
    %cst_38 = arith.constant dense<0xFF800000> : vector<8xf32>
    %125 = vector.multi_reduction <maximumf>, %124, %cst_38 [1] : vector<8x8xf32> to vector<8xf32>
    %126 = vector.shape_cast %125 : vector<8xf32> to vector<8x1xf32>
    %127 = vector.broadcast %126 : vector<8x1xf32> to vector<8x8xf32>
    %128 = arith.subf %124, %127 : vector<8x8xf32>
    %129 = math.exp %128 : vector<8x8xf32>
    %cst_39 = arith.constant dense<0.000000e+00> : vector<8xf32>
    %130 = vector.multi_reduction <add>, %129, %cst_39 [1] : vector<8x8xf32> to vector<8xf32>
    %131 = vector.shape_cast %130 : vector<8xf32> to vector<8x1xf32>
    %132 = tpu.reciprocal %131 {approx = true} : vector<8x1xf32> -> vector<8x1xf32>
    %133 = vector.broadcast %132 : vector<8x1xf32> to vector<8x8xf32>
    %134 = arith.mulf %129, %133 : vector<8x8xf32>
    %135 = arith.truncf %134 : vector<8x8xf32> to vector<8x8xbf16>
    %136 = vector.broadcast %32 : vector<1x32xf32> to vector<8x32xf32>
    %137 = arith.mulf %50, %136 : vector<8x32xf32>
    %138 = arith.truncf %137 : vector<8x32xf32> to vector<8x32xbf16>
    %cst_40 = arith.constant dense<0.000000e+00> : vector<8x32xf32>
    %139 = tpu.matmul %135, %138, %cst_40 {dimension_numbers = #tpu.dot_dimension_numbers<[1], [0], [0], [1], [0, 0, 1, 1], [], []>} : vector<8x8xbf16>, vector<8x32xbf16>, vector<8x32xf32> -> vector<8x32xf32>
    %140 = arith.addf %118, %139 : vector<8x32xf32>
    %c0_41 = arith.constant 0 : index
    %c0_42 = arith.constant 0 : index
    %141 = vector.load %arg5[%c0_41, %c0_42] : memref<32x32xbf16, #tpu.memory_space<vmem>>, vector<32x32xbf16>
    %c0_43 = arith.constant 0 : index
    %c0_44 = arith.constant 0 : index
    %142 = vector.load %arg6[%c0_43, %c0_44] : memref<1x32xf32, #tpu.memory_space<vmem>>, vector<1x32xf32>
    %143 = arith.truncf %140 : vector<8x32xf32> to vector<8x32xbf16>
    %cst_45 = arith.constant dense<0.000000e+00> : vector<8x32xf32>
    %144 = tpu.matmul %143, %141, %cst_45 {dimension_numbers = #tpu.dot_dimension_numbers<[1], [0], [0], [1], [0, 0, 1, 1], [], []>} : vector<8x32xbf16>, vector<32x32xbf16>, vector<8x32xf32> -> vector<8x32xf32>
    %145 = vector.broadcast %142 : vector<1x32xf32> to vector<8x32xf32>
    %146 = arith.addf %144, %145 : vector<8x32xf32>
    %c0_46 = arith.constant 0 : index
    %c0_47 = arith.constant 0 : index
    %147 = vector.load %arg7[%c0_46, %c0_47] : memref<1x32xf32, #tpu.memory_space<vmem>>, vector<1x32xf32>
    %c0_48 = arith.constant 0 : index
    %c0_49 = arith.constant 0 : index
    %148 = vector.load %arg8[%c0_48, %c0_49] : memref<1x32xf32, #tpu.memory_space<vmem>>, vector<1x32xf32>
    %149 = arith.addf %146, %1 : vector<8x32xf32>
    %cst_50 = arith.constant dense<0.000000e+00> : vector<8xf32>
    %150 = vector.multi_reduction <add>, %149, %cst_50 [1] : vector<8x32xf32> to vector<8xf32>
    %151 = vector.shape_cast %150 : vector<8xf32> to vector<8x1xf32>
    %cst_51 = arith.constant 3.200000e+01 : f32
    %152 = vector.broadcast %cst_51 : f32 to vector<8x1xf32>
    %153 = arith.divf %151, %152 : vector<8x1xf32>
    %154 = vector.broadcast %153 : vector<8x1xf32> to vector<8x32xf32>
    %155 = arith.subf %149, %154 : vector<8x32xf32>
    %156 = arith.mulf %155, %155 : vector<8x32xf32>
    %cst_52 = arith.constant dense<0.000000e+00> : vector<8xf32>
    %157 = vector.multi_reduction <add>, %156, %cst_52 [1] : vector<8x32xf32> to vector<8xf32>
    %158 = vector.shape_cast %157 : vector<8xf32> to vector<8x1xf32>
    %cst_53 = arith.constant 3.200000e+01 : f32
    %159 = vector.broadcast %cst_53 : f32 to vector<8x1xf32>
    %160 = arith.divf %158, %159 : vector<8x1xf32>
    %cst_54 = arith.constant 9.99999974E-6 : f32
    %161 = vector.broadcast %cst_54 : f32 to vector<8x1xf32>
    %162 = arith.addf %160, %161 : vector<8x1xf32>
    %163 = math.rsqrt %162 : vector<8x1xf32>
    %164 = vector.broadcast %163 : vector<8x1xf32> to vector<8x32xf32>
    %165 = arith.mulf %155, %164 : vector<8x32xf32>
    %166 = vector.broadcast %147 : vector<1x32xf32> to vector<8x32xf32>
    %167 = arith.mulf %165, %166 : vector<8x32xf32>
    %168 = vector.broadcast %148 : vector<1x32xf32> to vector<8x32xf32>
    %169 = arith.addf %167, %168 : vector<8x32xf32>
    %c0_55 = arith.constant 0 : index
    %c0_56 = arith.constant 0 : index
    %170 = vector.load %arg9[%c0_55, %c0_56] : memref<32x32xbf16, #tpu.memory_space<vmem>>, vector<32x32xbf16>
    %c0_57 = arith.constant 0 : index
    %c0_58 = arith.constant 0 : index
    %171 = vector.load %arg10[%c0_57, %c0_58] : memref<1x32xf32, #tpu.memory_space<vmem>>, vector<1x32xf32>
    %172 = arith.truncf %169 : vector<8x32xf32> to vector<8x32xbf16>
    %cst_59 = arith.constant dense<0.000000e+00> : vector<8x32xf32>
    %173 = tpu.matmul %172, %170, %cst_59 {dimension_numbers = #tpu.dot_dimension_numbers<[1], [0], [0], [1], [0, 0, 1, 1], [], []>} : vector<8x32xbf16>, vector<32x32xbf16>, vector<8x32xf32> -> vector<8x32xf32>
    %174 = vector.broadcast %171 : vector<1x32xf32> to vector<8x32xf32>
    %175 = arith.addf %173, %174 : vector<8x32xf32>
    %c0_60 = arith.constant 0 : index
    %c0_61 = arith.constant 0 : index
    %176 = vector.load %arg11[%c0_60, %c0_61] : memref<32x64xbf16, #tpu.memory_space<vmem>>, vector<32x32xbf16>
    %c0_62 = arith.constant 0 : index
    %c0_63 = arith.constant 0 : index
    %177 = vector.load %arg12[%c0_62, %c0_63] : memref<1x64xf32, #tpu.memory_space<vmem>>, vector<1x32xf32>
    %178 = arith.truncf %3 : vector<8x32xf32> to vector<8x32xbf16>
    %cst_64 = arith.constant dense<0.000000e+00> : vector<8x32xf32>
    %179 = tpu.matmul %178, %176, %cst_64 {dimension_numbers = #tpu.dot_dimension_numbers<[1], [0], [0], [1], [0, 0, 1, 1], [], []>} : vector<8x32xbf16>, vector<32x32xbf16>, vector<8x32xf32> -> vector<8x32xf32>
    %180 = vector.broadcast %177 : vector<1x32xf32> to vector<8x32xf32>
    %181 = arith.addf %179, %180 : vector<8x32xf32>
    %c0_65 = arith.constant 0 : index
    %c32_66 = arith.constant 32 : index
    %182 = vector.load %arg11[%c0_65, %c32_66] : memref<32x64xbf16, #tpu.memory_space<vmem>>, vector<32x32xbf16>
    %c0_67 = arith.constant 0 : index
    %c32_68 = arith.constant 32 : index
    %183 = vector.load %arg12[%c0_67, %c32_68] : memref<1x64xf32, #tpu.memory_space<vmem>>, vector<1x32xf32>
    %184 = arith.truncf %3 : vector<8x32xf32> to vector<8x32xbf16>
    %cst_69 = arith.constant dense<0.000000e+00> : vector<8x32xf32>
    %185 = tpu.matmul %184, %182, %cst_69 {dimension_numbers = #tpu.dot_dimension_numbers<[1], [0], [0], [1], [0, 0, 1, 1], [], []>} : vector<8x32xbf16>, vector<32x32xbf16>, vector<8x32xf32> -> vector<8x32xf32>
    %186 = vector.broadcast %183 : vector<1x32xf32> to vector<8x32xf32>
    %187 = arith.addf %185, %186 : vector<8x32xf32>
    %188 = arith.truncf %181 : vector<8x32xf32> to vector<8x32xbf16>
    %cst_70 = arith.constant 0.000000e+00 : f32
    %189 = vector.broadcast %cst_70 : f32 to vector<8x32xf32>
    %190 = vector.broadcast %11 : vector<1x32xf32> to vector<8x32xf32>
    %191 = arith.mulf %175, %190 : vector<8x32xf32>
    %192 = arith.truncf %191 : vector<8x32xf32> to vector<8x32xbf16>
    %cst_71 = arith.constant dense<0.000000e+00> : vector<8x8xf32>
    %193 = tpu.matmul %192, %188, %cst_71 {dimension_numbers = #tpu.dot_dimension_numbers<[1], [1], [0], [0], [0, 0, 1, 0], [], []>} : vector<8x32xbf16>, vector<8x32xbf16>, vector<8x8xf32> -> vector<8x8xf32>
    %cst_72 = arith.constant 0.353553385 : f32
    %194 = vector.broadcast %cst_72 : f32 to vector<8x8xf32>
    %195 = arith.mulf %193, %194 : vector<8x8xf32>
    %cst_73 = arith.constant dense<0xFF800000> : vector<8xf32>
    %196 = vector.multi_reduction <maximumf>, %195, %cst_73 [1] : vector<8x8xf32> to vector<8xf32>
    %197 = vector.shape_cast %196 : vector<8xf32> to vector<8x1xf32>
    %198 = vector.broadcast %197 : vector<8x1xf32> to vector<8x8xf32>
    %199 = arith.subf %195, %198 : vector<8x8xf32>
    %200 = math.exp %199 : vector<8x8xf32>
    %cst_74 = arith.constant dense<0.000000e+00> : vector<8xf32>
    %201 = vector.multi_reduction <add>, %200, %cst_74 [1] : vector<8x8xf32> to vector<8xf32>
    %202 = vector.shape_cast %201 : vector<8xf32> to vector<8x1xf32>
    %203 = tpu.reciprocal %202 {approx = true} : vector<8x1xf32> -> vector<8x1xf32>
    %204 = vector.broadcast %203 : vector<8x1xf32> to vector<8x8xf32>
    %205 = arith.mulf %200, %204 : vector<8x8xf32>
    %206 = arith.truncf %205 : vector<8x8xf32> to vector<8x8xbf16>
    %207 = vector.broadcast %11 : vector<1x32xf32> to vector<8x32xf32>
    %208 = arith.mulf %187, %207 : vector<8x32xf32>
    %209 = arith.truncf %208 : vector<8x32xf32> to vector<8x32xbf16>
    %cst_75 = arith.constant dense<0.000000e+00> : vector<8x32xf32>
    %210 = tpu.matmul %206, %209, %cst_75 {dimension_numbers = #tpu.dot_dimension_numbers<[1], [0], [0], [1], [0, 0, 1, 1], [], []>} : vector<8x8xbf16>, vector<8x32xbf16>, vector<8x32xf32> -> vector<8x32xf32>
    %211 = arith.addf %189, %210 : vector<8x32xf32>
    %212 = vector.broadcast %18 : vector<1x32xf32> to vector<8x32xf32>
    %213 = arith.mulf %175, %212 : vector<8x32xf32>
    %214 = arith.truncf %213 : vector<8x32xf32> to vector<8x32xbf16>
    %cst_76 = arith.constant dense<0.000000e+00> : vector<8x8xf32>
    %215 = tpu.matmul %214, %188, %cst_76 {dimension_numbers = #tpu.dot_dimension_numbers<[1], [1], [0], [0], [0, 0, 1, 0], [], []>} : vector<8x32xbf16>, vector<8x32xbf16>, vector<8x8xf32> -> vector<8x8xf32>
    %cst_77 = arith.constant 0.353553385 : f32
    %216 = vector.broadcast %cst_77 : f32 to vector<8x8xf32>
    %217 = arith.mulf %215, %216 : vector<8x8xf32>
    %cst_78 = arith.constant dense<0xFF800000> : vector<8xf32>
    %218 = vector.multi_reduction <maximumf>, %217, %cst_78 [1] : vector<8x8xf32> to vector<8xf32>
    %219 = vector.shape_cast %218 : vector<8xf32> to vector<8x1xf32>
    %220 = vector.broadcast %219 : vector<8x1xf32> to vector<8x8xf32>
    %221 = arith.subf %217, %220 : vector<8x8xf32>
    %222 = math.exp %221 : vector<8x8xf32>
    %cst_79 = arith.constant dense<0.000000e+00> : vector<8xf32>
    %223 = vector.multi_reduction <add>, %222, %cst_79 [1] : vector<8x8xf32> to vector<8xf32>
    %224 = vector.shape_cast %223 : vector<8xf32> to vector<8x1xf32>
    %225 = tpu.reciprocal %224 {approx = true} : vector<8x1xf32> -> vector<8x1xf32>
    %226 = vector.broadcast %225 : vector<8x1xf32> to vector<8x8xf32>
    %227 = arith.mulf %222, %226 : vector<8x8xf32>
    %228 = arith.truncf %227 : vector<8x8xf32> to vector<8x8xbf16>
    %229 = vector.broadcast %18 : vector<1x32xf32> to vector<8x32xf32>
    %230 = arith.mulf %187, %229 : vector<8x32xf32>
    %231 = arith.truncf %230 : vector<8x32xf32> to vector<8x32xbf16>
    %cst_80 = arith.constant dense<0.000000e+00> : vector<8x32xf32>
    %232 = tpu.matmul %228, %231, %cst_80 {dimension_numbers = #tpu.dot_dimension_numbers<[1], [0], [0], [1], [0, 0, 1, 1], [], []>} : vector<8x8xbf16>, vector<8x32xbf16>, vector<8x32xf32> -> vector<8x32xf32>
    %233 = arith.addf %211, %232 : vector<8x32xf32>
    %234 = vector.broadcast %25 : vector<1x32xf32> to vector<8x32xf32>
    %235 = arith.mulf %175, %234 : vector<8x32xf32>
    %236 = arith.truncf %235 : vector<8x32xf32> to vector<8x32xbf16>
    %cst_81 = arith.constant dense<0.000000e+00> : vector<8x8xf32>
    %237 = tpu.matmul %236, %188, %cst_81 {dimension_numbers = #tpu.dot_dimension_numbers<[1], [1], [0], [0], [0, 0, 1, 0], [], []>} : vector<8x32xbf16>, vector<8x32xbf16>, vector<8x8xf32> -> vector<8x8xf32>
    %cst_82 = arith.constant 0.353553385 : f32
    %238 = vector.broadcast %cst_82 : f32 to vector<8x8xf32>
    %239 = arith.mulf %237, %238 : vector<8x8xf32>
    %cst_83 = arith.constant dense<0xFF800000> : vector<8xf32>
    %240 = vector.multi_reduction <maximumf>, %239, %cst_83 [1] : vector<8x8xf32> to vector<8xf32>
    %241 = vector.shape_cast %240 : vector<8xf32> to vector<8x1xf32>
    %242 = vector.broadcast %241 : vector<8x1xf32> to vector<8x8xf32>
    %243 = arith.subf %239, %242 : vector<8x8xf32>
    %244 = math.exp %243 : vector<8x8xf32>
    %cst_84 = arith.constant dense<0.000000e+00> : vector<8xf32>
    %245 = vector.multi_reduction <add>, %244, %cst_84 [1] : vector<8x8xf32> to vector<8xf32>
    %246 = vector.shape_cast %245 : vector<8xf32> to vector<8x1xf32>
    %247 = tpu.reciprocal %246 {approx = true} : vector<8x1xf32> -> vector<8x1xf32>
    %248 = vector.broadcast %247 : vector<8x1xf32> to vector<8x8xf32>
    %249 = arith.mulf %244, %248 : vector<8x8xf32>
    %250 = arith.truncf %249 : vector<8x8xf32> to vector<8x8xbf16>
    %251 = vector.broadcast %25 : vector<1x32xf32> to vector<8x32xf32>
    %252 = arith.mulf %187, %251 : vector<8x32xf32>
    %253 = arith.truncf %252 : vector<8x32xf32> to vector<8x32xbf16>
    %cst_85 = arith.constant dense<0.000000e+00> : vector<8x32xf32>
    %254 = tpu.matmul %250, %253, %cst_85 {dimension_numbers = #tpu.dot_dimension_numbers<[1], [0], [0], [1], [0, 0, 1, 1], [], []>} : vector<8x8xbf16>, vector<8x32xbf16>, vector<8x32xf32> -> vector<8x32xf32>
    %255 = arith.addf %233, %254 : vector<8x32xf32>
    %256 = vector.broadcast %32 : vector<1x32xf32> to vector<8x32xf32>
    %257 = arith.mulf %175, %256 : vector<8x32xf32>
    %258 = arith.truncf %257 : vector<8x32xf32> to vector<8x32xbf16>
    %cst_86 = arith.constant dense<0.000000e+00> : vector<8x8xf32>
    %259 = tpu.matmul %258, %188, %cst_86 {dimension_numbers = #tpu.dot_dimension_numbers<[1], [1], [0], [0], [0, 0, 1, 0], [], []>} : vector<8x32xbf16>, vector<8x32xbf16>, vector<8x8xf32> -> vector<8x8xf32>
    %cst_87 = arith.constant 0.353553385 : f32
    %260 = vector.broadcast %cst_87 : f32 to vector<8x8xf32>
    %261 = arith.mulf %259, %260 : vector<8x8xf32>
    %cst_88 = arith.constant dense<0xFF800000> : vector<8xf32>
    %262 = vector.multi_reduction <maximumf>, %261, %cst_88 [1] : vector<8x8xf32> to vector<8xf32>
    %263 = vector.shape_cast %262 : vector<8xf32> to vector<8x1xf32>
    %264 = vector.broadcast %263 : vector<8x1xf32> to vector<8x8xf32>
    %265 = arith.subf %261, %264 : vector<8x8xf32>
    %266 = math.exp %265 : vector<8x8xf32>
    %cst_89 = arith.constant dense<0.000000e+00> : vector<8xf32>
    %267 = vector.multi_reduction <add>, %266, %cst_89 [1] : vector<8x8xf32> to vector<8xf32>
    %268 = vector.shape_cast %267 : vector<8xf32> to vector<8x1xf32>
    %269 = tpu.reciprocal %268 {approx = true} : vector<8x1xf32> -> vector<8x1xf32>
    %270 = vector.broadcast %269 : vector<8x1xf32> to vector<8x8xf32>
    %271 = arith.mulf %266, %270 : vector<8x8xf32>
    %272 = arith.truncf %271 : vector<8x8xf32> to vector<8x8xbf16>
    %273 = vector.broadcast %32 : vector<1x32xf32> to vector<8x32xf32>
    %274 = arith.mulf %187, %273 : vector<8x32xf32>
    %275 = arith.truncf %274 : vector<8x32xf32> to vector<8x32xbf16>
    %cst_90 = arith.constant dense<0.000000e+00> : vector<8x32xf32>
    %276 = tpu.matmul %272, %275, %cst_90 {dimension_numbers = #tpu.dot_dimension_numbers<[1], [0], [0], [1], [0, 0, 1, 1], [], []>} : vector<8x8xbf16>, vector<8x32xbf16>, vector<8x32xf32> -> vector<8x32xf32>
    %277 = arith.addf %255, %276 : vector<8x32xf32>
    %c0_91 = arith.constant 0 : index
    %c0_92 = arith.constant 0 : index
    %278 = vector.load %arg13[%c0_91, %c0_92] : memref<32x32xbf16, #tpu.memory_space<vmem>>, vector<32x32xbf16>
    %c0_93 = arith.constant 0 : index
    %c0_94 = arith.constant 0 : index
    %279 = vector.load %arg14[%c0_93, %c0_94] : memref<1x32xf32, #tpu.memory_space<vmem>>, vector<1x32xf32>
    %280 = arith.truncf %277 : vector<8x32xf32> to vector<8x32xbf16>
    %cst_95 = arith.constant dense<0.000000e+00> : vector<8x32xf32>
    %281 = tpu.matmul %280, %278, %cst_95 {dimension_numbers = #tpu.dot_dimension_numbers<[1], [0], [0], [1], [0, 0, 1, 1], [], []>} : vector<8x32xbf16>, vector<32x32xbf16>, vector<8x32xf32> -> vector<8x32xf32>
    %282 = vector.broadcast %279 : vector<1x32xf32> to vector<8x32xf32>
    %283 = arith.addf %281, %282 : vector<8x32xf32>
    %c0_96 = arith.constant 0 : index
    %c0_97 = arith.constant 0 : index
    %284 = vector.load %arg15[%c0_96, %c0_97] : memref<1x32xf32, #tpu.memory_space<vmem>>, vector<1x32xf32>
    %c0_98 = arith.constant 0 : index
    %c0_99 = arith.constant 0 : index
    %285 = vector.load %arg16[%c0_98, %c0_99] : memref<1x32xf32, #tpu.memory_space<vmem>>, vector<1x32xf32>
    %286 = arith.addf %283, %169 : vector<8x32xf32>
    %cst_100 = arith.constant dense<0.000000e+00> : vector<8xf32>
    %287 = vector.multi_reduction <add>, %286, %cst_100 [1] : vector<8x32xf32> to vector<8xf32>
    %288 = vector.shape_cast %287 : vector<8xf32> to vector<8x1xf32>
    %cst_101 = arith.constant 3.200000e+01 : f32
    %289 = vector.broadcast %cst_101 : f32 to vector<8x1xf32>
    %290 = arith.divf %288, %289 : vector<8x1xf32>
    %291 = vector.broadcast %290 : vector<8x1xf32> to vector<8x32xf32>
    %292 = arith.subf %286, %291 : vector<8x32xf32>
    %293 = arith.mulf %292, %292 : vector<8x32xf32>
    %cst_102 = arith.constant dense<0.000000e+00> : vector<8xf32>
    %294 = vector.multi_reduction <add>, %293, %cst_102 [1] : vector<8x32xf32> to vector<8xf32>
    %295 = vector.shape_cast %294 : vector<8xf32> to vector<8x1xf32>
    %cst_103 = arith.constant 3.200000e+01 : f32
    %296 = vector.broadcast %cst_103 : f32 to vector<8x1xf32>
    %297 = arith.divf %295, %296 : vector<8x1xf32>
    %cst_104 = arith.constant 9.99999974E-6 : f32
    %298 = vector.broadcast %cst_104 : f32 to vector<8x1xf32>
    %299 = arith.addf %297, %298 : vector<8x1xf32>
    %300 = math.rsqrt %299 : vector<8x1xf32>
    %301 = vector.broadcast %300 : vector<8x1xf32> to vector<8x32xf32>
    %302 = arith.mulf %292, %301 : vector<8x32xf32>
    %303 = vector.broadcast %284 : vector<1x32xf32> to vector<8x32xf32>
    %304 = arith.mulf %302, %303 : vector<8x32xf32>
    %305 = vector.broadcast %285 : vector<1x32xf32> to vector<8x32xf32>
    %306 = arith.addf %304, %305 : vector<8x32xf32>
    %c0_105 = arith.constant 0 : index
    %c0_106 = arith.constant 0 : index
    %307 = vector.load %arg17[%c0_105, %c0_106] : memref<32x64xbf16, #tpu.memory_space<vmem>>, vector<32x64xbf16>
    %c0_107 = arith.constant 0 : index
    %c0_108 = arith.constant 0 : index
    %308 = vector.load %arg18[%c0_107, %c0_108] : memref<1x64xf32, #tpu.memory_space<vmem>>, vector<1x64xf32>
    %309 = arith.truncf %306 : vector<8x32xf32> to vector<8x32xbf16>
    %cst_109 = arith.constant dense<0.000000e+00> : vector<8x64xf32>
    %310 = tpu.matmul %309, %307, %cst_109 {dimension_numbers = #tpu.dot_dimension_numbers<[1], [0], [0], [1], [0, 0, 1, 1], [], []>} : vector<8x32xbf16>, vector<32x64xbf16>, vector<8x64xf32> -> vector<8x64xf32>
    %311 = vector.broadcast %308 : vector<1x64xf32> to vector<8x64xf32>
    %312 = arith.addf %310, %311 : vector<8x64xf32>
    %cst_110 = arith.constant 0.000000e+00 : f32
    %313 = vector.broadcast %cst_110 : f32 to vector<8x64xf32>
    %314 = arith.maximumf %312, %313 : vector<8x64xf32>
    %c0_111 = arith.constant 0 : index
    %c0_112 = arith.constant 0 : index
    %315 = vector.load %arg19[%c0_111, %c0_112] : memref<64x32xbf16, #tpu.memory_space<vmem>>, vector<64x32xbf16>
    %c0_113 = arith.constant 0 : index
    %c0_114 = arith.constant 0 : index
    %316 = vector.load %arg20[%c0_113, %c0_114] : memref<1x32xf32, #tpu.memory_space<vmem>>, vector<1x32xf32>
    %317 = arith.truncf %314 : vector<8x64xf32> to vector<8x64xbf16>
    %cst_115 = arith.constant dense<0.000000e+00> : vector<8x32xf32>
    %318 = tpu.matmul %317, %315, %cst_115 {dimension_numbers = #tpu.dot_dimension_numbers<[1], [0], [0], [1], [0, 0, 1, 1], [], []>} : vector<8x64xbf16>, vector<64x32xbf16>, vector<8x32xf32> -> vector<8x32xf32>
    %319 = vector.broadcast %316 : vector<1x32xf32> to vector<8x32xf32>
    %320 = arith.addf %318, %319 : vector<8x32xf32>
    %c0_116 = arith.constant 0 : index
    %c0_117 = arith.constant 0 : index
    %321 = vector.load %arg21[%c0_116, %c0_117] : memref<1x32xf32, #tpu.memory_space<vmem>>, vector<1x32xf32>
    %c0_118 = arith.constant 0 : index
    %c0_119 = arith.constant 0 : index
    %322 = vector.load %arg22[%c0_118, %c0_119] : memref<1x32xf32, #tpu.memory_space<vmem>>, vector<1x32xf32>
    %323 = arith.addf %320, %306 : vector<8x32xf32>
    %cst_120 = arith.constant dense<0.000000e+00> : vector<8xf32>
    %324 = vector.multi_reduction <add>, %323, %cst_120 [1] : vector<8x32xf32> to vector<8xf32>
    %325 = vector.shape_cast %324 : vector<8xf32> to vector<8x1xf32>
    %cst_121 = arith.constant 3.200000e+01 : f32
    %326 = vector.broadcast %cst_121 : f32 to vector<8x1xf32>
    %327 = arith.divf %325, %326 : vector<8x1xf32>
    %328 = vector.broadcast %327 : vector<8x1xf32> to vector<8x32xf32>
    %329 = arith.subf %323, %328 : vector<8x32xf32>
    %330 = arith.mulf %329, %329 : vector<8x32xf32>
    %cst_122 = arith.constant dense<0.000000e+00> : vector<8xf32>
    %331 = vector.multi_reduction <add>, %330, %cst_122 [1] : vector<8x32xf32> to vector<8xf32>
    %332 = vector.shape_cast %331 : vector<8xf32> to vector<8x1xf32>
    %cst_123 = arith.constant 3.200000e+01 : f32
    %333 = vector.broadcast %cst_123 : f32 to vector<8x1xf32>
    %334 = arith.divf %332, %333 : vector<8x1xf32>
    %cst_124 = arith.constant 9.99999974E-6 : f32
    %335 = vector.broadcast %cst_124 : f32 to vector<8x1xf32>
    %336 = arith.addf %334, %335 : vector<8x1xf32>
    %337 = math.rsqrt %336 : vector<8x1xf32>
    %338 = vector.broadcast %337 : vector<8x1xf32> to vector<8x32xf32>
    %339 = arith.mulf %329, %338 : vector<8x32xf32>
    %340 = vector.broadcast %321 : vector<1x32xf32> to vector<8x32xf32>
    %341 = arith.mulf %339, %340 : vector<8x32xf32>
    %342 = vector.broadcast %322 : vector<1x32xf32> to vector<8x32xf32>
    %343 = arith.addf %341, %342 : vector<8x32xf32>
    %c0_125 = arith.constant 0 : index
    %c0_126 = arith.constant 0 : index
    %c0_127 = arith.constant 0 : index
    %344 = vector.load %arg23[%c0_125, %c0_126, %c0_127] : memref<1x8x32xf32, #tpu.memory_space<vmem>>, vector<1x8x32xf32>
    %345 = vector.shape_cast %344 : vector<1x8x32xf32> to vector<8x32xf32>
    %346 = vector.shape_cast %343 : vector<8x32xf32> to vector<1x8x32xf32>
    tpu.vector_store %arg23[%c0_125, %c0_126, %c0_127], %346 {strides = array<i32>} : memref<1x8x32xf32, #tpu.memory_space<vmem>>, vector<1x8x32xf32>,
    return
  }
  func.func @transform_0(%arg0: i32) -> (i32, i32, i32) {
    %c0_i32 = arith.constant 0 : i32
    %c0_i32_0 = arith.constant 0 : i32
    %c0_i32_1 = arith.constant 0 : i32
    return %arg0, %c0_i32, %c0_i32_0 : i32, i32, i32
  }
  func.func @transform_1(%arg0: i32) -> (i32, i32, i32) {
    %c0_i32 = arith.constant 0 : i32
    %c0_i32_0 = arith.constant 0 : i32
    %c0_i32_1 = arith.constant 0 : i32
    return %arg0, %c0_i32, %c0_i32_0 : i32, i32, i32
  }
  func.func @transform_2(%arg0: i32) -> (i32, i32) {
    %c0_i32 = arith.constant 0 : i32
    %c0_i32_0 = arith.constant 0 : i32
    %c0_i32_1 = arith.constant 0 : i32
    return %c0_i32, %c0_i32_0 : i32, i32
  }
  func.func @transform_3(%arg0: i32) -> (i32, i32) {
    %c0_i32 = arith.constant 0 : i32
    %c0_i32_0 = arith.constant 0 : i32
    %c0_i32_1 = arith.constant 0 : i32
    return %c0_i32, %c0_i32_0 : i32, i32
  }
  func.func @transform_4(%arg0: i32) -> (i32, i32) {
    %c0_i32 = arith.constant 0 : i32
    %c0_i32_0 = arith.constant 0 : i32
    %c0_i32_1 = arith.constant 0 : i32
    return %c0_i32, %c0_i32_0 : i32, i32
  }
  func.func @transform_5(%arg0: i32) -> (i32, i32) {
    %c0_i32 = arith.constant 0 : i32
    %c0_i32_0 = arith.constant 0 : i32
    %c0_i32_1 = arith.constant 0 : i32
    return %c0_i32, %c0_i32_0 : i32, i32
  }
  func.func @transform_6(%arg0: i32) -> (i32, i32) {
    %c0_i32 = arith.constant 0 : i32
    %c0_i32_0 = arith.constant 0 : i32
    %c0_i32_1 = arith.constant 0 : i32
    return %c0_i32, %c0_i32_0 : i32, i32
  }
  func.func @transform_7(%arg0: i32) -> (i32, i32) {
    %c0_i32 = arith.constant 0 : i32
    %c0_i32_0 = arith.constant 0 : i32
    %c0_i32_1 = arith.constant 0 : i32
    return %c0_i32, %c0_i32_0 : i32, i32
  }
  func.func @transform_8(%arg0: i32) -> (i32, i32) {
    %c0_i32 = arith.constant 0 : i32
    %c0_i32_0 = arith.constant 0 : i32
    %c0_i32_1 = arith.constant 0 : i32
    return %c0_i32, %c0_i32_0 : i32, i32
  }
  func.func @transform_9(%arg0: i32) -> (i32, i32) {
    %c0_i32 = arith.constant 0 : i32
    %c0_i32_0 = arith.constant 0 : i32
    %c0_i32_1 = arith.constant 0 : i32
    return %c0_i32, %c0_i32_0 : i32, i32
  }
  func.func @transform_10(%arg0: i32) -> (i32, i32) {
    %c0_i32 = arith.constant 0 : i32
    %c0_i32_0 = arith.constant 0 : i32
    %c0_i32_1 = arith.constant 0 : i32
    return %c0_i32, %c0_i32_0 : i32, i32
  }
  func.func @transform_11(%arg0: i32) -> (i32, i32) {
    %c0_i32 = arith.constant 0 : i32
    %c0_i32_0 = arith.constant 0 : i32
    %c0_i32_1 = arith.constant 0 : i32
    return %c0_i32, %c0_i32_0 : i32, i32
  }
  func.func @transform_12(%arg0: i32) -> (i32, i32) {
    %c0_i32 = arith.constant 0 : i32
    %c0_i32_0 = arith.constant 0 : i32
    %c0_i32_1 = arith.constant 0 : i32
    return %c0_i32, %c0_i32_0 : i32, i32
  }
  func.func @transform_13(%arg0: i32) -> (i32, i32) {
    %c0_i32 = arith.constant 0 : i32
    %c0_i32_0 = arith.constant 0 : i32
    %c0_i32_1 = arith.constant 0 : i32
    return %c0_i32, %c0_i32_0 : i32, i32
  }
  func.func @transform_14(%arg0: i32) -> (i32, i32) {
    %c0_i32 = arith.constant 0 : i32
    %c0_i32_0 = arith.constant 0 : i32
    %c0_i32_1 = arith.constant 0 : i32
    return %c0_i32, %c0_i32_0 : i32, i32
  }
  func.func @transform_15(%arg0: i32) -> (i32, i32) {
    %c0_i32 = arith.constant 0 : i32
    %c0_i32_0 = arith.constant 0 : i32
    %c0_i32_1 = arith.constant 0 : i32
    return %c0_i32, %c0_i32_0 : i32, i32
  }
  func.func @transform_16(%arg0: i32) -> (i32, i32) {
    %c0_i32 = arith.constant 0 : i32
    %c0_i32_0 = arith.constant 0 : i32
    %c0_i32_1 = arith.constant 0 : i32
    return %c0_i32, %c0_i32_0 : i32, i32
  }
  func.func @transform_17(%arg0: i32) -> (i32, i32) {
    %c0_i32 = arith.constant 0 : i32
    %c0_i32_0 = arith.constant 0 : i32
    %c0_i32_1 = arith.constant 0 : i32
    return %c0_i32, %c0_i32_0 : i32, i32
  }
  func.func @transform_18(%arg0: i32) -> (i32, i32) {
    %c0_i32 = arith.constant 0 : i32
    %c0_i32_0 = arith.constant 0 : i32
    %c0_i32_1 = arith.constant 0 : i32
    return %c0_i32, %c0_i32_0 : i32, i32
  }
  func.func @transform_19(%arg0: i32) -> (i32, i32) {
    %c0_i32 = arith.constant 0 : i32
    %c0_i32_0 = arith.constant 0 : i32
    %c0_i32_1 = arith.constant 0 : i32
    return %c0_i32, %c0_i32_0 : i32, i32
  }
  func.func @transform_20(%arg0: i32) -> (i32, i32) {
    %c0_i32 = arith.constant 0 : i32
    %c0_i32_0 = arith.constant 0 : i32
    %c0_i32_1 = arith.constant 0 : i32
    return %c0_i32, %c0_i32_0 : i32, i32
  }
  func.func @transform_21(%arg0: i32) -> (i32, i32) {
    %c0_i32 = arith.constant 0 : i32
    %c0_i32_0 = arith.constant 0 : i32
    %c0_i32_1 = arith.constant 0 : i32
    return %c0_i32, %c0_i32_0 : i32, i32
  }
  func.func @transform_22(%arg0: i32) -> (i32, i32, i32) {
    %c0_i32 = arith.constant 0 : i32
    %c0_i32_0 = arith.constant 0 : i32
    %c0_i32_1 = arith.constant 0 : i32
    return %arg0, %c0_i32, %c0_i32_0 : i32, i32, i32
  }
}

module attributes {stable_mosaic.version = 11 : i64} {
  func.func @_block_kernel(%arg0: i32, %arg1: memref<1x8x32xf32, #tpu.memory_space<vmem>>, %arg2: memref<1x8x32xf32, #tpu.memory_space<vmem>>, %arg3: memref<32x96xbf16, #tpu.memory_space<vmem>>, %arg4: memref<1x96xf32, #tpu.memory_space<vmem>>, %arg5: memref<32x32xbf16, #tpu.memory_space<vmem>>, %arg6: memref<1x32xf32, #tpu.memory_space<vmem>>, %arg7: memref<1x32xf32, #tpu.memory_space<vmem>>, %arg8: memref<1x32xf32, #tpu.memory_space<vmem>>, %arg9: memref<32x32xbf16, #tpu.memory_space<vmem>>, %arg10: memref<1x32xf32, #tpu.memory_space<vmem>>, %arg11: memref<32x64xbf16, #tpu.memory_space<vmem>>, %arg12: memref<1x64xf32, #tpu.memory_space<vmem>>, %arg13: memref<32x32xbf16, #tpu.memory_space<vmem>>, %arg14: memref<1x32xf32, #tpu.memory_space<vmem>>, %arg15: memref<1x32xf32, #tpu.memory_space<vmem>>, %arg16: memref<1x32xf32, #tpu.memory_space<vmem>>, %arg17: memref<32x64xbf16, #tpu.memory_space<vmem>>, %arg18: memref<1x64xf32, #tpu.memory_space<vmem>>, %arg19: memref<64x32xbf16, #tpu.memory_space<vmem>>, %arg20: memref<1x32xf32, #tpu.memory_space<vmem>>, %arg21: memref<1x32xf32, #tpu.memory_space<vmem>>, %arg22: memref<1x32xf32, #tpu.memory_space<vmem>>, %arg23: memref<1x8x32xf32, #tpu.memory_space<vmem>>) attributes {dimension_semantics = [#tpu.dimension_semantics<parallel>], iteration_bounds = array<i64: 2>, scalar_prefetch = 0 : i64, scratch_operands = 0 : i64, tpu.core_type = #tpu.core_type<tc>, window_params = [{transform_indices = @transform_0, window_bounds = array<i64: 1, 8, 32>}, {transform_indices = @transform_1, window_bounds = array<i64: 1, 8, 32>}, {pipeline_mode = #tpu.pipeline_mode<synchronous>, transform_indices = @transform_2, window_bounds = array<i64: 32, 96>}, {pipeline_mode = #tpu.pipeline_mode<synchronous>, transform_indices = @transform_3, window_bounds = array<i64: 1, 96>}, {pipeline_mode = #tpu.pipeline_mode<synchronous>, transform_indices = @transform_4, window_bounds = array<i64: 32, 32>}, {pipeline_mode = #tpu.pipeline_mode<synchronous>, transform_indices = @transform_5, window_bounds = array<i64: 1, 32>}, {pipeline_mode = #tpu.pipeline_mode<synchronous>, transform_indices = @transform_6, window_bounds = array<i64: 1, 32>}, {pipeline_mode = #tpu.pipeline_mode<synchronous>, transform_indices = @transform_7, window_bounds = array<i64: 1, 32>}, {pipeline_mode = #tpu.pipeline_mode<synchronous>, transform_indices = @transform_8, window_bounds = array<i64: 32, 32>}, {pipeline_mode = #tpu.pipeline_mode<synchronous>, transform_indices = @transform_9, window_bounds = array<i64: 1, 32>}, {pipeline_mode = #tpu.pipeline_mode<synchronous>, transform_indices = @transform_10, window_bounds = array<i64: 32, 64>}, {pipeline_mode = #tpu.pipeline_mode<synchronous>, transform_indices = @transform_11, window_bounds = array<i64: 1, 64>}, {pipeline_mode = #tpu.pipeline_mode<synchronous>, transform_indices = @transform_12, window_bounds = array<i64: 32, 32>}, {pipeline_mode = #tpu.pipeline_mode<synchronous>, transform_indices = @transform_13, window_bounds = array<i64: 1, 32>}, {pipeline_mode = #tpu.pipeline_mode<synchronous>, transform_indices = @transform_14, window_bounds = array<i64: 1, 32>}, {pipeline_mode = #tpu.pipeline_mode<synchronous>, transform_indices = @transform_15, window_bounds = array<i64: 1, 32>}, {pipeline_mode = #tpu.pipeline_mode<synchronous>, transform_indices = @transform_16, window_bounds = array<i64: 32, 64>}, {pipeline_mode = #tpu.pipeline_mode<synchronous>, transform_indices = @transform_17, window_bounds = array<i64: 1, 64>}, {pipeline_mode = #tpu.pipeline_mode<synchronous>, transform_indices = @transform_18, window_bounds = array<i64: 64, 32>}, {pipeline_mode = #tpu.pipeline_mode<synchronous>, transform_indices = @transform_19, window_bounds = array<i64: 1, 32>}, {pipeline_mode = #tpu.pipeline_mode<synchronous>, transform_indices = @transform_20, window_bounds = array<i64: 1, 32>}, {pipeline_mode = #tpu.pipeline_mode<synchronous>, transform_indices = @transform_21, window_bounds = array<i64: 1, 32>}, {transform_indices = @transform_22, window_bounds = array<i64: 1, 8, 32>}]} {
    %c0 = arith.constant 0 : index
    %c0_0 = arith.constant 0 : index
    %c0_1 = arith.constant 0 : index
    %0 = vector.load %arg1[%c0, %c0_0, %c0_1] : memref<1x8x32xf32, #tpu.memory_space<vmem>>, vector<1x8x32xf32>
    %1 = vector.shape_cast %0 : vector<1x8x32xf32> to vector<8x32xf32>
    %c0_2 = arith.constant 0 : index
    %c0_3 = arith.constant 0 : index
    %c0_4 = arith.constant 0 : index
    %2 = vector.load %arg2[%c0_2, %c0_3, %c0_4] : memref<1x8x32xf32, #tpu.memory_space<vmem>>, vector<1x8x32xf32>
    %3 = vector.shape_cast %2 : vector<1x8x32xf32> to vector<8x32xf32>
    %4 = tpu.iota {dimensions = array<i32: 1>} : vector<1x32xi32>
    %c0_i32 = arith.constant 0 : i32
    %5 = vector.broadcast %c0_i32 : i32 to vector<1x32xi32>
    %6 = arith.cmpi sge, %4, %5 : vector<1x32xi32>
    %c8_i32 = arith.constant 8 : i32
    %7 = vector.broadcast %c8_i32 : i32 to vector<1x32xi32>
    %8 = arith.cmpi slt, %4, %7 : vector<1x32xi32>
    %9 = arith.andi %6, %8 : vector<1x32xi1>
    %10 = arith.extui %9 : vector<1x32xi1> to vector<1x32xi32>
    %11 = arith.sitofp %10 : vector<1x32xi32> to vector<1x32xf32>
    %c8_i32_5 = arith.constant 8 : i32
    %12 = vector.broadcast %c8_i32_5 : i32 to vector<1x32xi32>
    %13 = arith.cmpi sge, %4, %12 : vector<1x32xi32>
    %c16_i32 = arith.constant 16 : i32
    %14 = vector.broadcast %c16_i32 : i32 to vector<1x32xi32>
    %15 = arith.cmpi slt, %4, %14 : vector<1x32xi32>
    %16 = arith.andi %13, %15 : vector<1x32xi1>
    %17 = arith.extui %16 : vector<1x32xi1> to vector<1x32xi32>
    %18 = arith.sitofp %17 : vector<1x32xi32> to vector<1x32xf32>
    %c16_i32_6 = arith.constant 16 : i32
    %19 = vector.broadcast %c16_i32_6 : i32 to vector<1x32xi32>
    %20 = arith.cmpi sge, %4, %19 : vector<1x32xi32>
    %c24_i32 = arith.constant 24 : i32
    %21 = vector.broadcast %c24_i32 : i32 to vector<1x32xi32>
    %22 = arith.cmpi slt, %4, %21 : vector<1x32xi32>
    %23 = arith.andi %20, %22 : vector<1x32xi1>
    %24 = arith.extui %23 : vector<1x32xi1> to vector<1x32xi32>
    %25 = arith.sitofp %24 : vector<1x32xi32> to vector<1x32xf32>
    %c24_i32_7 = arith.constant 24 : i32
    %26 = vector.broadcast %c24_i32_7 : i32 to vector<1x32xi32>
    %27 = arith.cmpi sge, %4, %26 : vector<1x32xi32>
    %c32_i32 = arith.constant 32 : i32
    %28 = vector.broadcast %c32_i32 : i32 to vector<1x32xi32>
    %29 = arith.cmpi slt, %4, %28 : vector<1x32xi32>
    %30 = arith.andi %27, %29 : vector<1x32xi1>
    %31 = arith.extui %30 : vector<1x32xi1> to vector<1x32xi32>
    %32 = arith.sitofp %31 : vector<1x32xi32> to vector<1x32xf32>
    %c0_8 = arith.constant 0 : index
    %c0_9 = arith.constant 0 : index
    %33 = vector.load %arg3[%c0_8, %c0_9] : memref<32x96xbf16, #tpu.memory_space<vmem>>, vector<32x32xbf16>
    %c0_10 = arith.constant 0 : index
    %c0_11 = arith.constant 0 : index
    %34 = vector.load %arg4[%c0_10, %c0_11] : memref<1x96xf32, #tpu.memory_space<vmem>>, vector<1x32xf32>
    %35 = arith.truncf %1 : vector<8x32xf32> to vector<8x32xbf16>
    %cst = arith.constant dense<0.000000e+00> : vector<8x32xf32>
    %36 = tpu.matmul %35, %33, %cst {dimension_numbers = #tpu.dot_dimension_numbers<[1], [0], [0], [1], [0, 0, 1, 1], [], []>} : vector<8x32xbf16>, vector<32x32xbf16>, vector<8x32xf32> -> vector<8x32xf32>
    %37 = vector.broadcast %34 : vector<1x32xf32> to vector<8x32xf32>
    %38 = arith.addf %36, %37 : vector<8x32xf32>
    %c0_12 = arith.constant 0 : index
    %c32 = arith.constant 32 : index
    %39 = vector.load %arg3[%c0_12, %c32] : memref<32x96xbf16, #tpu.memory_space<vmem>>, vector<32x32xbf16>
    %c0_13 = arith.constant 0 : index
    %c32_14 = arith.constant 32 : index
    %40 = vector.load %arg4[%c0_13, %c32_14] : memref<1x96xf32, #tpu.memory_space<vmem>>, vector<1x32xf32>
    %41 = arith.truncf %1 : vector<8x32xf32> to vector<8x32xbf16>
    %cst_15 = arith.constant dense<0.000000e+00> : vector<8x32xf32>
    %42 = tpu.matmul %41, %39, %cst_15 {dimension_numbers = #tpu.dot_dimension_numbers<[1], [0], [0], [1], [0, 0, 1, 1], [], []>} : vector<8x32xbf16>, vector<32x32xbf16>, vector<8x32xf32> -> vector<8x32xf32>
    %43 = vector.broadcast %40 : vector<1x32xf32> to vector<8x32xf32>
    %44 = arith.addf %42, %43 : vector<8x32xf32>
    %c0_16 = arith.constant 0 : index
    %c64 = arith.constant 64 : index
    %45 = vector.load %arg3[%c0_16, %c64] : memref<32x96xbf16, #tpu.memory_space<vmem>>, vector<32x32xbf16>
    %c0_17 = arith.constant 0 : index
    %c64_18 = arith.constant 64 : index
    %46 = vector.load %arg4[%c0_17, %c64_18] : memref<1x96xf32, #tpu.memory_space<vmem>>, vector<1x32xf32>
    %47 = arith.truncf %1 : vector<8x32xf32> to vector<8x32xbf16>
    %cst_19 = arith.constant dense<0.000000e+00> : vector<8x32xf32>
    %48 = tpu.matmul %47, %45, %cst_19 {dimension_numbers = #tpu.dot_dimension_numbers<[1], [0], [0], [1], [0, 0, 1, 1], [], []>} : vector<8x32xbf16>, vector<32x32xbf16>, vector<8x32xf32> -> vector<8x32xf32>
    %49 = vector.broadcast %46 : vector<1x32xf32> to vector<8x32xf32>
    %50 = arith.addf %48, %49 : vector<8x32xf32>
    %51 = arith.truncf %44 : vector<8x32xf32> to vector<8x32xbf16>
    %cst_20 = arith.constant 0.000000e+00 : f32
    %52 = vector.broadcast %cst_20 : f32 to vector<8x32xf32>
    %53 = vector.broadcast %11 : vector<1x32xf32> to vector<8x32xf32>
    %54 = arith.mulf %38, %53 : vector<8x32xf32>
    %55 = arith.truncf %54 : vector<8x32xf32> to vector<8x32xbf16>
    %cst_21 = arith.constant dense<0.000000e+00> : vector<8x8xf32>
    %56 = tpu.matmul %55, %51, %cst_21 {dimension_numbers = #tpu.dot_dimension_numbers<[1], [1], [0], [0], [0, 0, 1, 0], [], []>} : vector<8x32xbf16>, vector<8x32xbf16>, vector<8x8xf32> -> vector<8x8xf32>
    %cst_22 = arith.constant 0.353553385 : f32
    %57 = vector.broadcast %cst_22 : f32 to vector<8x8xf32>
    %58 = arith.mulf %56, %57 : vector<8x8xf32>
    %cst_23 = arith.constant dense<0xFF800000> : vector<8xf32>
    %59 = vector.multi_reduction <maximumf>, %58, %cst_23 [1] : vector<8x8xf32> to vector<8xf32>
    %60 = vector.shape_cast %59 : vector<8xf32> to vector<8x1xf32>
    %61 = vector.broadcast %60 : vector<8x1xf32> to vector<8x8xf32>
    %62 = arith.subf %58, %61 : vector<8x8xf32>
    %63 = math.exp %62 : vector<8x8xf32>
    %cst_24 = arith.constant dense<0.000000e+00> : vector<8xf32>
    %64 = vector.multi_reduction <add>, %63, %cst_24 [1] : vector<8x8xf32> to vector<8xf32>
    %65 = vector.shape_cast %64 : vector<8xf32> to vector<8x1xf32>
    %66 = tpu.reciprocal %65 {approx = true} : vector<8x1xf32> -> vector<8x1xf32>
    %67 = vector.broadcast %66 : vector<8x1xf32> to vector<8x8xf32>
    %68 = arith.mulf %63, %67 : vector<8x8xf32>
    %69 = arith.truncf %68 : vector<8x8xf32> to vector<8x8xbf16>
    %70 = vector.broadcast %11 : vector<1x32xf32> to vector<8x32xf32>
    %71 = arith.mulf %50, %70 : vector<8x32xf32>
    %72 = arith.truncf %71 : vector<8x32xf32> to vector<8x32xbf16>
    %cst_25 = arith.constant dense<0.000000e+00> : vector<8x32xf32>
    %73 = tpu.matmul %69, %72, %cst_25 {dimension_numbers = #tpu.dot_dimension_numbers<[1], [0], [0], [1], [0, 0, 1, 1], [], []>} : vector<8x8xbf16>, vector<8x32xbf16>, vector<8x32xf32> -> vector<8x32xf32>
    %74 = arith.addf %52, %73 : vector<8x32xf32>
    %75 = vector.broadcast %18 : vector<1x32xf32> to vector<8x32xf32>
    %76 = arith.mulf %38, %75 : vector<8x32xf32>
    %77 = arith.truncf %76 : vector<8x32xf32> to vector<8x32xbf16>
    %cst_26 = arith.constant dense<0.000000e+00> : vector<8x8xf32>
    %78 = tpu.matmul %77, %51, %cst_26 {dimension_numbers = #tpu.dot_dimension_numbers<[1], [1], [0], [0], [0, 0, 1, 0], [], []>} : vector<8x32xbf16>, vector<8x32xbf16>, vector<8x8xf32> -> vector<8x8xf32>
    %cst_27 = arith.constant 0.353553385 : f32
    %79 = vector.broadcast %cst_27 : f32 to vector<8x8xf32>
    %80 = arith.mulf %78, %79 : vector<8x8xf32>
    %cst_28 = arith.constant dense<0xFF800000> : vector<8xf32>
    %81 = vector.multi_reduction <maximumf>, %80, %cst_28 [1] : vector<8x8xf32> to vector<8xf32>
    %82 = vector.shape_cast %81 : vector<8xf32> to vector<8x1xf32>
    %83 = vector.broadcast %82 : vector<8x1xf32> to vector<8x8xf32>
    %84 = arith.subf %80, %83 : vector<8x8xf32>
    %85 = math.exp %84 : vector<8x8xf32>
    %cst_29 = arith.constant dense<0.000000e+00> : vector<8xf32>
    %86 = vector.multi_reduction <add>, %85, %cst_29 [1] : vector<8x8xf32> to vector<8xf32>
    %87 = vector.shape_cast %86 : vector<8xf32> to vector<8x1xf32>
    %88 = tpu.reciprocal %87 {approx = true} : vector<8x1xf32> -> vector<8x1xf32>
    %89 = vector.broadcast %88 : vector<8x1xf32> to vector<8x8xf32>
    %90 = arith.mulf %85, %89 : vector<8x8xf32>
    %91 = arith.truncf %90 : vector<8x8xf32> to vector<8x8xbf16>
    %92 = vector.broadcast %18 : vector<1x32xf32> to vector<8x32xf32>
    %93 = arith.mulf %50, %92 : vector<8x32xf32>
    %94 = arith.truncf %93 : vector<8x32xf32> to vector<8x32xbf16>
    %cst_30 = arith.constant dense<0.000000e+00> : vector<8x32xf32>
    %95 = tpu.matmul %91, %94, %cst_30 {dimension_numbers = #tpu.dot_dimension_numbers<[1], [0], [0], [1], [0, 0, 1, 1], [], []>} : vector<8x8xbf16>, vector<8x32xbf16>, vector<8x32xf32> -> vector<8x32xf32>
    %96 = arith.addf %74, %95 : vector<8x32xf32>
    %97 = vector.broadcast %25 : vector<1x32xf32> to vector<8x32xf32>
    %98 = arith.mulf %38, %97 : vector<8x32xf32>
    %99 = arith.truncf %98 : vector<8x32xf32> to vector<8x32xbf16>
    %cst_31 = arith.constant dense<0.000000e+00> : vector<8x8xf32>
    %100 = tpu.matmul %99, %51, %cst_31 {dimension_numbers = #tpu.dot_dimension_numbers<[1], [1], [0], [0], [0, 0, 1, 0], [], []>} : vector<8x32xbf16>, vector<8x32xbf16>, vector<8x8xf32> -> vector<8x8xf32>
    %cst_32 = arith.constant 0.353553385 : f32
    %101 = vector.broadcast %cst_32 : f32 to vector<8x8xf32>
    %102 = arith.mulf %100, %101 : vector<8x8xf32>
    %cst_33 = arith.constant dense<0xFF800000> : vector<8xf32>
    %103 = vector.multi_reduction <maximumf>, %102, %cst_33 [1] : vector<8x8xf32> to vector<8xf32>
    %104 = vector.shape_cast %103 : vector<8xf32> to vector<8x1xf32>
    %105 = vector.broadcast %104 : vector<8x1xf32> to vector<8x8xf32>
    %106 = arith.subf %102, %105 : vector<8x8xf32>
    %107 = math.exp %106 : vector<8x8xf32>
    %cst_34 = arith.constant dense<0.000000e+00> : vector<8xf32>
    %108 = vector.multi_reduction <add>, %107, %cst_34 [1] : vector<8x8xf32> to vector<8xf32>
    %109 = vector.shape_cast %108 : vector<8xf32> to vector<8x1xf32>
    %110 = tpu.reciprocal %109 {approx = true} : vector<8x1xf32> -> vector<8x1xf32>
    %111 = vector.broadcast %110 : vector<8x1xf32> to vector<8x8xf32>
    %112 = arith.mulf %107, %111 : vector<8x8xf32>
    %113 = arith.truncf %112 : vector<8x8xf32> to vector<8x8xbf16>
    %114 = vector.broadcast %25 : vector<1x32xf32> to vector<8x32xf32>
    %115 = arith.mulf %50, %114 : vector<8x32xf32>
    %116 = arith.truncf %115 : vector<8x32xf32> to vector<8x32xbf16>
    %cst_35 = arith.constant dense<0.000000e+00> : vector<8x32xf32>
    %117 = tpu.matmul %113, %116, %cst_35 {dimension_numbers = #tpu.dot_dimension_numbers<[1], [0], [0], [1], [0, 0, 1, 1], [], []>} : vector<8x8xbf16>, vector<8x32xbf16>, vector<8x32xf32> -> vector<8x32xf32>
    %118 = arith.addf %96, %117 : vector<8x32xf32>
    %119 = vector.broadcast %32 : vector<1x32xf32> to vector<8x32xf32>
    %120 = arith.mulf %38, %119 : vector<8x32xf32>
    %121 = arith.truncf %120 : vector<8x32xf32> to vector<8x32xbf16>
    %cst_36 = arith.constant dense<0.000000e+00> : vector<8x8xf32>
    %122 = tpu.matmul %121, %51, %cst_36 {dimension_numbers = #tpu.dot_dimension_numbers<[1], [1], [0], [0], [0, 0, 1, 0], [], []>} : vector<8x32xbf16>, vector<8x32xbf16>, vector<8x8xf32> -> vector<8x8xf32>
    %cst_37 = arith.constant 0.353553385 : f32
    %123 = vector.broadcast %cst_37 : f32 to vector<8x8xf32>
    %124 = arith.mulf %122, %123 : vector<8x8xf32>
    %cst_38 = arith.constant dense<0xFF800000> : vector<8xf32>
    %125 = vector.multi_reduction <maximumf>, %124, %cst_38 [1] : vector<8x8xf32> to vector<8xf32>
    %126 = vector.shape_cast %125 : vector<8xf32> to vector<8x1xf32>
    %127 = vector.broadcast %126 : vector<8x1xf32> to vector<8x8xf32>
    %128 = arith.subf %124, %127 : vector<8x8xf32>
    %129 = math.exp %128 : vector<8x8xf32>
    %cst_39 = arith.constant dense<0.000000e+00> : vector<8xf32>
    %130 = vector.multi_reduction <add>, %129, %cst_39 [1] : vector<8x8xf32> to vector<8xf32>
    %131 = vector.shape_cast %130 : vector<8xf32> to vector<8x1xf32>
    %132 = tpu.reciprocal %131 {approx = true} : vector<8x1xf32> -> vector<8x1xf32>
    %133 = vector.broadcast %132 : vector<8x1xf32> to vector<8x8xf32>
    %134 = arith.mulf %129, %133 : vector<8x8xf32>
    %135 = arith.truncf %134 : vector<8x8xf32> to vector<8x8xbf16>
    %136 = vector.broadcast %32 : vector<1x32xf32> to vector<8x32xf32>
    %137 = arith.mulf %50, %136 : vector<8x32xf32>
    %138 = arith.truncf %137 : vector<8x32xf32> to vector<8x32xbf16>
    %cst_40 = arith.constant dense<0.000000e+00> : vector<8x32xf32>
    %139 = tpu.matmul %135, %138, %cst_40 {dimension_numbers = #tpu.dot_dimension_numbers<[1], [0], [0], [1], [0, 0, 1, 1], [], []>} : vector<8x8xbf16>, vector<8x32xbf16>, vector<8x32xf32> -> vector<8x32xf32>
    %140 = arith.addf %118, %139 : vector<8x32xf32>
    %c0_41 = arith.constant 0 : index
    %c0_42 = arith.constant 0 : index
    %141 = vector.load %arg5[%c0_41, %c0_42] : memref<32x32xbf16, #tpu.memory_space<vmem>>, vector<32x32xbf16>
    %c0_43 = arith.constant 0 : index
    %c0_44 = arith.constant 0 : index
    %142 = vector.load %arg6[%c0_43, %c0_44] : memref<1x32xf32, #tpu.memory_space<vmem>>, vector<1x32xf32>
    %143 = arith.truncf %140 : vector<8x32xf32> to vector<8x32xbf16>
    %cst_45 = arith.constant dense<0.000000e+00> : vector<8x32xf32>
    %144 = tpu.matmul %143, %141, %cst_45 {dimension_numbers = #tpu.dot_dimension_numbers<[1], [0], [0], [1], [0, 0, 1, 1], [], []>} : vector<8x32xbf16>, vector<32x32xbf16>, vector<8x32xf32> -> vector<8x32xf32>
    %145 = vector.broadcast %142 : vector<1x32xf32> to vector<8x32xf32>
    %146 = arith.addf %144, %145 : vector<8x32xf32>
    %c0_46 = arith.constant 0 : index
    %c0_47 = arith.constant 0 : index
    %147 = vector.load %arg7[%c0_46, %c0_47] : memref<1x32xf32, #tpu.memory_space<vmem>>, vector<1x32xf32>
    %c0_48 = arith.constant 0 : index
    %c0_49 = arith.constant 0 : index
    %148 = vector.load %arg8[%c0_48, %c0_49] : memref<1x32xf32, #tpu.memory_space<vmem>>, vector<1x32xf32>
    %149 = arith.addf %146, %1 : vector<8x32xf32>
    %cst_50 = arith.constant dense<0.000000e+00> : vector<8xf32>
    %150 = vector.multi_reduction <add>, %149, %cst_50 [1] : vector<8x32xf32> to vector<8xf32>
    %151 = vector.shape_cast %150 : vector<8xf32> to vector<8x1xf32>
    %cst_51 = arith.constant 3.200000e+01 : f32
    %152 = vector.broadcast %cst_51 : f32 to vector<8x1xf32>
    %153 = arith.divf %151, %152 : vector<8x1xf32>
    %154 = vector.broadcast %153 : vector<8x1xf32> to vector<8x32xf32>
    %155 = arith.subf %149, %154 : vector<8x32xf32>
    %156 = arith.mulf %155, %155 : vector<8x32xf32>
    %cst_52 = arith.constant dense<0.000000e+00> : vector<8xf32>
    %157 = vector.multi_reduction <add>, %156, %cst_52 [1] : vector<8x32xf32> to vector<8xf32>
    %158 = vector.shape_cast %157 : vector<8xf32> to vector<8x1xf32>
    %cst_53 = arith.constant 3.200000e+01 : f32
    %159 = vector.broadcast %cst_53 : f32 to vector<8x1xf32>
    %160 = arith.divf %158, %159 : vector<8x1xf32>
    %cst_54 = arith.constant 9.99999974E-6 : f32
    %161 = vector.broadcast %cst_54 : f32 to vector<8x1xf32>
    %162 = arith.addf %160, %161 : vector<8x1xf32>
    %163 = math.rsqrt %162 : vector<8x1xf32>
    %164 = vector.broadcast %163 : vector<8x1xf32> to vector<8x32xf32>
    %165 = arith.mulf %155, %164 : vector<8x32xf32>
    %166 = vector.broadcast %147 : vector<1x32xf32> to vector<8x32xf32>
    %167 = arith.mulf %165, %166 : vector<8x32xf32>
    %168 = vector.broadcast %148 : vector<1x32xf32> to vector<8x32xf32>
    %169 = arith.addf %167, %168 : vector<8x32xf32>
    %c0_55 = arith.constant 0 : index
    %c0_56 = arith.constant 0 : index
    %170 = vector.load %arg9[%c0_55, %c0_56] : memref<32x32xbf16, #tpu.memory_space<vmem>>, vector<32x32xbf16>
    %c0_57 = arith.constant 0 : index
    %c0_58 = arith.constant 0 : index
    %171 = vector.load %arg10[%c0_57, %c0_58] : memref<1x32xf32, #tpu.memory_space<vmem>>, vector<1x32xf32>
    %172 = arith.truncf %169 : vector<8x32xf32> to vector<8x32xbf16>
    %cst_59 = arith.constant dense<0.000000e+00> : vector<8x32xf32>
    %173 = tpu.matmul %172, %170, %cst_59 {dimension_numbers = #tpu.dot_dimension_numbers<[1], [0], [0], [1], [0, 0, 1, 1], [], []>} : vector<8x32xbf16>, vector<32x32xbf16>, vector<8x32xf32> -> vector<8x32xf32>
    %174 = vector.broadcast %171 : vector<1x32xf32> to vector<8x32xf32>
    %175 = arith.addf %173, %174 : vector<8x32xf32>
    %c0_60 = arith.constant 0 : index
    %c0_61 = arith.constant 0 : index
    %176 = vector.load %arg11[%c0_60, %c0_61] : memref<32x64xbf16, #tpu.memory_space<vmem>>, vector<32x32xbf16>
    %c0_62 = arith.constant 0 : index
    %c0_63 = arith.constant 0 : index
    %177 = vector.load %arg12[%c0_62, %c0_63] : memref<1x64xf32, #tpu.memory_space<vmem>>, vector<1x32xf32>
    %178 = arith.truncf %3 : vector<8x32xf32> to vector<8x32xbf16>
    %cst_64 = arith.constant dense<0.000000e+00> : vector<8x32xf32>
    %179 = tpu.matmul %178, %176, %cst_64 {dimension_numbers = #tpu.dot_dimension_numbers<[1], [0], [0], [1], [0, 0, 1, 1], [], []>} : vector<8x32xbf16>, vector<32x32xbf16>, vector<8x32xf32> -> vector<8x32xf32>
    %180 = vector.broadcast %177 : vector<1x32xf32> to vector<8x32xf32>
    %181 = arith.addf %179, %180 : vector<8x32xf32>
    %c0_65 = arith.constant 0 : index
    %c32_66 = arith.constant 32 : index
    %182 = vector.load %arg11[%c0_65, %c32_66] : memref<32x64xbf16, #tpu.memory_space<vmem>>, vector<32x32xbf16>
    %c0_67 = arith.constant 0 : index
    %c32_68 = arith.constant 32 : index
    %183 = vector.load %arg12[%c0_67, %c32_68] : memref<1x64xf32, #tpu.memory_space<vmem>>, vector<1x32xf32>
    %184 = arith.truncf %3 : vector<8x32xf32> to vector<8x32xbf16>
    %cst_69 = arith.constant dense<0.000000e+00> : vector<8x32xf32>
    %185 = tpu.matmul %184, %182, %cst_69 {dimension_numbers = #tpu.dot_dimension_numbers<[1], [0], [0], [1], [0, 0, 1, 1], [], []>} : vector<8x32xbf16>, vector<32x32xbf16>, vector<8x32xf32> -> vector<8x32xf32>
    %186 = vector.broadcast %183 : vector<1x32xf32> to vector<8x32xf32>
    %187 = arith.addf %185, %186 : vector<8x32xf32>
    %188 = arith.truncf %181 : vector<8x32xf32> to vector<8x32xbf16>
    %cst_70 = arith.constant 0.000000e+00 : f32
    %189 = vector.broadcast %cst_70 : f32 to vector<8x32xf32>
    %190 = vector.broadcast %11 : vector<1x32xf32> to vector<8x32xf32>
    %191 = arith.mulf %175, %190 : vector<8x32xf32>
    %192 = arith.truncf %191 : vector<8x32xf32> to vector<8x32xbf16>
    %cst_71 = arith.constant dense<0.000000e+00> : vector<8x8xf32>
    %193 = tpu.matmul %192, %188, %cst_71 {dimension_numbers = #tpu.dot_dimension_numbers<[1], [1], [0], [0], [0, 0, 1, 0], [], []>} : vector<8x32xbf16>, vector<8x32xbf16>, vector<8x8xf32> -> vector<8x8xf32>
    %cst_72 = arith.constant 0.353553385 : f32
    %194 = vector.broadcast %cst_72 : f32 to vector<8x8xf32>
    %195 = arith.mulf %193, %194 : vector<8x8xf32>
    %cst_73 = arith.constant dense<0xFF800000> : vector<8xf32>
    %196 = vector.multi_reduction <maximumf>, %195, %cst_73 [1] : vector<8x8xf32> to vector<8xf32>
    %197 = vector.shape_cast %196 : vector<8xf32> to vector<8x1xf32>
    %198 = vector.broadcast %197 : vector<8x1xf32> to vector<8x8xf32>
    %199 = arith.subf %195, %198 : vector<8x8xf32>
    %200 = math.exp %199 : vector<8x8xf32>
    %cst_74 = arith.constant dense<0.000000e+00> : vector<8xf32>
    %201 = vector.multi_reduction <add>, %200, %cst_74 [1] : vector<8x8xf32> to vector<8xf32>
    %202 = vector.shape_cast %201 : vector<8xf32> to vector<8x1xf32>
    %203 = tpu.reciprocal %202 {approx = true} : vector<8x1xf32> -> vector<8x1xf32>
    %204 = vector.broadcast %203 : vector<8x1xf32> to vector<8x8xf32>
    %205 = arith.mulf %200, %204 : vector<8x8xf32>
    %206 = arith.truncf %205 : vector<8x8xf32> to vector<8x8xbf16>
    %207 = vector.broadcast %11 : vector<1x32xf32> to vector<8x32xf32>
    %208 = arith.mulf %187, %207 : vector<8x32xf32>
    %209 = arith.truncf %208 : vector<8x32xf32> to vector<8x32xbf16>
    %cst_75 = arith.constant dense<0.000000e+00> : vector<8x32xf32>
    %210 = tpu.matmul %206, %209, %cst_75 {dimension_numbers = #tpu.dot_dimension_numbers<[1], [0], [0], [1], [0, 0, 1, 1], [], []>} : vector<8x8xbf16>, vector<8x32xbf16>, vector<8x32xf32> -> vector<8x32xf32>
    %211 = arith.addf %189, %210 : vector<8x32xf32>
    %212 = vector.broadcast %18 : vector<1x32xf32> to vector<8x32xf32>
    %213 = arith.mulf %175, %212 : vector<8x32xf32>
    %214 = arith.truncf %213 : vector<8x32xf32> to vector<8x32xbf16>
    %cst_76 = arith.constant dense<0.000000e+00> : vector<8x8xf32>
    %215 = tpu.matmul %214, %188, %cst_76 {dimension_numbers = #tpu.dot_dimension_numbers<[1], [1], [0], [0], [0, 0, 1, 0], [], []>} : vector<8x32xbf16>, vector<8x32xbf16>, vector<8x8xf32> -> vector<8x8xf32>
    %cst_77 = arith.constant 0.353553385 : f32
    %216 = vector.broadcast %cst_77 : f32 to vector<8x8xf32>
    %217 = arith.mulf %215, %216 : vector<8x8xf32>
    %cst_78 = arith.constant dense<0xFF800000> : vector<8xf32>
    %218 = vector.multi_reduction <maximumf>, %217, %cst_78 [1] : vector<8x8xf32> to vector<8xf32>
    %219 = vector.shape_cast %218 : vector<8xf32> to vector<8x1xf32>
    %220 = vector.broadcast %219 : vector<8x1xf32> to vector<8x8xf32>
    %221 = arith.subf %217, %220 : vector<8x8xf32>
    %222 = math.exp %221 : vector<8x8xf32>
    %cst_79 = arith.constant dense<0.000000e+00> : vector<8xf32>
    %223 = vector.multi_reduction <add>, %222, %cst_79 [1] : vector<8x8xf32> to vector<8xf32>
    %224 = vector.shape_cast %223 : vector<8xf32> to vector<8x1xf32>
    %225 = tpu.reciprocal %224 {approx = true} : vector<8x1xf32> -> vector<8x1xf32>
    %226 = vector.broadcast %225 : vector<8x1xf32> to vector<8x8xf32>
    %227 = arith.mulf %222, %226 : vector<8x8xf32>
    %228 = arith.truncf %227 : vector<8x8xf32> to vector<8x8xbf16>
    %229 = vector.broadcast %18 : vector<1x32xf32> to vector<8x32xf32>
    %230 = arith.mulf %187, %229 : vector<8x32xf32>
    %231 = arith.truncf %230 : vector<8x32xf32> to vector<8x32xbf16>
    %cst_80 = arith.constant dense<0.000000e+00> : vector<8x32xf32>
    %232 = tpu.matmul %228, %231, %cst_80 {dimension_numbers = #tpu.dot_dimension_numbers<[1], [0], [0], [1], [0, 0, 1, 1], [], []>} : vector<8x8xbf16>, vector<8x32xbf16>, vector<8x32xf32> -> vector<8x32xf32>
    %233 = arith.addf %211, %232 : vector<8x32xf32>
    %234 = vector.broadcast %25 : vector<1x32xf32> to vector<8x32xf32>
    %235 = arith.mulf %175, %234 : vector<8x32xf32>
    %236 = arith.truncf %235 : vector<8x32xf32> to vector<8x32xbf16>
    %cst_81 = arith.constant dense<0.000000e+00> : vector<8x8xf32>
    %237 = tpu.matmul %236, %188, %cst_81 {dimension_numbers = #tpu.dot_dimension_numbers<[1], [1], [0], [0], [0, 0, 1, 0], [], []>} : vector<8x32xbf16>, vector<8x32xbf16>, vector<8x8xf32> -> vector<8x8xf32>
    %cst_82 = arith.constant 0.353553385 : f32
    %238 = vector.broadcast %cst_82 : f32 to vector<8x8xf32>
    %239 = arith.mulf %237, %238 : vector<8x8xf32>
    %cst_83 = arith.constant dense<0xFF800000> : vector<8xf32>
    %240 = vector.multi_reduction <maximumf>, %239, %cst_83 [1] : vector<8x8xf32> to vector<8xf32>
    %241 = vector.shape_cast %240 : vector<8xf32> to vector<8x1xf32>
    %242 = vector.broadcast %241 : vector<8x1xf32> to vector<8x8xf32>
    %243 = arith.subf %239, %242 : vector<8x8xf32>
    %244 = math.exp %243 : vector<8x8xf32>
    %cst_84 = arith.constant dense<0.000000e+00> : vector<8xf32>
    %245 = vector.multi_reduction <add>, %244, %cst_84 [1] : vector<8x8xf32> to vector<8xf32>
    %246 = vector.shape_cast %245 : vector<8xf32> to vector<8x1xf32>
    %247 = tpu.reciprocal %246 {approx = true} : vector<8x1xf32> -> vector<8x1xf32>
    %248 = vector.broadcast %247 : vector<8x1xf32> to vector<8x8xf32>
    %249 = arith.mulf %244, %248 : vector<8x8xf32>
    %250 = arith.truncf %249 : vector<8x8xf32> to vector<8x8xbf16>
    %251 = vector.broadcast %25 : vector<1x32xf32> to vector<8x32xf32>
    %252 = arith.mulf %187, %251 : vector<8x32xf32>
    %253 = arith.truncf %252 : vector<8x32xf32> to vector<8x32xbf16>
    %cst_85 = arith.constant dense<0.000000e+00> : vector<8x32xf32>
    %254 = tpu.matmul %250, %253, %cst_85 {dimension_numbers = #tpu.dot_dimension_numbers<[1], [0], [0], [1], [0, 0, 1, 1], [], []>} : vector<8x8xbf16>, vector<8x32xbf16>, vector<8x32xf32> -> vector<8x32xf32>
    %255 = arith.addf %233, %254 : vector<8x32xf32>
    %256 = vector.broadcast %32 : vector<1x32xf32> to vector<8x32xf32>
    %257 = arith.mulf %175, %256 : vector<8x32xf32>
    %258 = arith.truncf %257 : vector<8x32xf32> to vector<8x32xbf16>
    %cst_86 = arith.constant dense<0.000000e+00> : vector<8x8xf32>
    %259 = tpu.matmul %258, %188, %cst_86 {dimension_numbers = #tpu.dot_dimension_numbers<[1], [1], [0], [0], [0, 0, 1, 0], [], []>} : vector<8x32xbf16>, vector<8x32xbf16>, vector<8x8xf32> -> vector<8x8xf32>
    %cst_87 = arith.constant 0.353553385 : f32
    %260 = vector.broadcast %cst_87 : f32 to vector<8x8xf32>
    %261 = arith.mulf %259, %260 : vector<8x8xf32>
    %cst_88 = arith.constant dense<0xFF800000> : vector<8xf32>
    %262 = vector.multi_reduction <maximumf>, %261, %cst_88 [1] : vector<8x8xf32> to vector<8xf32>
    %263 = vector.shape_cast %262 : vector<8xf32> to vector<8x1xf32>
    %264 = vector.broadcast %263 : vector<8x1xf32> to vector<8x8xf32>
    %265 = arith.subf %261, %264 : vector<8x8xf32>
    %266 = math.exp %265 : vector<8x8xf32>
    %cst_89 = arith.constant dense<0.000000e+00> : vector<8xf32>
    %267 = vector.multi_reduction <add>, %266, %cst_89 [1] : vector<8x8xf32> to vector<8xf32>
    %268 = vector.shape_cast %267 : vector<8xf32> to vector<8x1xf32>
    %269 = tpu.reciprocal %268 {approx = true} : vector<8x1xf32> -> vector<8x1xf32>
    %270 = vector.broadcast %269 : vector<8x1xf32> to vector<8x8xf32>
    %271 = arith.mulf %266, %270 : vector<8x8xf32>
    %272 = arith.truncf %271 : vector<8x8xf32> to vector<8x8xbf16>
    %273 = vector.broadcast %32 : vector<1x32xf32> to vector<8x32xf32>
    %274 = arith.mulf %187, %273 : vector<8x32xf32>
    %275 = arith.truncf %274 : vector<8x32xf32> to vector<8x32xbf16>
    %cst_90 = arith.constant dense<0.000000e+00> : vector<8x32xf32>
    %276 = tpu.matmul %272, %275, %cst_90 {dimension_numbers = #tpu.dot_dimension_numbers<[1], [0], [0], [1], [0, 0, 1, 1], [], []>} : vector<8x8xbf16>, vector<8x32xbf16>, vector<8x32xf32> -> vector<8x32xf32>
    %277 = arith.addf %255, %276 : vector<8x32xf32>
    %c0_91 = arith.constant 0 : index
    %c0_92 = arith.constant 0 : index
    %278 = vector.load %arg13[%c0_91, %c0_92] : memref<32x32xbf16, #tpu.memory_space<vmem>>, vector<32x32xbf16>
    %c0_93 = arith.constant 0 : index
    %c0_94 = arith.constant 0 : index
    %279 = vector.load %arg14[%c0_93, %c0_94] : memref<1x32xf32, #tpu.memory_space<vmem>>, vector<1x32xf32>
    %280 = arith.truncf %277 : vector<8x32xf32> to vector<8x32xbf16>
    %cst_95 = arith.constant dense<0.000000e+00> : vector<8x32xf32>
    %281 = tpu.matmul %280, %278, %cst_95 {dimension_numbers = #tpu.dot_dimension_numbers<[1], [0], [0], [1], [0, 0, 1, 1], [], []>} : vector<8x32xbf16>, vector<32x32xbf16>, vector<8x32xf32> -> vector<8x32xf32>
    %282 = vector.broadcast %279 : vector<1x32xf32> to vector<8x32xf32>
    %283 = arith.addf %281, %282 : vector<8x32xf32>
    %c0_96 = arith.constant 0 : index
    %c0_97 = arith.constant 0 : index
    %284 = vector.load %arg15[%c0_96, %c0_97] : memref<1x32xf32, #tpu.memory_space<vmem>>, vector<1x32xf32>
    %c0_98 = arith.constant 0 : index
    %c0_99 = arith.constant 0 : index
    %285 = vector.load %arg16[%c0_98, %c0_99] : memref<1x32xf32, #tpu.memory_space<vmem>>, vector<1x32xf32>
    %286 = arith.addf %283, %169 : vector<8x32xf32>
    %cst_100 = arith.constant dense<0.000000e+00> : vector<8xf32>
    %287 = vector.multi_reduction <add>, %286, %cst_100 [1] : vector<8x32xf32> to vector<8xf32>
    %288 = vector.shape_cast %287 : vector<8xf32> to vector<8x1xf32>
    %cst_101 = arith.constant 3.200000e+01 : f32
    %289 = vector.broadcast %cst_101 : f32 to vector<8x1xf32>
    %290 = arith.divf %288, %289 : vector<8x1xf32>
    %291 = vector.broadcast %290 : vector<8x1xf32> to vector<8x32xf32>
    %292 = arith.subf %286, %291 : vector<8x32xf32>
    %293 = arith.mulf %292, %292 : vector<8x32xf32>
    %cst_102 = arith.constant dense<0.000000e+00> : vector<8xf32>
    %294 = vector.multi_reduction <add>, %293, %cst_102 [1] : vector<8x32xf32> to vector<8xf32>
    %295 = vector.shape_cast %294 : vector<8xf32> to vector<8x1xf32>
    %cst_103 = arith.constant 3.200000e+01 : f32
    %296 = vector.broadcast %cst_103 : f32 to vector<8x1xf32>
    %297 = arith.divf %295, %296 : vector<8x1xf32>
    %cst_104 = arith.constant 9.99999974E-6 : f32
    %298 = vector.broadcast %cst_104 : f32 to vector<8x1xf32>
    %299 = arith.addf %297, %298 : vector<8x1xf32>
    %300 = math.rsqrt %299 : vector<8x1xf32>
    %301 = vector.broadcast %300 : vector<8x1xf32> to vector<8x32xf32>
    %302 = arith.mulf %292, %301 : vector<8x32xf32>
    %303 = vector.broadcast %284 : vector<1x32xf32> to vector<8x32xf32>
    %304 = arith.mulf %302, %303 : vector<8x32xf32>
    %305 = vector.broadcast %285 : vector<1x32xf32> to vector<8x32xf32>
    %306 = arith.addf %304, %305 : vector<8x32xf32>
    %c0_105 = arith.constant 0 : index
    %c0_106 = arith.constant 0 : index
    %307 = vector.load %arg17[%c0_105, %c0_106] : memref<32x64xbf16, #tpu.memory_space<vmem>>, vector<32x64xbf16>
    %c0_107 = arith.constant 0 : index
    %c0_108 = arith.constant 0 : index
    %308 = vector.load %arg18[%c0_107, %c0_108] : memref<1x64xf32, #tpu.memory_space<vmem>>, vector<1x64xf32>
    %309 = arith.truncf %306 : vector<8x32xf32> to vector<8x32xbf16>
    %cst_109 = arith.constant dense<0.000000e+00> : vector<8x64xf32>
    %310 = tpu.matmul %309, %307, %cst_109 {dimension_numbers = #tpu.dot_dimension_numbers<[1], [0], [0], [1], [0, 0, 1, 1], [], []>} : vector<8x32xbf16>, vector<32x64xbf16>, vector<8x64xf32> -> vector<8x64xf32>
    %311 = vector.broadcast %308 : vector<1x64xf32> to vector<8x64xf32>
    %312 = arith.addf %310, %311 : vector<8x64xf32>
    %cst_110 = arith.constant 0.000000e+00 : f32
    %313 = vector.broadcast %cst_110 : f32 to vector<8x64xf32>
    %314 = arith.maximumf %312, %313 : vector<8x64xf32>
    %c0_111 = arith.constant 0 : index
    %c0_112 = arith.constant 0 : index
    %315 = vector.load %arg19[%c0_111, %c0_112] : memref<64x32xbf16, #tpu.memory_space<vmem>>, vector<64x32xbf16>
    %c0_113 = arith.constant 0 : index
    %c0_114 = arith.constant 0 : index
    %316 = vector.load %arg20[%c0_113, %c0_114] : memref<1x32xf32, #tpu.memory_space<vmem>>, vector<1x32xf32>
    %317 = arith.truncf %314 : vector<8x64xf32> to vector<8x64xbf16>
    %cst_115 = arith.constant dense<0.000000e+00> : vector<8x32xf32>
    %318 = tpu.matmul %317, %315, %cst_115 {dimension_numbers = #tpu.dot_dimension_numbers<[1], [0], [0], [1], [0, 0, 1, 1], [], []>} : vector<8x64xbf16>, vector<64x32xbf16>, vector<8x32xf32> -> vector<8x32xf32>
    %319 = vector.broadcast %316 : vector<1x32xf32> to vector<8x32xf32>
    %320 = arith.addf %318, %319 : vector<8x32xf32>
    %c0_116 = arith.constant 0 : index
    %c0_117 = arith.constant 0 : index
    %321 = vector.load %arg21[%c0_116, %c0_117] : memref<1x32xf32, #tpu.memory_space<vmem>>, vector<1x32xf32>
    %c0_118 = arith.constant 0 : index
    %c0_119 = arith.constant 0 : index
    %322 = vector.load %arg22[%c0_118, %c0_119] : memref<1x32xf32, #tpu.memory_space<vmem>>, vector<1x32xf32>
    %323 = arith.addf %320, %306 : vector<8x32xf32>
    %cst_120 = arith.constant dense<0.000000e+00> : vector<8xf32>
    %324 = vector.multi_reduction <add>, %323, %cst_120 [1] : vector<8x32xf32> to vector<8xf32>
    %325 = vector.shape_cast %324 : vector<8xf32> to vector<8x1xf32>
    %cst_121 = arith.constant 3.200000e+01 : f32
    %326 = vector.broadcast %cst_121 : f32 to vector<8x1xf32>
    %327 = arith.divf %325, %326 : vector<8x1xf32>
    %328 = vector.broadcast %327 : vector<8x1xf32> to vector<8x32xf32>
    %329 = arith.subf %323, %328 : vector<8x32xf32>
    %330 = arith.mulf %329, %329 : vector<8x32xf32>
    %cst_122 = arith.constant dense<0.000000e+00> : vector<8xf32>
    %331 = vector.multi_reduction <add>, %330, %cst_122 [1] : vector<8x32xf32> to vector<8xf32>
    %332 = vector.shape_cast %331 : vector<8xf32> to vector<8x1xf32>
    %cst_123 = arith.constant 3.200000e+01 : f32
    %333 = vector.broadcast %cst_123 : f32 to vector<8x1xf32>
    %334 = arith.divf %332, %333 : vector<8x1xf32>
    %cst_124 = arith.constant 9.99999974E-6 : f32
    %335 = vector.broadcast %cst_124 : f32 to vector<8x1xf32>
    %336 = arith.addf %334, %335 : vector<8x1xf32>
    %337 = math.rsqrt %336 : vector<8x1xf32>
    %338 = vector.broadcast %337 : vector<8x1xf32> to vector<8x32xf32>
    %339 = arith.mulf %329, %338 : vector<8x32xf32>
    %340 = vector.broadcast %321 : vector<1x32xf32> to vector<8x32xf32>
    %341 = arith.mulf %339, %340 : vector<8x32xf32>
    %342 = vector.broadcast %322 : vector<1x32xf32> to vector<8x32xf32>
    %343 = arith.addf %341, %342 : vector<8x32xf32>
    %c0_125 = arith.constant 0 : index
    %c0_126 = arith.constant 0 : index
    %c0_127 = arith.constant 0 : index
    %344 = vector.load %arg23[%c0_125, %c0_126, %c0_127] : memref<1x8x32xf32, #tpu.memory_space<vmem>>, vector<1x8x32xf32>
    %345 = vector.shape_cast %344 : vector<1x8x32xf32> to vector<8x32xf32>
    %346 = vector.shape_cast %343 : vector<8x32xf32> to vector<1x8x32xf32>
    tpu.vector_store %arg23[%c0_125, %c0_126, %c0_127], %346 {strides = array<i32>} : memref<1x8x32xf32, #tpu.memory_space<vmem>>, vector<1x8x32xf32>,
    return
  }
  func.func @transform_0(%arg0: i32) -> (i32, i32, i32) {
    %c0_i32 = arith.constant 0 : i32
    %c0_i32_0 = arith.constant 0 : i32
    %c0_i32_1 = arith.constant 0 : i32
    return %arg0, %c0_i32, %c0_i32_0 : i32, i32, i32
  }
  func.func @transform_1(%arg0: i32) -> (i32, i32, i32) {
    %c0_i32 = arith.constant 0 : i32
    %c0_i32_0 = arith.constant 0 : i32
    %c0_i32_1 = arith.constant 0 : i32
    return %arg0, %c0_i32, %c0_i32_0 : i32, i32, i32
  }
  func.func @transform_2(%arg0: i32) -> (i32, i32) {
    %c0_i32 = arith.constant 0 : i32
    %c0_i32_0 = arith.constant 0 : i32
    %c0_i32_1 = arith.constant 0 : i32
    return %c0_i32, %c0_i32_0 : i32, i32
  }
  func.func @transform_3(%arg0: i32) -> (i32, i32) {
    %c0_i32 = arith.constant 0 : i32
    %c0_i32_0 = arith.constant 0 : i32
    %c0_i32_1 = arith.constant 0 : i32
    return %c0_i32, %c0_i32_0 : i32, i32
  }
  func.func @transform_4(%arg0: i32) -> (i32, i32) {
    %c0_i32 = arith.constant 0 : i32
    %c0_i32_0 = arith.constant 0 : i32
    %c0_i32_1 = arith.constant 0 : i32
    return %c0_i32, %c0_i32_0 : i32, i32
  }
  func.func @transform_5(%arg0: i32) -> (i32, i32) {
    %c0_i32 = arith.constant 0 : i32
    %c0_i32_0 = arith.constant 0 : i32
    %c0_i32_1 = arith.constant 0 : i32
    return %c0_i32, %c0_i32_0 : i32, i32
  }
  func.func @transform_6(%arg0: i32) -> (i32, i32) {
    %c0_i32 = arith.constant 0 : i32
    %c0_i32_0 = arith.constant 0 : i32
    %c0_i32_1 = arith.constant 0 : i32
    return %c0_i32, %c0_i32_0 : i32, i32
  }
  func.func @transform_7(%arg0: i32) -> (i32, i32) {
    %c0_i32 = arith.constant 0 : i32
    %c0_i32_0 = arith.constant 0 : i32
    %c0_i32_1 = arith.constant 0 : i32
    return %c0_i32, %c0_i32_0 : i32, i32
  }
  func.func @transform_8(%arg0: i32) -> (i32, i32) {
    %c0_i32 = arith.constant 0 : i32
    %c0_i32_0 = arith.constant 0 : i32
    %c0_i32_1 = arith.constant 0 : i32
    return %c0_i32, %c0_i32_0 : i32, i32
  }
  func.func @transform_9(%arg0: i32) -> (i32, i32) {
    %c0_i32 = arith.constant 0 : i32
    %c0_i32_0 = arith.constant 0 : i32
    %c0_i32_1 = arith.constant 0 : i32
    return %c0_i32, %c0_i32_0 : i32, i32
  }
  func.func @transform_10(%arg0: i32) -> (i32, i32) {
    %c0_i32 = arith.constant 0 : i32
    %c0_i32_0 = arith.constant 0 : i32
    %c0_i32_1 = arith.constant 0 : i32
    return %c0_i32, %c0_i32_0 : i32, i32
  }
  func.func @transform_11(%arg0: i32) -> (i32, i32) {
    %c0_i32 = arith.constant 0 : i32
    %c0_i32_0 = arith.constant 0 : i32
    %c0_i32_1 = arith.constant 0 : i32
    return %c0_i32, %c0_i32_0 : i32, i32
  }
  func.func @transform_12(%arg0: i32) -> (i32, i32) {
    %c0_i32 = arith.constant 0 : i32
    %c0_i32_0 = arith.constant 0 : i32
    %c0_i32_1 = arith.constant 0 : i32
    return %c0_i32, %c0_i32_0 : i32, i32
  }
  func.func @transform_13(%arg0: i32) -> (i32, i32) {
    %c0_i32 = arith.constant 0 : i32
    %c0_i32_0 = arith.constant 0 : i32
    %c0_i32_1 = arith.constant 0 : i32
    return %c0_i32, %c0_i32_0 : i32, i32
  }
  func.func @transform_14(%arg0: i32) -> (i32, i32) {
    %c0_i32 = arith.constant 0 : i32
    %c0_i32_0 = arith.constant 0 : i32
    %c0_i32_1 = arith.constant 0 : i32
    return %c0_i32, %c0_i32_0 : i32, i32
  }
  func.func @transform_15(%arg0: i32) -> (i32, i32) {
    %c0_i32 = arith.constant 0 : i32
    %c0_i32_0 = arith.constant 0 : i32
    %c0_i32_1 = arith.constant 0 : i32
    return %c0_i32, %c0_i32_0 : i32, i32
  }
  func.func @transform_16(%arg0: i32) -> (i32, i32) {
    %c0_i32 = arith.constant 0 : i32
    %c0_i32_0 = arith.constant 0 : i32
    %c0_i32_1 = arith.constant 0 : i32
    return %c0_i32, %c0_i32_0 : i32, i32
  }
  func.func @transform_17(%arg0: i32) -> (i32, i32) {
    %c0_i32 = arith.constant 0 : i32
    %c0_i32_0 = arith.constant 0 : i32
    %c0_i32_1 = arith.constant 0 : i32
    return %c0_i32, %c0_i32_0 : i32, i32
  }
  func.func @transform_18(%arg0: i32) -> (i32, i32) {
    %c0_i32 = arith.constant 0 : i32
    %c0_i32_0 = arith.constant 0 : i32
    %c0_i32_1 = arith.constant 0 : i32
    return %c0_i32, %c0_i32_0 : i32, i32
  }
  func.func @transform_19(%arg0: i32) -> (i32, i32) {
    %c0_i32 = arith.constant 0 : i32
    %c0_i32_0 = arith.constant 0 : i32
    %c0_i32_1 = arith.constant 0 : i32
    return %c0_i32, %c0_i32_0 : i32, i32
  }
  func.func @transform_20(%arg0: i32) -> (i32, i32) {
    %c0_i32 = arith.constant 0 : i32
    %c0_i32_0 = arith.constant 0 : i32
    %c0_i32_1 = arith.constant 0 : i32
    return %c0_i32, %c0_i32_0 : i32, i32
  }
  func.func @transform_21(%arg0: i32) -> (i32, i32) {
    %c0_i32 = arith.constant 0 : i32
    %c0_i32_0 = arith.constant 0 : i32
    %c0_i32_1 = arith.constant 0 : i32
    return %c0_i32, %c0_i32_0 : i32, i32
  }
  func.func @transform_22(%arg0: i32) -> (i32, i32, i32) {
    %c0_i32 = arith.constant 0 : i32
    %c0_i32_0 = arith.constant 0 : i32
    %c0_i32_1 = arith.constant 0 : i32
    return %arg0, %c0_i32, %c0_i32_0 : i32, i32, i32
  }
}

module attributes {stable_mosaic.version = 11 : i64} {
  func.func @_regressor_kernel(%arg0: i32, %arg1: memref<2x256xf32, #tpu.memory_space<vmem>>, %arg2: memref<256x64xbf16, #tpu.memory_space<vmem>>, %arg3: memref<64x1xbf16, #tpu.memory_space<vmem>>, %arg4: memref<1x1xf32, #tpu.memory_space<vmem>>, %arg5: memref<2x1xf32, #tpu.memory_space<vmem>>, %arg6: memref<2x64xf32, #tpu.memory_space<vmem>>) attributes {dimension_semantics = [#tpu.dimension_semantics<arbitrary>], iteration_bounds = array<i64: 1>, scalar_prefetch = 0 : i64, scratch_operands = 1 : i64, tpu.core_type = #tpu.core_type<tc>, window_params = [{transform_indices = @transform_0, window_bounds = array<i64: 2, 256>}, {transform_indices = @transform_1, window_bounds = array<i64: 256, 64>}, {pipeline_mode = #tpu.pipeline_mode<synchronous>, transform_indices = @transform_2, window_bounds = array<i64: 64, 1>}, {pipeline_mode = #tpu.pipeline_mode<synchronous>, transform_indices = @transform_3, window_bounds = array<i64: 1, 1>}, {pipeline_mode = #tpu.pipeline_mode<synchronous>, transform_indices = @transform_4, window_bounds = array<i64: 2, 1>}]} {
    %c0_i32 = arith.constant 0 : i32
    %0 = arith.cmpi eq, %arg0, %c0_i32 : i32
    %1 = arith.extui %0 : i1 to i32
    %c0_i32_0 = arith.constant 0 : i32
    %2 = arith.cmpi ne, %1, %c0_i32_0 : i32
    scf.if %2 {
      %cst_10 = arith.constant 0.000000e+00 : f32
      %13 = vector.broadcast %cst_10 : f32 to vector<2x64xf32>
      %c0_11 = arith.constant 0 : index
      %c0_12 = arith.constant 0 : index
      %14 = vector.load %arg6[%c0_11, %c0_12] : memref<2x64xf32, #tpu.memory_space<vmem>>, vector<2x64xf32>
      tpu.vector_store %arg6[%c0_11, %c0_12], %13 {strides = array<i32>} : memref<2x64xf32, #tpu.memory_space<vmem>>, vector<2x64xf32>,
    } else {
    }
    %c0 = arith.constant 0 : index
    %c0_1 = arith.constant 0 : index
    %3 = vector.load %arg6[%c0, %c0_1] : memref<2x64xf32, #tpu.memory_space<vmem>>, vector<2x64xf32>
    %c0_2 = arith.constant 0 : index
    %c0_3 = arith.constant 0 : index
    %4 = vector.load %arg1[%c0_2, %c0_3] : memref<2x256xf32, #tpu.memory_space<vmem>>, vector<2x256xf32>
    %5 = arith.truncf %4 : vector<2x256xf32> to vector<2x256xbf16>
    %c0_4 = arith.constant 0 : index
    %c0_5 = arith.constant 0 : index
    %6 = vector.load %arg2[%c0_4, %c0_5] : memref<256x64xbf16, #tpu.memory_space<vmem>>, vector<256x64xbf16>
    %cst = arith.constant dense<0.000000e+00> : vector<2x64xf32>
    %7 = tpu.matmul %5, %6, %cst {dimension_numbers = #tpu.dot_dimension_numbers<[1], [0], [0], [1], [0, 0, 1, 1], [], []>} : vector<2x256xbf16>, vector<256x64xbf16>, vector<2x64xf32> -> vector<2x64xf32>
    %8 = arith.addf %3, %7 : vector<2x64xf32>
    %c0_6 = arith.constant 0 : index
    %c0_7 = arith.constant 0 : index
    %9 = vector.load %arg6[%c0_6, %c0_7] : memref<2x64xf32, #tpu.memory_space<vmem>>, vector<2x64xf32>
    tpu.vector_store %arg6[%c0_6, %c0_7], %8 {strides = array<i32>} : memref<2x64xf32, #tpu.memory_space<vmem>>, vector<2x64xf32>,
    %c0_i32_8 = arith.constant 0 : i32
    %10 = arith.cmpi eq, %arg0, %c0_i32_8 : i32
    %11 = arith.extui %10 : i1 to i32
    %c0_i32_9 = arith.constant 0 : i32
    %12 = arith.cmpi ne, %11, %c0_i32_9 : i32
    scf.if %12 {
      %c0_10 = arith.constant 0 : index
      %c0_11 = arith.constant 0 : index
      %13 = vector.load %arg6[%c0_10, %c0_11] : memref<2x64xf32, #tpu.memory_space<vmem>>, vector<2x64xf32>
      %cst_12 = arith.constant 0.000000e+00 : f32
      %14 = vector.broadcast %cst_12 : f32 to vector<2x64xf32>
      %15 = arith.maximumf %13, %14 : vector<2x64xf32>
      %16 = arith.truncf %15 : vector<2x64xf32> to vector<2x64xbf16>
      %c0_13 = arith.constant 0 : index
      %c0_14 = arith.constant 0 : index
      %17 = vector.load %arg3[%c0_13, %c0_14] : memref<64x1xbf16, #tpu.memory_space<vmem>>, vector<64x1xbf16>
      %cst_15 = arith.constant dense<0.000000e+00> : vector<2x1xf32>
      %18 = tpu.matmul %16, %17, %cst_15 {dimension_numbers = #tpu.dot_dimension_numbers<[1], [0], [0], [1], [0, 0, 1, 1], [], []>} : vector<2x64xbf16>, vector<64x1xbf16>, vector<2x1xf32> -> vector<2x1xf32>
      %c0_16 = arith.constant 0 : index
      %c0_17 = arith.constant 0 : index
      %19 = vector.load %arg4[%c0_16, %c0_17] : memref<1x1xf32, #tpu.memory_space<vmem>>, vector<1x1xf32>
      %20 = vector.broadcast %19 : vector<1x1xf32> to vector<2x1xf32>
      %21 = arith.addf %18, %20 : vector<2x1xf32>
      %c0_18 = arith.constant 0 : index
      %c0_19 = arith.constant 0 : index
      %22 = vector.load %arg5[%c0_18, %c0_19] : memref<2x1xf32, #tpu.memory_space<vmem>>, vector<2x1xf32>
      tpu.vector_store %arg5[%c0_18, %c0_19], %21 {strides = array<i32>} : memref<2x1xf32, #tpu.memory_space<vmem>>, vector<2x1xf32>,
    } else {
    }
    return
  }
  func.func @transform_0(%arg0: i32) -> (i32, i32) {
    %c0_i32 = arith.constant 0 : i32
    %c0_i32_0 = arith.constant 0 : i32
    return %c0_i32, %arg0 : i32, i32
  }
  func.func @transform_1(%arg0: i32) -> (i32, i32) {
    %c0_i32 = arith.constant 0 : i32
    %c0_i32_0 = arith.constant 0 : i32
    return %arg0, %c0_i32 : i32, i32
  }
  func.func @transform_2(%arg0: i32) -> (i32, i32) {
    %c0_i32 = arith.constant 0 : i32
    %c0_i32_0 = arith.constant 0 : i32
    %c0_i32_1 = arith.constant 0 : i32
    return %c0_i32, %c0_i32_0 : i32, i32
  }
  func.func @transform_3(%arg0: i32) -> (i32, i32) {
    %c0_i32 = arith.constant 0 : i32
    %c0_i32_0 = arith.constant 0 : i32
    %c0_i32_1 = arith.constant 0 : i32
    return %c0_i32, %c0_i32_0 : i32, i32
  }
  func.func @transform_4(%arg0: i32) -> (i32, i32) {
    %c0_i32 = arith.constant 0 : i32
    %c0_i32_0 = arith.constant 0 : i32
    %c0_i32_1 = arith.constant 0 : i32
    return %c0_i32, %c0_i32_0 : i32, i32
  }
}

</mosaic_0001>

<llo_original>
// kernel: docking_score_predictor.5
$region0: #{docking_score_predictor.5}
  #allocation0 [shape = 'u32[]', space=smem, size = 0x4, offset = 0x4, fixed_abs, tag = 'smem constant byte address 0x4 - core index']
  #allocation1 [shape = 'u32[72,128]{1,0:T(1,128)}', space=vmem, size = 0x9000, scoped, tag = 'internal scratch']
  #allocation2 [shape = 'f32[2,64]{1,0:T(2,128)}', space=vmem, size = 0x400, scoped, tag = 'scratch operand']
  #allocation3 [shape = 'f32[1,1]{1,0:T(1,128)S(1)}', space=vmem, size = 0x200, scoped, tag = 'scoped memory for docking_score_predictor.5']
  %s0 = inlined_call_operand.vmem [shape: f32[2,256], index: 0, kind: input, shape index: {}]
  %s1 = inlined_call_operand.vmem [shape: bf16[256,64], index: 1, kind: input, shape index: {}]
  %s2 = inlined_call_operand.vmem [shape: bf16[64,1], index: 2, kind: input, shape index: {}]
  %s3 = inlined_call_operand.<no memory space> [shape: f32[1,1], index: 3, kind: input, shape index: {}]
  %s4 = inlined_call_operand.vmem [shape: f32[2,1], index: 4, kind: output, shape index: {}]
  %s5 = sld [smem:[#allocation0]]
  $region34: #{docking_score_predictor.5} parent=0
    _
  %s7 = ssub.s32 1, %s5
  %s8 = scalar_select 0, %s7, %s5
  %v9 = vstv %s3
  %10 = vst [vmem:[#allocation3] sm:$0x1] %v9
  // Predicated region
  $region2: #{docking_score_predictor.5} parent=0 // pred_check
    _
  $region3: #{docking_score_predictor.5} parent=0 // pred_check_branch
    %12 = sbr.rel (0) target = $region5
  $region4: #{docking_score_predictor.5} parent=0 // pred_region
    _
  $region5: #{docking_score_predictor.5} parent=0 // pred_fallthru
    _
  // Predicated region
  $region6: #{docking_score_predictor.5} parent=0 // pred_check
    _
  $region7: #{docking_score_predictor.5} parent=0 // pred_check_branch
    %14 = sbr.rel (0) target = $region9
  $region8: #{docking_score_predictor.5} parent=0 // pred_region
    _
  $region9: #{docking_score_predictor.5} parent=0 // pred_fallthru
    _
  // Predicated region
  $region10: #{docking_score_predictor.5} parent=0 // pred_check
    _
  $region11: #{docking_score_predictor.5} parent=0 // pred_check_branch
    %16 = sbr.rel (0) target = $region13
  $region12: #{docking_score_predictor.5} parent=0 // pred_region
    _
  $region13: #{docking_score_predictor.5} parent=0 // pred_fallthru
    _
  // Predicated region
  $region14: #{docking_score_predictor.5} parent=0 // pred_check
    _
  $region15: #{docking_score_predictor.5} parent=0 // pred_check_branch
    %18 = sbr.rel (0) target = $region17
  $region16: #{docking_score_predictor.5} parent=0 // pred_region
    _
  $region17: #{docking_score_predictor.5} parent=0 // pred_fallthru
    _
  %p20 = scmp.eq.s32.totalorder 0, 0
  // Predicated region
  $region18: #{docking_score_predictor.5} parent=0 // pred_check
    %p21 = pneg %p20
  $region19: #{docking_score_predictor.5} parent=0 // pred_check_branch
    %23 = sbr.rel (%p21) target = $region21
  $region20: #{docking_score_predictor.5} parent=0 // pred_region
    %vm24 = vcmask 517120
    %25 = vst.msk [vmem:[#allocation2] sm:$0x3] %vm24, 0.0
  $region21: #{docking_score_predictor.5} parent=0 // pred_fallthru
    _
  %v26 = vld [vmem:[#allocation2] sm:$0x3]
  %v27 = vld [vmem:[%s0] sm:$0xf]
  %29 = vst [vmem:[#allocation1] ss:$4 sm:$0xff] %v27
  %v30 = vld.sshfl [vmem:[#allocation1] sm:$0xff pattern:$0x73625140]
  %v31 = vld.sshfl [vmem:[#allocation1 + $0x8] sm:$0xff pattern:$0x73625140]
  %v34 = vpack.c.bf16 %v30, %v30
  %v35 = vpack.c.bf16 %v31, %v31
  %v36 = vld [vmem:[%s1] sm:$0xf]
  %v37 = vld [vmem:[%s1 + $0x4] sm:$0xf]
  %v38 = vld [vmem:[%s1 + $0x8] sm:$0xf]
  %v39 = vld [vmem:[%s1 + $0xc] sm:$0xf]
  %v40 = vld [vmem:[%s1 + $0x10] sm:$0xf]
  %v41 = vld [vmem:[%s1 + $0x14] sm:$0xf]
  %v42 = vld [vmem:[%s1 + $0x18] sm:$0xf]
  %v43 = vld [vmem:[%s1 + $0x1c] sm:$0xf]
  %v44 = vld [vmem:[%s1 + $0x20] sm:$0xf]
  %v45 = vld [vmem:[%s1 + $0x24] sm:$0xf]
  %v46 = vld [vmem:[%s1 + $0x28] sm:$0xf]
  %v47 = vld [vmem:[%s1 + $0x2c] sm:$0xf]
  %v48 = vld [vmem:[%s1 + $0x30] sm:$0xf]
  %v49 = vld [vmem:[%s1 + $0x34] sm:$0xf]
  %v50 = vld [vmem:[%s1 + $0x38] sm:$0xf]
  %v51 = vld [vmem:[%s1 + $0x3c] sm:$0xf]
  %v52 = vld [vmem:[%s1 + $0x40] sm:$0xf]
  %v53 = vld [vmem:[%s1 + $0x44] sm:$0xf]
  %v54 = vld [vmem:[%s1 + $0x48] sm:$0xf]
  %v55 = vld [vmem:[%s1 + $0x4c] sm:$0xf]
  %v56 = vld [vmem:[%s1 + $0x50] sm:$0xf]
  %v57 = vld [vmem:[%s1 + $0x54] sm:$0xf]
  %v58 = vld [vmem:[%s1 + $0x58] sm:$0xf]
  %v59 = vld [vmem:[%s1 + $0x5c] sm:$0xf]
  %v60 = vld [vmem:[%s1 + $0x60] sm:$0xf]
  %v61 = vld [vmem:[%s1 + $0x64] sm:$0xf]
  %v62 = vld [vmem:[%s1 + $0x68] sm:$0xf]
  %v63 = vld [vmem:[%s1 + $0x6c] sm:$0xf]
  %v64 = vld [vmem:[%s1 + $0x70] sm:$0xf]
  %v65 = vld [vmem:[%s1 + $0x74] sm:$0xf]
  %v66 = vld [vmem:[%s1 + $0x78] sm:$0xf]
  %v67 = vld [vmem:[%s1 + $0x7c] sm:$0xf]
  %v100 = vunpack.c.l.b16 %v36
  %v101 = vunpack.c.l.b16 %v37
  %v102 = vunpack.c.l.b16 %v38
  %v103 = vunpack.c.l.b16 %v39
  %v104 = vunpack.c.l.b16 %v40
  %v105 = vunpack.c.l.b16 %v41
  %v106 = vunpack.c.l.b16 %v42
  %v107 = vunpack.c.l.b16 %v43
  %v108 = vunpack.c.l.b16 %v44
  %v109 = vunpack.c.l.b16 %v45
  %v110 = vunpack.c.l.b16 %v46
  %v111 = vunpack.c.l.b16 %v47
  %v112 = vunpack.c.l.b16 %v48
  %v113 = vunpack.c.l.b16 %v49
  %v114 = vunpack.c.l.b16 %v50
  %v115 = vunpack.c.l.b16 %v51
  %v116 = vunpack.c.l.b16 %v52
  %v117 = vunpack.c.l.b16 %v53
  %v118 = vunpack.c.l.b16 %v54
  %v119 = vunpack.c.l.b16 %v55
  %v120 = vunpack.c.l.b16 %v56
  %v121 = vunpack.c.l.b16 %v57
  %v122 = vunpack.c.l.b16 %v58
  %v123 = vunpack.c.l.b16 %v59
  %v124 = vunpack.c.l.b16 %v60
  %v125 = vunpack.c.l.b16 %v61
  %v126 = vunpack.c.l.b16 %v62
  %v127 = vunpack.c.l.b16 %v63
  %v128 = vunpack.c.l.b16 %v64
  %v129 = vunpack.c.l.b16 %v65
  %v130 = vunpack.c.l.b16 %v66
  %v131 = vunpack.c.l.b16 %v67
  %v132 = vpack.c.b16 %v101, %v100
  %v133 = vpack.c.b16 %v103, %v102
  %v134 = vpack.c.b16 %v105, %v104
  %v135 = vpack.c.b16 %v107, %v106
  %v136 = vpack.c.b16 %v109, %v108
  %v137 = vpack.c.b16 %v111, %v110
  %v138 = vpack.c.b16 %v113, %v112
  %v139 = vpack.c.b16 %v115, %v114
  %v140 = vpack.c.b16 %v117, %v116
  %v141 = vpack.c.b16 %v119, %v118
  %v142 = vpack.c.b16 %v121, %v120
  %v143 = vpack.c.b16 %v123, %v122
  %v144 = vpack.c.b16 %v125, %v124
  %v145 = vpack.c.b16 %v127, %v126
  %v146 = vpack.c.b16 %v129, %v128
  %v147 = vpack.c.b16 %v131, %v130
  %164 = vmatpush.bf16.msra.mxu0 %v139
  %165 = vmatpush.bf16.msra.mxu0 %v138
  %166 = vmatpush.bf16.msra.mxu0 %v137
  %167 = vmatpush.bf16.msra.mxu0 %v136
  %168 = vmatpush.bf16.msra.mxu0 %v135
  %169 = vmatpush.bf16.msra.mxu0 %v134
  %170 = vmatpush.bf16.msra.mxu0 %v133
  %171 = vmatpush.bf16.msra.mxu0 %v132
  %172 = vmatmul.bf16.gmra.mxu0 %v34
  %v173 = vpop.f32.mrf.mxu0
  %v174 = vadd.f32 0.0, %v173
  %v175 = vpop.f32.mrf.mxu0
  %176 = vdwg.mxu0
  %177 = vmatpush.bf16.msra.mxu0 %v147
  %178 = vmatpush.bf16.msra.mxu0 %v146
  %179 = vmatpush.bf16.msra.mxu0 %v145
  %180 = vmatpush.bf16.msra.mxu0 %v144
  %181 = vmatpush.bf16.msra.mxu0 %v143
  %182 = vmatpush.bf16.msra.mxu0 %v142
  %183 = vmatpush.bf16.msra.mxu0 %v141
  %184 = vmatpush.bf16.msra.mxu0 %v140
  %185 = vmatmul.bf16.gmra.mxu0 %v35
  %v186 = vpop.f32.mrf.mxu0
  %v187 = vadd.f32 %v174, %v186
  %v188 = vpop.f32.mrf.mxu0
  %189 = vdwg.mxu0
  %v190 = vadd.f32 %v26, %v187
  %vm191 = vcmask 517120
  %192 = vst.msk [vmem:[#allocation2] sm:$0x3] %vm191, %v190
  // Predicated region
  $region22: #{docking_score_predictor.5} parent=0 // pred_check
    %p193 = pneg %p20
  $region23: #{docking_score_predictor.5} parent=0 // pred_check_branch
    %195 = sbr.rel (%p193) target = $region25
  $region24: #{docking_score_predictor.5} parent=0 // pred_region
    %v196 = vld [vmem:[#allocation2] sm:$0x3]
    %v197 = vmax.f32 %v196, 0.0
    %v198 = vpack.c.bf16 %v197, %v197
    %v199 = vld [vmem:[%s2] sm:$0xf]
    %v200 = vld [vmem:[%s2 + $0x4] sm:$0xf]
    %v201 = vld [vmem:[%s2 + $0x8] sm:$0xf]
    %v202 = vld [vmem:[%s2 + $0xc] sm:$0xf]
    %v203 = vld [vmem:[%s2 + $0x10] sm:$0xf]
    %v204 = vld [vmem:[%s2 + $0x14] sm:$0xf]
    %v205 = vld [vmem:[%s2 + $0x18] sm:$0xf]
    %v206 = vld [vmem:[%s2 + $0x1c] sm:$0xf]
    %v207 = vld [vmem:[#allocation3] sm:$0x1]
    %v209 = vperm.slane %v207, 0
    %v219 = vunpack.c.l.b16 %v199
    %v220 = vunpack.c.l.b16 %v200
    %v221 = vunpack.c.l.b16 %v201
    %v222 = vunpack.c.l.b16 %v202
    %v223 = vunpack.c.l.b16 %v203
    %v224 = vunpack.c.l.b16 %v204
    %v225 = vunpack.c.l.b16 %v205
    %v226 = vunpack.c.l.b16 %v206
    %v227 = vpack.c.b16 %v220, %v219
    %v228 = vpack.c.b16 %v222, %v221
    %v229 = vpack.c.b16 %v224, %v223
    %v230 = vpack.c.b16 %v226, %v225
    %vm235 = vcmask 523264
    %v237 = vsel %vm235, %v198, 0
    %239 = vmatpush.bf16.msra.mxu0 0
    %240 = vmatpush.bf16.msra.mxu0 0
    %241 = vmatpush.bf16.msra.mxu0 0
    %242 = vmatpush.bf16.msra.mxu0 0
    %243 = vmatpush.bf16.msra.mxu0 %v230
    %244 = vmatpush.bf16.msra.mxu0 %v229
    %245 = vmatpush.bf16.msra.mxu0 %v228
    %246 = vmatpush.bf16.msra.mxu0 %v227
    %247 = vmatmul.bf16.gmra.mxu0 %v237
    %v248 = vpop.f32.mrf.mxu0
    %v249 = vadd.f32 %v209, %v248
    %v250 = vpop.f32.mrf.mxu0
    %251 = vdwg.mxu0
    %vm252 = vcmask 1024
    %253 = vst.msk [vmem:[%s4] sm:$0x3] %vm252, %v249
  $region25: #{docking_score_predictor.5} parent=0 // pred_fallthru
    _
  // Predicated region
  $region26: #{docking_score_predictor.5} parent=0 // pred_check
    _
  $region27: #{docking_score_predictor.5} parent=0 // pred_check_branch
    %255 = sbr.rel (0) target = $region29
  $region28: #{docking_score_predictor.5} parent=0 // pred_region
    _
  $region29: #{docking_score_predictor.5} parent=0 // pred_fallthru
    _
  // Predicated region
  $region30: #{docking_score_predictor.5} parent=0 // pred_check
    _
  $region31: #{docking_score_predictor.5} parent=0 // pred_check_branch
    %257 = sbr.rel (0) target = $region33
  $region32: #{docking_score_predictor.5} parent=0 // pred_region
    _
  $region33: #{docking_score_predictor.5} parent=0 // pred_fallthru
    _

// kernel: docking_score_predictor.4
$region0: #{docking_score_predictor.4}
  #allocation0 [shape = 'u32[]', space=smem, size = 0x4, offset = 0x4, fixed_abs, tag = 'smem constant byte address 0x4 - core index']
  #allocation1 [shape = 'u32[72,128]{1,0:T(1,128)}', space=vmem, size = 0x9000, scoped, tag = 'internal scratch']
  %s0 = inlined_call_operand.vmem [shape: f32[2,8,32], index: 0, kind: input, shape index: {}]
  %s1 = inlined_call_operand.vmem [shape: f32[2,8,32], index: 1, kind: input, shape index: {}]
  %s2 = inlined_call_operand.vmem [shape: bf16[32,96], index: 2, kind: input, shape index: {}]
  %s3 = inlined_call_operand.vmem [shape: f32[1,96], index: 3, kind: input, shape index: {}]
  %s4 = inlined_call_operand.vmem [shape: bf16[32,32], index: 4, kind: input, shape index: {}]
  %s5 = inlined_call_operand.vmem [shape: f32[1,32], index: 5, kind: input, shape index: {}]
  %s6 = inlined_call_operand.vmem [shape: f32[1,32], index: 6, kind: input, shape index: {}]
  %s7 = inlined_call_operand.vmem [shape: f32[1,32], index: 7, kind: input, shape index: {}]
  %s8 = inlined_call_operand.vmem [shape: bf16[32,32], index: 8, kind: input, shape index: {}]
  %s9 = inlined_call_operand.vmem [shape: f32[1,32], index: 9, kind: input, shape index: {}]
  %s10 = inlined_call_operand.vmem [shape: bf16[32,64], index: 10, kind: input, shape index: {}]
  %s11 = inlined_call_operand.vmem [shape: f32[1,64], index: 11, kind: input, shape index: {}]
  %s12 = inlined_call_operand.vmem [shape: bf16[32,32], index: 12, kind: input, shape index: {}]
  %s13 = inlined_call_operand.vmem [shape: f32[1,32], index: 13, kind: input, shape index: {}]
  %s14 = inlined_call_operand.vmem [shape: f32[1,32], index: 14, kind: input, shape index: {}]
  %s15 = inlined_call_operand.vmem [shape: f32[1,32], index: 15, kind: input, shape index: {}]
  %s16 = inlined_call_operand.vmem [shape: bf16[32,64], index: 16, kind: input, shape index: {}]
  %s17 = inlined_call_operand.vmem [shape: f32[1,64], index: 17, kind: input, shape index: {}]
  %s18 = inlined_call_operand.vmem [shape: bf16[64,32], index: 18, kind: input, shape index: {}]
  %s19 = inlined_call_operand.vmem [shape: f32[1,32], index: 19, kind: input, shape index: {}]
  %s20 = inlined_call_operand.vmem [shape: f32[1,32], index: 20, kind: input, shape index: {}]
  %s21 = inlined_call_operand.vmem [shape: f32[1,32], index: 21, kind: input, shape index: {}]
  %s22 = inlined_call_operand.vmem [shape: f32[2,8,32], index: 22, kind: output, shape index: {}]
  %s23 = sld [smem:[#allocation0]]
  $region121: #{docking_score_predictor.4} parent=0
    _
  %s25 = ssub.s32 1, %s23
  %s26 = scalar_select 0, %s25, %s23
  loop: start=0, step=1, limit=4
  $region2: #{docking_score_predictor.4} parent=0 // loop_pre_header
    _
  $region3: #{docking_score_predictor.4} parent=0 // loop_header
    %s28 = sphi 0, %s32
    %p29 = scmp.ge.s32.totalorder %s28, 4
    %s38 = sphi 0, %s40
    %s41 = sphi 0, %s38
    %s42 = sphi 0, %s41
    %s58 = sphi 0, %s42
    %s64 = sphi 0, %s66
    %s67 = sphi 0, %s64
    %s68 = sphi 0, %s67
    %s84 = sphi 0, %s68
    %s88 = sphi 0, %s88
    %s90 = sphi 0, %s88
    %s91 = sphi 0, %s90
    %s105 = sphi 0, %s91
    %s109 = sphi 0, %s109
    %s111 = sphi 0, %s109
    %s112 = sphi 0, %s111
    %s126 = sphi 0, %s112
    %s130 = sphi 0, %s130
    %s132 = sphi 0, %s130
    %s133 = sphi 0, %s132
    %s147 = sphi 0, %s133
    %s151 = sphi 0, %s151
    %s153 = sphi 0, %s151
    %s154 = sphi 0, %s153
    %s168 = sphi 0, %s154
    %s172 = sphi 0, %s172
    %s174 = sphi 0, %s172
    %s175 = sphi 0, %s174
    %s189 = sphi 0, %s175
    %s193 = sphi 0, %s193
    %s195 = sphi 0, %s193
    %s196 = sphi 0, %s195
    %s210 = sphi 0, %s196
    %s214 = sphi 0, %s214
    %s216 = sphi 0, %s214
    %s217 = sphi 0, %s216
    %s231 = sphi 0, %s217
    %s235 = sphi 0, %s235
    %s237 = sphi 0, %s235
    %s238 = sphi 0, %s237
    %s252 = sphi 0, %s238
    %s256 = sphi 0, %s256
    %s258 = sphi 0, %s256
    %s259 = sphi 0, %s258
    %s273 = sphi 0, %s259
    %s277 = sphi 0, %s277
    %s279 = sphi 0, %s277
    %s280 = sphi 0, %s279
    %s294 = sphi 0, %s280
    %s298 = sphi 0, %s298
    %s300 = sphi 0, %s298
    %s301 = sphi 0, %s300
    %s315 = sphi 0, %s301
    %s319 = sphi 0, %s319
    %s321 = sphi 0, %s319
    %s322 = sphi 0, %s321
    %s336 = sphi 0, %s322
    %s340 = sphi 0, %s340
    %s342 = sphi 0, %s340
    %s343 = sphi 0, %s342
    %s357 = sphi 0, %s343
    %s361 = sphi 0, %s361
    %s363 = sphi 0, %s361
    %s364 = sphi 0, %s363
    %s378 = sphi 0, %s364
    %s382 = sphi 0, %s382
    %s384 = sphi 0, %s382
    %s385 = sphi 0, %s384
    %s399 = sphi 0, %s385
    %s403 = sphi 0, %s403
    %s405 = sphi 0, %s403
    %s406 = sphi 0, %s405
    %s420 = sphi 0, %s406
    %s424 = sphi 0, %s424
    %s426 = sphi 0, %s424
    %s427 = sphi 0, %s426
    %s441 = sphi 0, %s427
    %s445 = sphi 0, %s445
    %s447 = sphi 0, %s445
    %s448 = sphi 0, %s447
    %s462 = sphi 0, %s448
    %s466 = sphi 0, %s466
    %s468 = sphi 0, %s466
    %s469 = sphi 0, %s468
    %s483 = sphi 0, %s469
    %s487 = sphi 0, %s487
    %s489 = sphi 0, %s487
    %s490 = sphi 0, %s489
    %s504 = sphi 0, %s490
    %s510 = sphi 0, %s512
    %s513 = sphi 0, %s510
    %s514 = sphi 0, %s513
    %s530 = sphi 0, %s514
  $region4: #{docking_score_predictor.4} parent=0 // loop_header_branch
    %31 = sbr.rel (%p29) target = $region8
  $region5: #{docking_score_predictor.4} parent=0 // loop_body
    %s33 = ssub.s32 %s28, 1
    %s34 = ssub.s32 %s28, 2
    %s35 = sadd.s32 %s28, 1
    %s36 = ssub.s32 %s28, %s35
    %p37 = scmp.eq.s32.totalorder %s36, 0
    %s39 = sadd.s32 %s38, 1
    %s40 = scalar_select %p37, %s38, %s39
    %p43 = pneg %p37
    %p44 = scmp.eq.s32.totalorder %s28, 1
    %p45 = por %p43, %p44
    %p46 = scmp.ne.s32.totalorder %s38, %s41
    %p47 = scmp.eq.s32.totalorder %s28, 0
    %p48 = por %p46, %p47
    %p49 = scmp.ne.s32.totalorder %s38, %s41
    %p50 = scmp.eq.s32.totalorder %s33, 1
    %p51 = por %p49, %p50
    %p52 = scmp.ne.s32.totalorder %s41, %s42
    %p53 = scmp.eq.s32.totalorder %s33, 0
    %p54 = por %p52, %p53
    %p55 = scmp.ne.s32.totalorder %s41, %s42
    %p56 = scmp.eq.s32.totalorder %s34, 1
    %p57 = por %p55, %p56
    %p59 = scmp.ne.s32.totalorder %s42, %s58
    %p60 = scmp.eq.s32.totalorder %s34, 0
    %p61 = por %p59, %p60
    %s62 = ssub.s32 %s28, %s35
    %p63 = scmp.eq.s32.totalorder %s62, 0
    %s65 = sadd.s32 %s64, 1
    %s66 = scalar_select %p63, %s64, %s65
    %p69 = pneg %p63
    %p70 = scmp.eq.s32.totalorder %s28, 1
    %p71 = por %p69, %p70
    %p72 = scmp.ne.s32.totalorder %s64, %s67
    %p73 = scmp.eq.s32.totalorder %s28, 0
    %p74 = por %p72, %p73
    %p75 = scmp.ne.s32.totalorder %s64, %s67
    %p76 = scmp.eq.s32.totalorder %s33, 1
    %p77 = por %p75, %p76
    %p78 = scmp.ne.s32.totalorder %s67, %s68
    %p79 = scmp.eq.s32.totalorder %s33, 0
    %p80 = por %p78, %p79
    %p81 = scmp.ne.s32.totalorder %s67, %s68
    %p82 = scmp.eq.s32.totalorder %s34, 1
    %p83 = por %p81, %p82
    %p85 = scmp.ne.s32.totalorder %s68, %s84
    %p86 = scmp.eq.s32.totalorder %s34, 0
    %p87 = por %p85, %p86
    %s89 = sadd.s32 %s88, 1
    %p92 = scmp.eq.s32.totalorder %s28, 1
    %p93 = scmp.ne.s32.totalorder %s88, %s90
    %p94 = scmp.eq.s32.totalorder %s28, 0
    %p95 = por %p93, %p94
    %p96 = scmp.ne.s32.totalorder %s88, %s90
    %p97 = scmp.eq.s32.totalorder %s33, 1
    %p98 = por %p96, %p97
    %p99 = scmp.ne.s32.totalorder %s90, %s91
    %p100 = scmp.eq.s32.totalorder %s33, 0
    %p101 = por %p99, %p100
    %p102 = scmp.ne.s32.totalorder %s90, %s91
    %p103 = scmp.eq.s32.totalorder %s34, 1
    %p104 = por %p102, %p103
    %p106 = scmp.ne.s32.totalorder %s91, %s105
    %p107 = scmp.eq.s32.totalorder %s34, 0
    %p108 = por %p106, %p107
    %s110 = sadd.s32 %s109, 1
    %p113 = scmp.eq.s32.totalorder %s28, 1
    %p114 = scmp.ne.s32.totalorder %s109, %s111
    %p115 = scmp.eq.s32.totalorder %s28, 0
    %p116 = por %p114, %p115
    %p117 = scmp.ne.s32.totalorder %s109, %s111
    %p118 = scmp.eq.s32.totalorder %s33, 1
    %p119 = por %p117, %p118
    %p120 = scmp.ne.s32.totalorder %s111, %s112
    %p121 = scmp.eq.s32.totalorder %s33, 0
    %p122 = por %p120, %p121
    %p123 = scmp.ne.s32.totalorder %s111, %s112
    %p124 = scmp.eq.s32.totalorder %s34, 1
    %p125 = por %p123, %p124
    %p127 = scmp.ne.s32.totalorder %s112, %s126
    %p128 = scmp.eq.s32.totalorder %s34, 0
    %p129 = por %p127, %p128
    %s131 = sadd.s32 %s130, 1
    %p134 = scmp.eq.s32.totalorder %s28, 1
    %p135 = scmp.ne.s32.totalorder %s130, %s132
    %p136 = scmp.eq.s32.totalorder %s28, 0
    %p137 = por %p135, %p136
    %p138 = scmp.ne.s32.totalorder %s130, %s132
    %p139 = scmp.eq.s32.totalorder %s33, 1
    %p140 = por %p138, %p139
    %p141 = scmp.ne.s32.totalorder %s132, %s133
    %p142 = scmp.eq.s32.totalorder %s33, 0
    %p143 = por %p141, %p142
    %p144 = scmp.ne.s32.totalorder %s132, %s133
    %p145 = scmp.eq.s32.totalorder %s34, 1
    %p146 = por %p144, %p145
    %p148 = scmp.ne.s32.totalorder %s133, %s147
    %p149 = scmp.eq.s32.totalorder %s34, 0
    %p150 = por %p148, %p149
    %s152 = sadd.s32 %s151, 1
    %p155 = scmp.eq.s32.totalorder %s28, 1
    %p156 = scmp.ne.s32.totalorder %s151, %s153
    %p157 = scmp.eq.s32.totalorder %s28, 0
    %p158 = por %p156, %p157
    %p159 = scmp.ne.s32.totalorder %s151, %s153
    %p160 = scmp.eq.s32.totalorder %s33, 1
    %p161 = por %p159, %p160
    %p162 = scmp.ne.s32.totalorder %s153, %s154
    %p163 = scmp.eq.s32.totalorder %s33, 0
    %p164 = por %p162, %p163
    %p165 = scmp.ne.s32.totalorder %s153, %s154
    %p166 = scmp.eq.s32.totalorder %s34, 1
    %p167 = por %p165, %p166
    %p169 = scmp.ne.s32.totalorder %s154, %s168
    %p170 = scmp.eq.s32.totalorder %s34, 0
    %p171 = por %p169, %p170
    %s173 = sadd.s32 %s172, 1
    %p176 = scmp.eq.s32.totalorder %s28, 1
    %p177 = scmp.ne.s32.totalorder %s172, %s174
    %p178 = scmp.eq.s32.totalorder %s28, 0
    %p179 = por %p177, %p178
    %p180 = scmp.ne.s32.totalorder %s172, %s174
    %p181 = scmp.eq.s32.totalorder %s33, 1
    %p182 = por %p180, %p181
    %p183 = scmp.ne.s32.totalorder %s174, %s175
    %p184 = scmp.eq.s32.totalorder %s33, 0
    %p185 = por %p183, %p184
    %p186 = scmp.ne.s32.totalorder %s174, %s175
    %p187 = scmp.eq.s32.totalorder %s34, 1
    %p188 = por %p186, %p187
    %p190 = scmp.ne.s32.totalorder %s175, %s189
    %p191 = scmp.eq.s32.totalorder %s34, 0
    %p192 = por %p190, %p191
    %s194 = sadd.s32 %s193, 1
    %p197 = scmp.eq.s32.totalorder %s28, 1
    %p198 = scmp.ne.s32.totalorder %s193, %s195
    %p199 = scmp.eq.s32.totalorder %s28, 0
    %p200 = por %p198, %p199
    %p201 = scmp.ne.s32.totalorder %s193, %s195
    %p202 = scmp.eq.s32.totalorder %s33, 1
    %p203 = por %p201, %p202
    %p204 = scmp.ne.s32.totalorder %s195, %s196
    %p205 = scmp.eq.s32.totalorder %s33, 0
    %p206 = por %p204, %p205
    %p207 = scmp.ne.s32.totalorder %s195, %s196
    %p208 = scmp.eq.s32.totalorder %s34, 1
    %p209 = por %p207, %p208
    %p211 = scmp.ne.s32.totalorder %s196, %s210
    %p212 = scmp.eq.s32.totalorder %s34, 0
    %p213 = por %p211, %p212
    %s215 = sadd.s32 %s214, 1
    %p218 = scmp.eq.s32.totalorder %s28, 1
    %p219 = scmp.ne.s32.totalorder %s214, %s216
    %p220 = scmp.eq.s32.totalorder %s28, 0
    %p221 = por %p219, %p220
    %p222 = scmp.ne.s32.totalorder %s214, %s216
    %p223 = scmp.eq.s32.totalorder %s33, 1
    %p224 = por %p222, %p223
    %p225 = scmp.ne.s32.totalorder %s216, %s217
    %p226 = scmp.eq.s32.totalorder %s33, 0
    %p227 = por %p225, %p226
    %p228 = scmp.ne.s32.totalorder %s216, %s217
    %p229 = scmp.eq.s32.totalorder %s34, 1
    %p230 = por %p228, %p229
    %p232 = scmp.ne.s32.totalorder %s217, %s231
    %p233 = scmp.eq.s32.totalorder %s34, 0
    %p234 = por %p232, %p233
    %s236 = sadd.s32 %s235, 1
    %p239 = scmp.eq.s32.totalorder %s28, 1
    %p240 = scmp.ne.s32.totalorder %s235, %s237
    %p241 = scmp.eq.s32.totalorder %s28, 0
    %p242 = por %p240, %p241
    %p243 = scmp.ne.s32.totalorder %s235, %s237
    %p244 = scmp.eq.s32.totalorder %s33, 1
    %p245 = por %p243, %p244
    %p246 = scmp.ne.s32.totalorder %s237, %s238
    %p247 = scmp.eq.s32.totalorder %s33, 0
    %p248 = por %p246, %p247
    %p249 = scmp.ne.s32.totalorder %s237, %s238
    %p250 = scmp.eq.s32.totalorder %s34, 1
    %p251 = por %p249, %p250
    %p253 = scmp.ne.s32.totalorder %s238, %s252
    %p254 = scmp.eq.s32.totalorder %s34, 0
    %p255 = por %p253, %p254
    %s257 = sadd.s32 %s256, 1
    %p260 = scmp.eq.s32.totalorder %s28, 1
    %p261 = scmp.ne.s32.totalorder %s256, %s258
    %p262 = scmp.eq.s32.totalorder %s28, 0
    %p263 = por %p261, %p262
    %p264 = scmp.ne.s32.totalorder %s256, %s258
    %p265 = scmp.eq.s32.totalorder %s33, 1
    %p266 = por %p264, %p265
    %p267 = scmp.ne.s32.totalorder %s258, %s259
    %p268 = scmp.eq.s32.totalorder %s33, 0
    %p269 = por %p267, %p268
    %p270 = scmp.ne.s32.totalorder %s258, %s259
    %p271 = scmp.eq.s32.totalorder %s34, 1
    %p272 = por %p270, %p271
    %p274 = scmp.ne.s32.totalorder %s259, %s273
    %p275 = scmp.eq.s32.totalorder %s34, 0
    %p276 = por %p274, %p275
    %s278 = sadd.s32 %s277, 1
    %p281 = scmp.eq.s32.totalorder %s28, 1
    %p282 = scmp.ne.s32.totalorder %s277, %s279
    %p283 = scmp.eq.s32.totalorder %s28, 0
    %p284 = por %p282, %p283
    %p285 = scmp.ne.s32.totalorder %s277, %s279
    %p286 = scmp.eq.s32.totalorder %s33, 1
    %p287 = por %p285, %p286
    %p288 = scmp.ne.s32.totalorder %s279, %s280
    %p289 = scmp.eq.s32.totalorder %s33, 0
    %p290 = por %p288, %p289
    %p291 = scmp.ne.s32.totalorder %s279, %s280
    %p292 = scmp.eq.s32.totalorder %s34, 1
    %p293 = por %p291, %p292
    %p295 = scmp.ne.s32.totalorder %s280, %s294
    %p296 = scmp.eq.s32.totalorder %s34, 0
    %p297 = por %p295, %p296
    %s299 = sadd.s32 %s298, 1
    %p302 = scmp.eq.s32.totalorder %s28, 1
    %p303 = scmp.ne.s32.totalorder %s298, %s300
    %p304 = scmp.eq.s32.totalorder %s28, 0
    %p305 = por %p303, %p304
    %p306 = scmp.ne.s32.totalorder %s298, %s300
    %p307 = scmp.eq.s32.totalorder %s33, 1
    %p308 = por %p306, %p307
    %p309 = scmp.ne.s32.totalorder %s300, %s301
    %p310 = scmp.eq.s32.totalorder %s33, 0
    %p311 = por %p309, %p310
    %p312 = scmp.ne.s32.totalorder %s300, %s301
    %p313 = scmp.eq.s32.totalorder %s34, 1
    %p314 = por %p312, %p313
    %p316 = scmp.ne.s32.totalorder %s301, %s315
    %p317 = scmp.eq.s32.totalorder %s34, 0
    %p318 = por %p316, %p317
    %s320 = sadd.s32 %s319, 1
    %p323 = scmp.eq.s32.totalorder %s28, 1
    %p324 = scmp.ne.s32.totalorder %s319, %s321
    %p325 = scmp.eq.s32.totalorder %s28, 0
    %p326 = por %p324, %p325
    %p327 = scmp.ne.s32.totalorder %s319, %s321
    %p328 = scmp.eq.s32.totalorder %s33, 1
    %p329 = por %p327, %p328
    %p330 = scmp.ne.s32.totalorder %s321, %s322
    %p331 = scmp.eq.s32.totalorder %s33, 0
    %p332 = por %p330, %p331
    %p333 = scmp.ne.s32.totalorder %s321, %s322
    %p334 = scmp.eq.s32.totalorder %s34, 1
    %p335 = por %p333, %p334
    %p337 = scmp.ne.s32.totalorder %s322, %s336
    %p338 = scmp.eq.s32.totalorder %s34, 0
    %p339 = por %p337, %p338
    %s341 = sadd.s32 %s340, 1
    %p344 = scmp.eq.s32.totalorder %s28, 1
    %p345 = scmp.ne.s32.totalorder %s340, %s342
    %p346 = scmp.eq.s32.totalorder %s28, 0
    %p347 = por %p345, %p346
    %p348 = scmp.ne.s32.totalorder %s340, %s342
    %p349 = scmp.eq.s32.totalorder %s33, 1
    %p350 = por %p348, %p349
    %p351 = scmp.ne.s32.totalorder %s342, %s343
    %p352 = scmp.eq.s32.totalorder %s33, 0
    %p353 = por %p351, %p352
    %p354 = scmp.ne.s32.totalorder %s342, %s343
    %p355 = scmp.eq.s32.totalorder %s34, 1
    %p356 = por %p354, %p355
    %p358 = scmp.ne.s32.totalorder %s343, %s357
    %p359 = scmp.eq.s32.totalorder %s34, 0
    %p360 = por %p358, %p359
    %s362 = sadd.s32 %s361, 1
    %p365 = scmp.eq.s32.totalorder %s28, 1
    %p366 = scmp.ne.s32.totalorder %s361, %s363
    %p367 = scmp.eq.s32.totalorder %s28, 0
    %p368 = por %p366, %p367
    %p369 = scmp.ne.s32.totalorder %s361, %s363
    %p370 = scmp.eq.s32.totalorder %s33, 1
    %p371 = por %p369, %p370
    %p372 = scmp.ne.s32.totalorder %s363, %s364
    %p373 = scmp.eq.s32.totalorder %s33, 0
    %p374 = por %p372, %p373
    %p375 = scmp.ne.s32.totalorder %s363, %s364
    %p376 = scmp.eq.s32.totalorder %s34, 1
    %p377 = por %p375, %p376
    %p379 = scmp.ne.s32.totalorder %s364, %s378
    %p380 = scmp.eq.s32.totalorder %s34, 0
    %p381 = por %p379, %p380
    %s383 = sadd.s32 %s382, 1
    %p386 = scmp.eq.s32.totalorder %s28, 1
    %p387 = scmp.ne.s32.totalorder %s382, %s384
    %p388 = scmp.eq.s32.totalorder %s28, 0
    %p389 = por %p387, %p388
    %p390 = scmp.ne.s32.totalorder %s382, %s384
    %p391 = scmp.eq.s32.totalorder %s33, 1
    %p392 = por %p390, %p391
    %p393 = scmp.ne.s32.totalorder %s384, %s385
    %p394 = scmp.eq.s32.totalorder %s33, 0
    %p395 = por %p393, %p394
    %p396 = scmp.ne.s32.totalorder %s384, %s385
    %p397 = scmp.eq.s32.totalorder %s34, 1
    %p398 = por %p396, %p397
    %p400 = scmp.ne.s32.totalorder %s385, %s399
    %p401 = scmp.eq.s32.totalorder %s34, 0
    %p402 = por %p400, %p401
    %s404 = sadd.s32 %s403, 1
    %p407 = scmp.eq.s32.totalorder %s28, 1
    %p408 = scmp.ne.s32.totalorder %s403, %s405
    %p409 = scmp.eq.s32.totalorder %s28, 0
    %p410 = por %p408, %p409
    %p411 = scmp.ne.s32.totalorder %s403, %s405
    %p412 = scmp.eq.s32.totalorder %s33, 1
    %p413 = por %p411, %p412
    %p414 = scmp.ne.s32.totalorder %s405, %s406
    %p415 = scmp.eq.s32.totalorder %s33, 0
    %p416 = por %p414, %p415
    %p417 = scmp.ne.s32.totalorder %s405, %s406
    %p418 = scmp.eq.s32.totalorder %s34, 1
    %p419 = por %p417, %p418
    %p421 = scmp.ne.s32.totalorder %s406, %s420
    %p422 = scmp.eq.s32.totalorder %s34, 0
    %p423 = por %p421, %p422
    %s425 = sadd.s32 %s424, 1
    %p428 = scmp.eq.s32.totalorder %s28, 1
    %p429 = scmp.ne.s32.totalorder %s424, %s426
    %p430 = scmp.eq.s32.totalorder %s28, 0
    %p431 = por %p429, %p430
    %p432 = scmp.ne.s32.totalorder %s424, %s426
    %p433 = scmp.eq.s32.totalorder %s33, 1
    %p434 = por %p432, %p433
    %p435 = scmp.ne.s32.totalorder %s426, %s427
    %p436 = scmp.eq.s32.totalorder %s33, 0
    %p437 = por %p435, %p436
    %p438 = scmp.ne.s32.totalorder %s426, %s427
    %p439 = scmp.eq.s32.totalorder %s34, 1
    %p440 = por %p438, %p439
    %p442 = scmp.ne.s32.totalorder %s427, %s441
    %p443 = scmp.eq.s32.totalorder %s34, 0
    %p444 = por %p442, %p443
    %s446 = sadd.s32 %s445, 1
    %p449 = scmp.eq.s32.totalorder %s28, 1
    %p450 = scmp.ne.s32.totalorder %s445, %s447
    %p451 = scmp.eq.s32.totalorder %s28, 0
    %p452 = por %p450, %p451
    %p453 = scmp.ne.s32.totalorder %s445, %s447
    %p454 = scmp.eq.s32.totalorder %s33, 1
    %p455 = por %p453, %p454
    %p456 = scmp.ne.s32.totalorder %s447, %s448
    %p457 = scmp.eq.s32.totalorder %s33, 0
    %p458 = por %p456, %p457
    %p459 = scmp.ne.s32.totalorder %s447, %s448
    %p460 = scmp.eq.s32.totalorder %s34, 1
    %p461 = por %p459, %p460
    %p463 = scmp.ne.s32.totalorder %s448, %s462
    %p464 = scmp.eq.s32.totalorder %s34, 0
    %p465 = por %p463, %p464
    %s467 = sadd.s32 %s466, 1
    %p470 = scmp.eq.s32.totalorder %s28, 1
    %p471 = scmp.ne.s32.totalorder %s466, %s468
    %p472 = scmp.eq.s32.totalorder %s28, 0
    %p473 = por %p471, %p472
    %p474 = scmp.ne.s32.totalorder %s466, %s468
    %p475 = scmp.eq.s32.totalorder %s33, 1
    %p476 = por %p474, %p475
    %p477 = scmp.ne.s32.totalorder %s468, %s469
    %p478 = scmp.eq.s32.totalorder %s33, 0
    %p479 = por %p477, %p478
    %p480 = scmp.ne.s32.totalorder %s468, %s469
    %p481 = scmp.eq.s32.totalorder %s34, 1
    %p482 = por %p480, %p481
    %p484 = scmp.ne.s32.totalorder %s469, %s483
    %p485 = scmp.eq.s32.totalorder %s34, 0
    %p486 = por %p484, %p485
    %s488 = sadd.s32 %s487, 1
    %p491 = scmp.eq.s32.totalorder %s28, 1
    %p492 = scmp.ne.s32.totalorder %s487, %s489
    %p493 = scmp.eq.s32.totalorder %s28, 0
    %p494 = por %p492, %p493
    %p495 = scmp.ne.s32.totalorder %s487, %s489
    %p496 = scmp.eq.s32.totalorder %s33, 1
    %p497 = por %p495, %p496
    %p498 = scmp.ne.s32.totalorder %s489, %s490
    %p499 = scmp.eq.s32.totalorder %s33, 0
    %p500 = por %p498, %p499
    %p501 = scmp.ne.s32.totalorder %s489, %s490
    %p502 = scmp.eq.s32.totalorder %s34, 1
    %p503 = por %p501, %p502
    %p505 = scmp.ne.s32.totalorder %s490, %s504
    %p506 = scmp.eq.s32.totalorder %s34, 0
    %p507 = por %p505, %p506
    %s508 = ssub.s32 %s28, %s35
    %p509 = scmp.eq.s32.totalorder %s508, 0
    %s511 = sadd.s32 %s510, 1
    %s512 = scalar_select %p509, %s510, %s511
    %p515 = pneg %p509
    %p516 = scmp.eq.s32.totalorder %s28, 1
    %p517 = por %p515, %p516
    %p518 = scmp.ne.s32.totalorder %s510, %s513
    %p519 = scmp.eq.s32.totalorder %s28, 0
    %p520 = por %p518, %p519
    %p521 = scmp.ne.s32.totalorder %s510, %s513
    %p522 = scmp.eq.s32.totalorder %s33, 1
    %p523 = por %p521, %p522
    %p524 = scmp.ne.s32.totalorder %s513, %s514
    %p525 = scmp.eq.s32.totalorder %s33, 0
    %p526 = por %p524, %p525
    %p527 = scmp.ne.s32.totalorder %s513, %s514
    %p528 = scmp.eq.s32.totalorder %s34, 1
    %p529 = por %p527, %p528
    %p531 = scmp.ne.s32.totalorder %s514, %s530
    %p532 = scmp.eq.s32.totalorder %s34, 0
    %p533 = por %p531, %p532
    %p534 = scmp.le.s32.totalorder 1, %s28
    %p535 = scmp.lt.s32.totalorder %s28, 3
    %p536 = pnand %p534, %p535
    %p537 = pneg %p536
    // Predicated region
    $region9: #{docking_score_predictor.4} parent=5 // pred_check
      _
    $region10: #{docking_score_predictor.4} parent=5 // pred_check_branch
      %539 = sbr.rel (%p536) target = $region12
    $region11: #{docking_score_predictor.4} parent=5 // pred_region
      %s540 = ssub.s32 %s28, 1
      // Predicated region
      $region13: #{docking_score_predictor.4} parent=11 // pred_check
        %p541 = pneg %p101
      $region14: #{docking_score_predictor.4} parent=11 // pred_check_branch
        %543 = sbr.rel (%p541) target = $region16
      $region15: #{docking_score_predictor.4} parent=11 // pred_region
        _
      $region16: #{docking_score_predictor.4} parent=11 // pred_fallthru
        _
      // Predicated region
      $region17: #{docking_score_predictor.4} parent=11 // pred_check
        %p544 = pneg %p122
      $region18: #{docking_score_predictor.4} parent=11 // pred_check_branch
        %546 = sbr.rel (%p544) target = $region20
      $region19: #{docking_score_predictor.4} parent=11 // pred_region
        _
      $region20: #{docking_score_predictor.4} parent=11 // pred_fallthru
        _
      // Predicated region
      $region21: #{docking_score_predictor.4} parent=11 // pred_check
        %p547 = pneg %p143
      $region22: #{docking_score_predictor.4} parent=11 // pred_check_branch
        %549 = sbr.rel (%p547) target = $region24
      $region23: #{docking_score_predictor.4} parent=11 // pred_region
        _
      $region24: #{docking_score_predictor.4} parent=11 // pred_fallthru
        _
      // Predicated region
      $region25: #{docking_score_predictor.4} parent=11 // pred_check
        %p550 = pneg %p164
      $region26: #{docking_score_predictor.4} parent=11 // pred_check_branch
        %552 = sbr.rel (%p550) target = $region28
      $region27: #{docking_score_predictor.4} parent=11 // pred_region
        _
      $region28: #{docking_score_predictor.4} parent=11 // pred_fallthru
        _
      // Predicated region
      $region29: #{docking_score_predictor.4} parent=11 // pred_check
        %p553 = pneg %p185
      $region30: #{docking_score_predictor.4} parent=11 // pred_check_branch
        %555 = sbr.rel (%p553) target = $region32
      $region31: #{docking_score_predictor.4} parent=11 // pred_region
        _
      $region32: #{docking_score_predictor.4} parent=11 // pred_fallthru
        _
      // Predicated region
      $region33: #{docking_score_predictor.4} parent=11 // pred_check
        %p556 = pneg %p206
      $region34: #{docking_score_predictor.4} parent=11 // pred_check_branch
        %558 = sbr.rel (%p556) target = $region36
      $region35: #{docking_score_predictor.4} parent=11 // pred_region
        _
      $region36: #{docking_score_predictor.4} parent=11 // pred_fallthru
        _
      // Predicated region
      $region37: #{docking_score_predictor.4} parent=11 // pred_check
        %p559 = pneg %p227
      $region38: #{docking_score_predictor.4} parent=11 // pred_check_branch
        %561 = sbr.rel (%p559) target = $region40
      $region39: #{docking_score_predictor.4} parent=11 // pred_region
        _
      $region40: #{docking_score_predictor.4} parent=11 // pred_fallthru
        _
      // Predicated region
      $region41: #{docking_score_predictor.4} parent=11 // pred_check
        %p562 = pneg %p248
      $region42: #{docking_score_predictor.4} parent=11 // pred_check_branch
        %564 = sbr.rel (%p562) target = $region44
      $region43: #{docking_score_predictor.4} parent=11 // pred_region
        _
      $region44: #{docking_score_predictor.4} parent=11 // pred_fallthru
        _
      // Predicated region
      $region45: #{docking_score_predictor.4} parent=11 // pred_check
        %p565 = pneg %p269
      $region46: #{docking_score_predictor.4} parent=11 // pred_check_branch
        %567 = sbr.rel (%p565) target = $region48
      $region47: #{docking_score_predictor.4} parent=11 // pred_region
        _
      $region48: #{docking_score_predictor.4} parent=11 // pred_fallthru
        _
      // Predicated region
      $region49: #{docking_score_predictor.4} parent=11 // pred_check
        %p568 = pneg %p290
      $region50: #{docking_score_predictor.4} parent=11 // pred_check_branch
        %570 = sbr.rel (%p568) target = $region52
      $region51: #{docking_score_predictor.4} parent=11 // pred_region
        _
      $region52: #{docking_score_predictor.4} parent=11 // pred_fallthru
        _
      // Predicated region
      $region53: #{docking_score_predictor.4} parent=11 // pred_check
        %p571 = pneg %p311
      $region54: #{docking_score_predictor.4} parent=11 // pred_check_branch
        %573 = sbr.rel (%p571) target = $region56
      $region55: #{docking_score_predictor.4} parent=11 // pred_region
        _
      $region56: #{docking_score_predictor.4} parent=11 // pred_fallthru
        _
      // Predicated region
      $region57: #{docking_score_predictor.4} parent=11 // pred_check
        %p574 = pneg %p332
      $region58: #{docking_score_predictor.4} parent=11 // pred_check_branch
        %576 = sbr.rel (%p574) target = $region60
      $region59: #{docking_score_predictor.4} parent=11 // pred_region
        _
      $region60: #{docking_score_predictor.4} parent=11 // pred_fallthru
        _
      // Predicated region
      $region61: #{docking_score_predictor.4} parent=11 // pred_check
        %p577 = pneg %p353
      $region62: #{docking_score_predictor.4} parent=11 // pred_check_branch
        %579 = sbr.rel (%p577) target = $region64
      $region63: #{docking_score_predictor.4} parent=11 // pred_region
        _
      $region64: #{docking_score_predictor.4} parent=11 // pred_fallthru
        _
      // Predicated region
      $region65: #{docking_score_predictor.4} parent=11 // pred_check
        %p580 = pneg %p374
      $region66: #{docking_score_predictor.4} parent=11 // pred_check_branch
        %582 = sbr.rel (%p580) target = $region68
      $region67: #{docking_score_predictor.4} parent=11 // pred_region
        _
      $region68: #{docking_score_predictor.4} parent=11 // pred_fallthru
        _
      // Predicated region
      $region69: #{docking_score_predictor.4} parent=11 // pred_check
        %p583 = pneg %p395
      $region70: #{docking_score_predictor.4} parent=11 // pred_check_branch
        %585 = sbr.rel (%p583) target = $region72
      $region71: #{docking_score_predictor.4} parent=11 // pred_region
        _
      $region72: #{docking_score_predictor.4} parent=11 // pred_fallthru
        _
      // Predicated region
      $region73: #{docking_score_predictor.4} parent=11 // pred_check
        %p586 = pneg %p416
      $region74: #{docking_score_predictor.4} parent=11 // pred_check_branch
        %588 = sbr.rel (%p586) target = $region76
      $region75: #{docking_score_predictor.4} parent=11 // pred_region
        _
      $region76: #{docking_score_predictor.4} parent=11 // pred_fallthru
        _
      // Predicated region
      $region77: #{docking_score_predictor.4} parent=11 // pred_check
        %p589 = pneg %p437
      $region78: #{docking_score_predictor.4} parent=11 // pred_check_branch
        %591 = sbr.rel (%p589) target = $region80
      $region79: #{docking_score_predictor.4} parent=11 // pred_region
        _
      $region80: #{docking_score_predictor.4} parent=11 // pred_fallthru
        _
      // Predicated region
      $region81: #{docking_score_predictor.4} parent=11 // pred_check
        %p592 = pneg %p458
      $region82: #{docking_score_predictor.4} parent=11 // pred_check_branch
        %594 = sbr.rel (%p592) target = $region84
      $region83: #{docking_score_predictor.4} parent=11 // pred_region
        _
      $region84: #{docking_score_predictor.4} parent=11 // pred_fallthru
        _
      // Predicated region
      $region85: #{docking_score_predictor.4} parent=11 // pred_check
        %p595 = pneg %p479
      $region86: #{docking_score_predictor.4} parent=11 // pred_check_branch
        %597 = sbr.rel (%p595) target = $region88
      $region87: #{docking_score_predictor.4} parent=11 // pred_region
        _
      $region88: #{docking_score_predictor.4} parent=11 // pred_fallthru
        _
      // Predicated region
      $region89: #{docking_score_predictor.4} parent=11 // pred_check
        %p598 = pneg %p500
      $region90: #{docking_score_predictor.4} parent=11 // pred_check_branch
        %600 = sbr.rel (%p598) target = $region92
      $region91: #{docking_score_predictor.4} parent=11 // pred_region
        _
      $region92: #{docking_score_predictor.4} parent=11 // pred_fallthru
        _
    $region12: #{docking_score_predictor.4} parent=5 // pred_fallthru
      _
    %p601 = scmp.lt.s32.totalorder %s28, 2
    // Predicated region
    $region93: #{docking_score_predictor.4} parent=5 // pred_check
      %p602 = pneg %p601
    $region94: #{docking_score_predictor.4} parent=5 // pred_check_branch
      %604 = sbr.rel (%p602) target = $region96
    $region95: #{docking_score_predictor.4} parent=5 // pred_region
      // Predicated region
      $region97: #{docking_score_predictor.4} parent=95 // pred_check
        %p605 = pneg %p48
      $region98: #{docking_score_predictor.4} parent=95 // pred_check_branch
        %607 = sbr.rel (%p605) target = $region100
      $region99: #{docking_score_predictor.4} parent=95 // pred_region
        %p608 = scmp.lt.s32.totalorder %s28, 1
        %s609 = scalar_select %p608, %s28, 1
        %s610 = smul.addr %s609, 8
        %s611 = scalar_lea.vmem %s0, %s610
      $region100: #{docking_score_predictor.4} parent=95 // pred_fallthru
        _
      // Predicated region
      $region101: #{docking_score_predictor.4} parent=95 // pred_check
        %p612 = pneg %p74
      $region102: #{docking_score_predictor.4} parent=95 // pred_check_branch
        %614 = sbr.rel (%p612) target = $region104
      $region103: #{docking_score_predictor.4} parent=95 // pred_region
        %p615 = scmp.lt.s32.totalorder %s28, 1
        %s616 = scalar_select %p615, %s28, 1
        %s617 = smul.addr %s616, 8
        %s618 = scalar_lea.vmem %s1, %s617
      $region104: #{docking_score_predictor.4} parent=95 // pred_fallthru
        _
    $region96: #{docking_score_predictor.4} parent=5 // pred_fallthru
      _
    %p619 = scmp.le.s32.totalorder 1, %s28
    %p620 = scmp.lt.s32.totalorder %s28, 3
    %p621 = pnand %p619, %p620
    %p622 = pneg %p621
    // Predicated region
    $region105: #{docking_score_predictor.4} parent=5 // pred_check
      _
    $region106: #{docking_score_predictor.4} parent=5 // pred_check_branch
      %624 = sbr.rel (%p621) target = $region108
    $region107: #{docking_score_predictor.4} parent=5 // pred_region
      %s625 = ssub.s32 %s28, 1
      %p626 = scmp.lt.s32.totalorder %s33, 1
      %s627 = scalar_select %p626, %s33, 1
      %s628 = smul.addr %s627, 8
      %s629 = scalar_lea.vmem %s0, %s628
      %p630 = pneg %p54
      %p631 = pneg %p51
      %p632 = scmp.lt.s32.totalorder %s33, 1
      %s633 = scalar_select %p632, %s33, 1
      %s634 = smul.addr %s633, 8
      %s635 = scalar_lea.vmem %s1, %s634
      %p636 = pneg %p80
      %p637 = pneg %p77
      %p638 = pneg %p101
      %p639 = pneg %p98
      %p640 = pneg %p122
      %p641 = pneg %p119
      %p642 = pneg %p143
      %p643 = pneg %p140
      %p644 = pneg %p164
      %p645 = pneg %p161
      %p646 = pneg %p185
      %p647 = pneg %p182
      %p648 = pneg %p206
      %p649 = pneg %p203
      %p650 = pneg %p227
      %p651 = pneg %p224
      %p652 = pneg %p248
      %p653 = pneg %p245
      %p654 = pneg %p269
      %p655 = pneg %p266
      %p656 = pneg %p290
      %p657 = pneg %p287
      %p658 = pneg %p311
      %p659 = pneg %p308
      %p660 = pneg %p332
      %p661 = pneg %p329
      %p662 = pneg %p353
      %p663 = pneg %p350
      %p664 = pneg %p374
      %p665 = pneg %p371
      %p666 = pneg %p395
      %p667 = pneg %p392
      %p668 = pneg %p416
      %p669 = pneg %p413
      %p670 = pneg %p437
      %p671 = pneg %p434
      %p672 = pneg %p458
      %p673 = pneg %p455
      %p674 = pneg %p479
      %p675 = pneg %p476
      %p676 = pneg %p500
      %p677 = pneg %p497
      %p678 = pneg %p526
      %p679 = pneg %p523
      %p680 = scmp.lt.s32.totalorder %s33, 1
      %s681 = scalar_select %p680, %s33, 1
      %s682 = smul.addr %s681, 8
      %s683 = scalar_lea.vmem %s22, %s682
      %p684 = scmp.lt.s32.totalorder %s33, 1
      %s685 = scalar_select %p684, %s33, 1
      %s686 = smul.addr %s685, 8
      %s687 = scalar_lea.vmem %s0, %s686
      %p688 = scmp.lt.s32.totalorder %s33, 1
      %s689 = scalar_select %p688, %s33, 1
      %s690 = smul.addr %s689, 8
      %s691 = scalar_lea.vmem %s1, %s690
      %p692 = scmp.lt.s32.totalorder %s33, 1
      %s693 = scalar_select %p692, %s33, 1
      %s694 = smul.addr %s693, 8
      %s695 = scalar_lea.vmem %s22, %s694
      %v697 = vld [vmem:[%s687] sm:$0xff]
      %v698 = vld [vmem:[%s691] sm:$0xff]
      %v699 = vlaneseq
      %v700 = vand.u32 %v699, 127
      %vm701 = vcmp.ge.s32.totalorder %v700, 0
      %vm702 = vcmp.lt.s32.totalorder %v700, 8
      %vm703 = vmand %vm701, %vm702
      %v704 = vsel %vm703, 1, 0
      %v705 = vcvt.s32.f32 %v704
      %vm706 = vcmp.ge.s32.totalorder %v700, 8
      %vm707 = vcmp.lt.s32.totalorder %v700, 16
      %vm708 = vmand %vm706, %vm707
      %v709 = vsel %vm708, 1, 0
      %v710 = vcvt.s32.f32 %v709
      %vm711 = vcmp.ge.s32.totalorder %v700, 16
      %vm712 = vcmp.lt.s32.totalorder %v700, 24
      %vm713 = vmand %vm711, %vm712
      %v714 = vsel %vm713, 1, 0
      %v715 = vcvt.s32.f32 %v714
      %vm716 = vcmp.ge.s32.totalorder %v700, 24
      %vm717 = vcmp.lt.s32.totalorder %v700, 32
      %vm718 = vmand %vm716, %vm717
      %v719 = vsel %vm718, 1, 0
      %v720 = vcvt.s32.f32 %v719
      %v721 = vld [vmem:[%s2] sm:$0xf]
      %v722 = vld [vmem:[%s2 + $0x4] sm:$0xf]
      %v723 = vld [vmem:[%s2 + $0x8] sm:$0xf]
      %v724 = vld [vmem:[%s2 + $0xc] sm:$0xf]
      %v725 = vld [vmem:[%s3] sm:$0x1]
      %v726 = vpack.c.bf16 %v697, %v697
      %v728 = vperm.slane %v725, 0
      %v734 = vunpack.c.l.b16 %v721
      %v735 = vunpack.c.l.b16 %v722
      %v736 = vunpack.c.l.b16 %v723
      %v737 = vunpack.c.l.b16 %v724
      %v738 = vpack.c.b16 %v735, %v734
      %v739 = vpack.c.b16 %v737, %v736
      %vm742 = vcmask 261120
      %v744 = vsel %vm742, %v726, 0
      %746 = vmatpush.bf16.msra.mxu0 0
      %747 = vmatpush.bf16.msra.mxu0 0
      %748 = vmatpush.bf16.msra.mxu0 0
      %749 = vmatpush.bf16.msra.mxu0 0
      %750 = vmatpush.bf16.msra.mxu0 0
      %751 = vmatpush.bf16.msra.mxu0 0
      %752 = vmatpush.bf16.msra.mxu0 %v739
      %753 = vmatpush.bf16.msra.mxu0 %v738
      %754 = vmatmul.bf16.gmra.mxu0 %v744
      %v755 = vpop.f32.mrf.mxu0
      %v756 = vadd.f32 %v728, %v755
      %v757 = vpop.f32.mrf.mxu0
      %758 = vdwg.mxu0
      %759 = vrot.lane.b32.xlu0 %v738, 96
      %v760 = vpop.permute.xlu0 %759
      %761 = vrot.lane.b32.xlu0 %v739, 96
      %v762 = vpop.permute.xlu0 %761
      %765 = vrot.lane.b32.xlu0 %v728, 96
      %v766 = vpop.permute.xlu0 %765
      %768 = vmatpush.bf16.msra.mxu0 0
      %769 = vmatpush.bf16.msra.mxu0 0
      %770 = vmatpush.bf16.msra.mxu0 0
      %771 = vmatpush.bf16.msra.mxu0 0
      %772 = vmatpush.bf16.msra.mxu0 0
      %773 = vmatpush.bf16.msra.mxu0 0
      %774 = vmatpush.bf16.msra.mxu0 %v762
      %775 = vmatpush.bf16.msra.mxu0 %v760
      %776 = vmatmul.bf16.gmra.mxu0 %v744
      %v777 = vpop.f32.mrf.mxu0
      %v778 = vadd.f32 %v766, %v777
      %v779 = vpop.f32.mrf.mxu0
      %780 = vdwg.mxu0
      %781 = vrot.lane.b32.xlu0 %v738, 64
      %v782 = vpop.permute.xlu0 %781
      %783 = vrot.lane.b32.xlu0 %v739, 64
      %v784 = vpop.permute.xlu0 %783
      %787 = vrot.lane.b32.xlu0 %v728, 64
      %v788 = vpop.permute.xlu0 %787
      %790 = vmatpush.bf16.msra.mxu0 0
      %791 = vmatpush.bf16.msra.mxu0 0
      %792 = vmatpush.bf16.msra.mxu0 0
      %793 = vmatpush.bf16.msra.mxu0 0
      %794 = vmatpush.bf16.msra.mxu0 0
      %795 = vmatpush.bf16.msra.mxu0 0
      %796 = vmatpush.bf16.msra.mxu0 %v784
      %797 = vmatpush.bf16.msra.mxu0 %v782
      %798 = vmatmul.bf16.gmra.mxu0 %v744
      %v799 = vpop.f32.mrf.mxu0
      %v800 = vadd.f32 %v788, %v799
      %v801 = vpop.f32.mrf.mxu0
      %802 = vdwg.mxu0
      %v803 = vpack.c.bf16 %v778, %v778
      %v804 = vmul.f32 %v756, %v705
      %v805 = vpack.c.bf16 %v804, %v804
      %v807 = vsel %vm742, %v805, 0
      %v810 = vsel %vm742, %v803, 0
      %812 = vmatpush.bf16.xpose.msra.mxu0 0
      %813 = vmatpush.bf16.xpose.msra.mxu0 0
      %814 = vmatpush.bf16.xpose.msra.mxu0 0
      %815 = vmatpush.bf16.xpose.msra.mxu0 0
      %816 = vmatpush.bf16.xpose.msra.mxu0 0
      %817 = vmatpush.bf16.xpose.msra.mxu0 0
      %818 = vmatpush.bf16.xpose.msra.mxu0 0
      %819 = vmatpush.bf16.xpose.msra.mxu0 %v810
      %820 = vmatmul.bf16.gmra.mxu0 %v807
      %v821 = vpop.f32.mrf.mxu0
      %v822 = vadd.f32 0.0, %v821
      %v823 = vpop.f32.mrf.mxu0
      %824 = vdwg.mxu0
      %v825 = vmul.f32 %v822, 0.35355338
      %vm826 = vcmask 64512
      %v827 = vsel %vm826, %v825, -inf
      %828 = vmax.xlane.f32.xlu0 %v827
      %v829 = vpop.xlane.xlu0 %828
      %v830 = vsub.f32 %v825, %v829
      %v831 = vmul.f32 %v830, 1.442695
      %v832 = vpow.pop %v831
      %v833 = vsel %vm826, %v832, 0.0
      %834 = vadd.xlane.f32.xlu0 %v833
      %v835 = vpop.xlane.xlu0 %834
      %v836 = vrcp.pop %v835
      %v837 = vmul.f32 %v832, %v836
      %v838 = vpack.c.bf16 %v837, %v837
      %v839 = vmul.f32 %v800, %v705
      %v840 = vpack.c.bf16 %v839, %v839
      %v841 = vmul.f32 %v756, %v710
      %v842 = vpack.c.bf16 %v841, %v841
      %v844 = vsel %vm742, %v842, 0
      %846 = vmatpush.bf16.xpose.msra.mxu0 0
      %847 = vmatpush.bf16.xpose.msra.mxu0 0
      %848 = vmatpush.bf16.xpose.msra.mxu0 0
      %849 = vmatpush.bf16.xpose.msra.mxu0 0
      %850 = vmatpush.bf16.xpose.msra.mxu0 0
      %851 = vmatpush.bf16.xpose.msra.mxu0 0
      %852 = vmatpush.bf16.xpose.msra.mxu0 0
      %853 = vmatpush.bf16.xpose.msra.mxu0 %v810
      %854 = vmatmul.bf16.gmra.mxu0 %v844
      %v855 = vpop.f32.mrf.mxu0
      %v856 = vadd.f32 0.0, %v855
      %v857 = vpop.f32.mrf.mxu0
      %858 = vdwg.mxu0
      %v859 = vmul.f32 %v856, 0.35355338
      %v860 = vsel %vm826, %v859, -inf
      %861 = vmax.xlane.f32.xlu0 %v860
      %v862 = vpop.xlane.xlu0 %861
      %v863 = vsub.f32 %v859, %v862
      %v864 = vmul.f32 %v863, 1.442695
      %v865 = vpow.pop %v864
      %v866 = vsel %vm826, %v865, 0.0
      %867 = vadd.xlane.f32.xlu0 %v866
      %v868 = vpop.xlane.xlu0 %867
      %v869 = vrcp.pop %v868
      %v870 = vmul.f32 %v865, %v869
      %v871 = vpack.c.bf16 %v870, %v870
      %v872 = vmul.f32 %v800, %v710
      %v873 = vpack.c.bf16 %v872, %v872
      %v875 = vsel %vm826, %v871, 0
      %vm877 = vcmask 1043456
      %v879 = vsel %vm877, %v873, 0
      %881 = vmatpush.bf16.msra.mxu0 0
      %882 = vmatpush.bf16.msra.mxu0 0
      %883 = vmatpush.bf16.msra.mxu0 0
      %884 = vmatpush.bf16.msra.mxu0 0
      %885 = vmatpush.bf16.msra.mxu0 0
      %886 = vmatpush.bf16.msra.mxu0 0
      %887 = vmatpush.bf16.msra.mxu0 0
      %888 = vmatpush.bf16.msra.mxu0 %v879
      %889 = vmatmul.bf16.gmra.mxu0 %v875
      %v890 = vpop.f32.mrf.mxu0
      %v891 = vadd.f32 0.0, %v890
      %v892 = vpop.f32.mrf.mxu0
      %893 = vdwg.mxu0
      %v895 = vsel %vm826, %v838, 0
      %v898 = vsel %vm877, %v840, 0
      %900 = vmatpush.bf16.msra.mxu0 0
      %901 = vmatpush.bf16.msra.mxu0 0
      %902 = vmatpush.bf16.msra.mxu0 0
      %903 = vmatpush.bf16.msra.mxu0 0
      %904 = vmatpush.bf16.msra.mxu0 0
      %905 = vmatpush.bf16.msra.mxu0 0
      %906 = vmatpush.bf16.msra.mxu0 0
      %907 = vmatpush.bf16.msra.mxu0 %v898
      %908 = vmatmul.bf16.gmra.mxu0 %v895
      %v909 = vpop.f32.mrf.mxu0
      %v910 = vadd.f32 %v891, %v909
      %v911 = vpop.f32.mrf.mxu0
      %912 = vdwg.mxu0
      %v913 = vmul.f32 %v756, %v715
      %v914 = vpack.c.bf16 %v913, %v913
      %v916 = vsel %vm742, %v914, 0
      %918 = vmatpush.bf16.xpose.msra.mxu0 0
      %919 = vmatpush.bf16.xpose.msra.mxu0 0
      %920 = vmatpush.bf16.xpose.msra.mxu0 0
      %921 = vmatpush.bf16.xpose.msra.mxu0 0
      %922 = vmatpush.bf16.xpose.msra.mxu0 0
      %923 = vmatpush.bf16.xpose.msra.mxu0 0
      %924 = vmatpush.bf16.xpose.msra.mxu0 0
      %925 = vmatpush.bf16.xpose.msra.mxu0 %v810
      %926 = vmatmul.bf16.gmra.mxu0 %v916
      %v927 = vpop.f32.mrf.mxu0
      %v928 = vadd.f32 0.0, %v927
      %v929 = vpop.f32.mrf.mxu0
      %930 = vdwg.mxu0
      %v931 = vmul.f32 %v928, 0.35355338
      %v932 = vsel %vm826, %v931, -inf
      %933 = vmax.xlane.f32.xlu0 %v932
      %v934 = vpop.xlane.xlu0 %933
      %v935 = vsub.f32 %v931, %v934
      %v936 = vmul.f32 %v935, 1.442695
      %v937 = vpow.pop %v936
      %v938 = vsel %vm826, %v937, 0.0
      %939 = vadd.xlane.f32.xlu0 %v938
      %v940 = vpop.xlane.xlu0 %939
      %v941 = vrcp.pop %v940
      %v942 = vmul.f32 %v937, %v941
      %v943 = vpack.c.bf16 %v942, %v942
      %v944 = vmul.f32 %v800, %v715
      %v945 = vpack.c.bf16 %v944, %v944
      %v947 = vsel %vm826, %v943, 0
      %v950 = vsel %vm877, %v945, 0
      %952 = vmatpush.bf16.msra.mxu0 0
      %953 = vmatpush.bf16.msra.mxu0 0
      %954 = vmatpush.bf16.msra.mxu0 0
      %955 = vmatpush.bf16.msra.mxu0 0
      %956 = vmatpush.bf16.msra.mxu0 0
      %957 = vmatpush.bf16.msra.mxu0 0
      %958 = vmatpush.bf16.msra.mxu0 0
      %959 = vmatpush.bf16.msra.mxu0 %v950
      %960 = vmatmul.bf16.gmra.mxu0 %v947
      %v961 = vpop.f32.mrf.mxu0
      %v962 = vadd.f32 0.0, %v961
      %v963 = vpop.f32.mrf.mxu0
      %964 = vdwg.mxu0
      %v965 = vadd.f32 %v910, %v962
      %v966 = vmul.f32 %v756, %v720
      %v967 = vpack.c.bf16 %v966, %v966
      %v969 = vsel %vm742, %v967, 0
      %971 = vmatpush.bf16.xpose.msra.mxu0 0
      %972 = vmatpush.bf16.xpose.msra.mxu0 0
      %973 = vmatpush.bf16.xpose.msra.mxu0 0
      %974 = vmatpush.bf16.xpose.msra.mxu0 0
      %975 = vmatpush.bf16.xpose.msra.mxu0 0
      %976 = vmatpush.bf16.xpose.msra.mxu0 0
      %977 = vmatpush.bf16.xpose.msra.mxu0 0
      %978 = vmatpush.bf16.xpose.msra.mxu0 %v810
      %979 = vmatmul.bf16.gmra.mxu0 %v969
      %v980 = vpop.f32.mrf.mxu0
      %v981 = vadd.f32 0.0, %v980
      %v982 = vpop.f32.mrf.mxu0
      %983 = vdwg.mxu0
      %v984 = vmul.f32 %v981, 0.35355338
      %v985 = vsel %vm826, %v984, -inf
      %986 = vmax.xlane.f32.xlu0 %v985
      %v987 = vpop.xlane.xlu0 %986
      %v988 = vsub.f32 %v984, %v987
      %v989 = vmul.f32 %v988, 1.442695
      %v990 = vpow.pop %v989
      %v991 = vsel %vm826, %v990, 0.0
      %992 = vadd.xlane.f32.xlu0 %v991
      %v993 = vpop.xlane.xlu0 %992
      %v994 = vrcp.pop %v993
      %v995 = vmul.f32 %v990, %v994
      %v996 = vpack.c.bf16 %v995, %v995
      %v997 = vmul.f32 %v800, %v720
      %v998 = vpack.c.bf16 %v997, %v997
      %v1000 = vsel %vm826, %v996, 0
      %v1003 = vsel %vm877, %v998, 0
      %1005 = vmatpush.bf16.msra.mxu0 0
      %1006 = vmatpush.bf16.msra.mxu0 0
      %1007 = vmatpush.bf16.msra.mxu0 0
      %1008 = vmatpush.bf16.msra.mxu0 0
      %1009 = vmatpush.bf16.msra.mxu0 0
      %1010 = vmatpush.bf16.msra.mxu0 0
      %1011 = vmatpush.bf16.msra.mxu0 0
      %1012 = vmatpush.bf16.msra.mxu0 %v1003
      %1013 = vmatmul.bf16.gmra.mxu0 %v1000
      %v1014 = vpop.f32.mrf.mxu0
      %v1015 = vadd.f32 0.0, %v1014
      %v1016 = vpop.f32.mrf.mxu0
      %1017 = vdwg.mxu0
      %v1018 = vadd.f32 %v965, %v1015
      %v1019 = vld [vmem:[%s4] sm:$0xf]
      %v1020 = vld [vmem:[%s4 + $0x4] sm:$0xf]
      %v1021 = vld [vmem:[%s4 + $0x8] sm:$0xf]
      %v1022 = vld [vmem:[%s4 + $0xc] sm:$0xf]
      %v1023 = vld [vmem:[%s5] sm:$0x1]
      %v1024 = vpack.c.bf16 %v1018, %v1018
      %v1026 = vperm.slane %v1023, 0
      %v1032 = vunpack.c.l.b16 %v1019
      %v1033 = vunpack.c.l.b16 %v1020
      %v1034 = vunpack.c.l.b16 %v1021
      %v1035 = vunpack.c.l.b16 %v1022
      %v1036 = vpack.c.b16 %v1033, %v1032
      %v1037 = vpack.c.b16 %v1035, %v1034
      %v1041 = vsel %vm742, %v1024, 0
      %1043 = vmatpush.bf16.msra.mxu0 0
      %1044 = vmatpush.bf16.msra.mxu0 0
      %1045 = vmatpush.bf16.msra.mxu0 0
      %1046 = vmatpush.bf16.msra.mxu0 0
      %1047 = vmatpush.bf16.msra.mxu0 0
      %1048 = vmatpush.bf16.msra.mxu0 0
      %1049 = vmatpush.bf16.msra.mxu0 %v1037
      %1050 = vmatpush.bf16.msra.mxu0 %v1036
      %1051 = vmatmul.bf16.gmra.mxu0 %v1041
      %v1052 = vpop.f32.mrf.mxu0
      %v1053 = vadd.f32 %v1026, %v1052
      %v1054 = vpop.f32.mrf.mxu0
      %1055 = vdwg.mxu0
      %v1056 = vld [vmem:[%s6] sm:$0x1]
      %v1057 = vld [vmem:[%s7] sm:$0x1]
      %v1058 = vadd.f32 %v1053, %v697
      %v1059 = vsel %vm742, %v1058, 0.0
      %1060 = vadd.xlane.f32.xlu0 %v1059
      %v1061 = vpop.xlane.xlu0 %1060
      %v1062 = vrcp.pop 32.0
      %v1063 = vmul.f32 32.0, %v1062
      %v1064 = vsub.f32 1.0, %v1063
      %v1065 = vmul.f32 %v1062, %v1064
      %v1066 = vadd.f32 %v1062, %v1065
      %vm1067 = vweird.f32 %v1062
      %v1068 = vsel %vm1067, %v1062, %v1066
      %v1069 = vmul.f32 %v1061, %v1068
      %v1070 = vsub.f32 %v1058, %v1069
      %v1071 = vmul.f32 %v1070, %v1070
      %v1072 = vsel %vm742, %v1071, 0.0
      %1073 = vadd.xlane.f32.xlu0 %v1072
      %v1074 = vpop.xlane.xlu0 %1073
      %v1075 = vmul.f32 %v1074, %v1068
      %v1076 = vadd.f32 %v1075, 1e-05
      %v1077 = vrsqrt.pop %v1076
      %v1078 = vmul.f32 %v1077, %v1076
      %v1079 = vmul.f32 %v1078, %v1077
      %v1080 = vmul.f32 0.5, %v1079
      %v1081 = vsub.f32 1.5, %v1080
      %v1082 = vmul.f32 %v1077, %v1081
      %vm1083 = vweird.f32 %v1076
      %vm1084 = vweird.f32 %v1077
      %vm1085 = vmor %vm1083, %vm1084
      %v1086 = vsel %vm1085, %v1077, %v1082
      %v1087 = vmul.f32 %v1070, %v1086
      %v1089 = vperm.slane %v1056, 0
      %v1091 = vmul.f32 %v1087, %v1089
      %v1093 = vperm.slane %v1057, 0
      %v1095 = vadd.f32 %v1091, %v1093
      %v1096 = vld [vmem:[%s8] sm:$0xf]
      %v1097 = vld [vmem:[%s8 + $0x4] sm:$0xf]
      %v1098 = vld [vmem:[%s8 + $0x8] sm:$0xf]
      %v1099 = vld [vmem:[%s8 + $0xc] sm:$0xf]
      %v1100 = vld [vmem:[%s9] sm:$0x1]
      %v1101 = vpack.c.bf16 %v1095, %v1095
      %v1103 = vperm.slane %v1100, 0
      %v1109 = vunpack.c.l.b16 %v1096
      %v1110 = vunpack.c.l.b16 %v1097
      %v1111 = vunpack.c.l.b16 %v1098
      %v1112 = vunpack.c.l.b16 %v1099
      %v1113 = vpack.c.b16 %v1110, %v1109
      %v1114 = vpack.c.b16 %v1112, %v1111
      %v1118 = vsel %vm742, %v1101, 0
      %1120 = vmatpush.bf16.msra.mxu0 0
      %1121 = vmatpush.bf16.msra.mxu0 0
      %1122 = vmatpush.bf16.msra.mxu0 0
      %1123 = vmatpush.bf16.msra.mxu0 0
      %1124 = vmatpush.bf16.msra.mxu0 0
      %1125 = vmatpush.bf16.msra.mxu0 0
      %1126 = vmatpush.bf16.msra.mxu0 %v1114
      %1127 = vmatpush.bf16.msra.mxu0 %v1113
      %1128 = vmatmul.bf16.gmra.mxu0 %v1118
      %v1129 = vpop.f32.mrf.mxu0
      %v1130 = vadd.f32 %v1103, %v1129
      %v1131 = vpop.f32.mrf.mxu0
      %1132 = vdwg.mxu0
      %v1133 = vld [vmem:[%s10] sm:$0xf]
      %v1134 = vld [vmem:[%s10 + $0x4] sm:$0xf]
      %v1135 = vld [vmem:[%s10 + $0x8] sm:$0xf]
      %v1136 = vld [vmem:[%s10 + $0xc] sm:$0xf]
      %v1137 = vld [vmem:[%s11] sm:$0x1]
      %v1138 = vpack.c.bf16 %v698, %v698
      %v1140 = vperm.slane %v1137, 0
      %v1146 = vunpack.c.l.b16 %v1133
      %v1147 = vunpack.c.l.b16 %v1134
      %v1148 = vunpack.c.l.b16 %v1135
      %v1149 = vunpack.c.l.b16 %v1136
      %v1150 = vpack.c.b16 %v1147, %v1146
      %v1151 = vpack.c.b16 %v1149, %v1148
      %v1155 = vsel %vm742, %v1138, 0
      %1157 = vmatpush.bf16.msra.mxu0 0
      %1158 = vmatpush.bf16.msra.mxu0 0
      %1159 = vmatpush.bf16.msra.mxu0 0
      %1160 = vmatpush.bf16.msra.mxu0 0
      %1161 = vmatpush.bf16.msra.mxu0 0
      %1162 = vmatpush.bf16.msra.mxu0 0
      %1163 = vmatpush.bf16.msra.mxu0 %v1151
      %1164 = vmatpush.bf16.msra.mxu0 %v1150
      %1165 = vmatmul.bf16.gmra.mxu0 %v1155
      %v1166 = vpop.f32.mrf.mxu0
      %v1167 = vadd.f32 %v1140, %v1166
      %v1168 = vpop.f32.mrf.mxu0
      %1169 = vdwg.mxu0
      %1170 = vrot.lane.b32.xlu0 %v1150, 96
      %v1171 = vpop.permute.xlu0 %1170
      %1172 = vrot.lane.b32.xlu0 %v1151, 96
      %v1173 = vpop.permute.xlu0 %1172
      %1176 = vrot.lane.b32.xlu0 %v1140, 96
      %v1177 = vpop.permute.xlu0 %1176
      %1179 = vmatpush.bf16.msra.mxu0 0
      %1180 = vmatpush.bf16.msra.mxu0 0
      %1181 = vmatpush.bf16.msra.mxu0 0
      %1182 = vmatpush.bf16.msra.mxu0 0
      %1183 = vmatpush.bf16.msra.mxu0 0
      %1184 = vmatpush.bf16.msra.mxu0 0
      %1185 = vmatpush.bf16.msra.mxu0 %v1173
      %1186 = vmatpush.bf16.msra.mxu0 %v1171
      %1187 = vmatmul.bf16.gmra.mxu0 %v1155
      %v1188 = vpop.f32.mrf.mxu0
      %v1189 = vadd.f32 %v1177, %v1188
      %v1190 = vpop.f32.mrf.mxu0
      %1191 = vdwg.mxu0
      %v1192 = vpack.c.bf16 %v1167, %v1167
      %v1193 = vmul.f32 %v1130, %v705
      %v1194 = vpack.c.bf16 %v1193, %v1193
      %v1196 = vsel %vm742, %v1194, 0
      %v1199 = vsel %vm742, %v1192, 0
      %1201 = vmatpush.bf16.xpose.msra.mxu0 0
      %1202 = vmatpush.bf16.xpose.msra.mxu0 0
      %1203 = vmatpush.bf16.xpose.msra.mxu0 0
      %1204 = vmatpush.bf16.xpose.msra.mxu0 0
      %1205 = vmatpush.bf16.xpose.msra.mxu0 0
      %1206 = vmatpush.bf16.xpose.msra.mxu0 0
      %1207 = vmatpush.bf16.xpose.msra.mxu0 0
      %1208 = vmatpush.bf16.xpose.msra.mxu0 %v1199
      %1209 = vmatmul.bf16.gmra.mxu0 %v1196
      %v1210 = vpop.f32.mrf.mxu0
      %v1211 = vadd.f32 0.0, %v1210
      %v1212 = vpop.f32.mrf.mxu0
      %1213 = vdwg.mxu0
      %v1214 = vmul.f32 %v1211, 0.35355338
      %v1215 = vsel %vm826, %v1214, -inf
      %1216 = vmax.xlane.f32.xlu0 %v1215
      %v1217 = vpop.xlane.xlu0 %1216
      %v1218 = vsub.f32 %v1214, %v1217
      %v1219 = vmul.f32 %v1218, 1.442695
      %v1220 = vpow.pop %v1219
      %v1221 = vsel %vm826, %v1220, 0.0
      %1222 = vadd.xlane.f32.xlu0 %v1221
      %v1223 = vpop.xlane.xlu0 %1222
      %v1224 = vrcp.pop %v1223
      %v1225 = vmul.f32 %v1220, %v1224
      %v1226 = vpack.c.bf16 %v1225, %v1225
      %v1227 = vmul.f32 %v1189, %v705
      %v1228 = vpack.c.bf16 %v1227, %v1227
      %v1229 = vmul.f32 %v1130, %v710
      %v1230 = vpack.c.bf16 %v1229, %v1229
      %v1232 = vsel %vm742, %v1230, 0
      %1234 = vmatpush.bf16.xpose.msra.mxu0 0
      %1235 = vmatpush.bf16.xpose.msra.mxu0 0
      %1236 = vmatpush.bf16.xpose.msra.mxu0 0
      %1237 = vmatpush.bf16.xpose.msra.mxu0 0
      %1238 = vmatpush.bf16.xpose.msra.mxu0 0
      %1239 = vmatpush.bf16.xpose.msra.mxu0 0
      %1240 = vmatpush.bf16.xpose.msra.mxu0 0
      %1241 = vmatpush.bf16.xpose.msra.mxu0 %v1199
      %1242 = vmatmul.bf16.gmra.mxu0 %v1232
      %v1243 = vpop.f32.mrf.mxu0
      %v1244 = vadd.f32 0.0, %v1243
      %v1245 = vpop.f32.mrf.mxu0
      %1246 = vdwg.mxu0
      %v1247 = vmul.f32 %v1244, 0.35355338
      %v1248 = vsel %vm826, %v1247, -inf
      %1249 = vmax.xlane.f32.xlu0 %v1248
      %v1250 = vpop.xlane.xlu0 %1249
      %v1251 = vsub.f32 %v1247, %v1250
      %v1252 = vmul.f32 %v1251, 1.442695
      %v1253 = vpow.pop %v1252
      %v1254 = vsel %vm826, %v1253, 0.0
      %1255 = vadd.xlane.f32.xlu0 %v1254
      %v1256 = vpop.xlane.xlu0 %1255
      %v1257 = vrcp.pop %v1256
      %v1258 = vmul.f32 %v1253, %v1257
      %v1259 = vpack.c.bf16 %v1258, %v1258
      %v1260 = vmul.f32 %v1189, %v710
      %v1261 = vpack.c.bf16 %v1260, %v1260
      %v1263 = vsel %vm826, %v1259, 0
      %v1266 = vsel %vm877, %v1261, 0
      %1268 = vmatpush.bf16.msra.mxu0 0
      %1269 = vmatpush.bf16.msra.mxu0 0
      %1270 = vmatpush.bf16.msra.mxu0 0
      %1271 = vmatpush.bf16.msra.mxu0 0
      %1272 = vmatpush.bf16.msra.mxu0 0
      %1273 = vmatpush.bf16.msra.mxu0 0
      %1274 = vmatpush.bf16.msra.mxu0 0
      %1275 = vmatpush.bf16.msra.mxu0 %v1266
      %1276 = vmatmul.bf16.gmra.mxu0 %v1263
      %v1277 = vpop.f32.mrf.mxu0
      %v1278 = vadd.f32 0.0, %v1277
      %v1279 = vpop.f32.mrf.mxu0
      %1280 = vdwg.mxu0
      %v1282 = vsel %vm826, %v1226, 0
      %v1285 = vsel %vm877, %v1228, 0
      %1287 = vmatpush.bf16.msra.mxu0 0
      %1288 = vmatpush.bf16.msra.mxu0 0
      %1289 = vmatpush.bf16.msra.mxu0 0
      %1290 = vmatpush.bf16.msra.mxu0 0
      %1291 = vmatpush.bf16.msra.mxu0 0
      %1292 = vmatpush.bf16.msra.mxu0 0
      %1293 = vmatpush.bf16.msra.mxu0 0
      %1294 = vmatpush.bf16.msra.mxu0 %v1285
      %1295 = vmatmul.bf16.gmra.mxu0 %v1282
      %v1296 = vpop.f32.mrf.mxu0
      %v1297 = vadd.f32 %v1278, %v1296
      %v1298 = vpop.f32.mrf.mxu0
      %1299 = vdwg.mxu0
      %v1300 = vmul.f32 %v1130, %v715
      %v1301 = vpack.c.bf16 %v1300, %v1300
      %v1303 = vsel %vm742, %v1301, 0
      %1305 = vmatpush.bf16.xpose.msra.mxu0 0
      %1306 = vmatpush.bf16.xpose.msra.mxu0 0
      %1307 = vmatpush.bf16.xpose.msra.mxu0 0
      %1308 = vmatpush.bf16.xpose.msra.mxu0 0
      %1309 = vmatpush.bf16.xpose.msra.mxu0 0
      %1310 = vmatpush.bf16.xpose.msra.mxu0 0
      %1311 = vmatpush.bf16.xpose.msra.mxu0 0
      %1312 = vmatpush.bf16.xpose.msra.mxu0 %v1199
      %1313 = vmatmul.bf16.gmra.mxu0 %v1303
      %v1314 = vpop.f32.mrf.mxu0
      %v1315 = vadd.f32 0.0, %v1314
      %v1316 = vpop.f32.mrf.mxu0
      %1317 = vdwg.mxu0
      %v1318 = vmul.f32 %v1315, 0.35355338
      %v1319 = vsel %vm826, %v1318, -inf
      %1320 = vmax.xlane.f32.xlu0 %v1319
      %v1321 = vpop.xlane.xlu0 %1320
      %v1322 = vsub.f32 %v1318, %v1321
      %v1323 = vmul.f32 %v1322, 1.442695
      %v1324 = vpow.pop %v1323
      %v1325 = vsel %vm826, %v1324, 0.0
      %1326 = vadd.xlane.f32.xlu0 %v1325
      %v1327 = vpop.xlane.xlu0 %1326
      %v1328 = vrcp.pop %v1327
      %v1329 = vmul.f32 %v1324, %v1328
      %v1330 = vpack.c.bf16 %v1329, %v1329
      %v1331 = vmul.f32 %v1189, %v715
      %v1332 = vpack.c.bf16 %v1331, %v1331
      %v1334 = vsel %vm826, %v1330, 0
      %v1337 = vsel %vm877, %v1332, 0
      %1339 = vmatpush.bf16.msra.mxu0 0
      %1340 = vmatpush.bf16.msra.mxu0 0
      %1341 = vmatpush.bf16.msra.mxu0 0
      %1342 = vmatpush.bf16.msra.mxu0 0
      %1343 = vmatpush.bf16.msra.mxu0 0
      %1344 = vmatpush.bf16.msra.mxu0 0
      %1345 = vmatpush.bf16.msra.mxu0 0
      %1346 = vmatpush.bf16.msra.mxu0 %v1337
      %1347 = vmatmul.bf16.gmra.mxu0 %v1334
      %v1348 = vpop.f32.mrf.mxu0
      %v1349 = vadd.f32 0.0, %v1348
      %v1350 = vpop.f32.mrf.mxu0
      %1351 = vdwg.mxu0
      %v1352 = vadd.f32 %v1297, %v1349
      %v1353 = vmul.f32 %v1130, %v720
      %v1354 = vpack.c.bf16 %v1353, %v1353
      %v1356 = vsel %vm742, %v1354, 0
      %1358 = vmatpush.bf16.xpose.msra.mxu0 0
      %1359 = vmatpush.bf16.xpose.msra.mxu0 0
      %1360 = vmatpush.bf16.xpose.msra.mxu0 0
      %1361 = vmatpush.bf16.xpose.msra.mxu0 0
      %1362 = vmatpush.bf16.xpose.msra.mxu0 0
      %1363 = vmatpush.bf16.xpose.msra.mxu0 0
      %1364 = vmatpush.bf16.xpose.msra.mxu0 0
      %1365 = vmatpush.bf16.xpose.msra.mxu0 %v1199
      %1366 = vmatmul.bf16.gmra.mxu0 %v1356
      %v1367 = vpop.f32.mrf.mxu0
      %v1368 = vadd.f32 0.0, %v1367
      %v1369 = vpop.f32.mrf.mxu0
      %1370 = vdwg.mxu0
      %v1371 = vmul.f32 %v1368, 0.35355338
      %v1372 = vsel %vm826, %v1371, -inf
      %1373 = vmax.xlane.f32.xlu0 %v1372
      %v1374 = vpop.xlane.xlu0 %1373
      %v1375 = vsub.f32 %v1371, %v1374
      %v1376 = vmul.f32 %v1375, 1.442695
      %v1377 = vpow.pop %v1376
      %v1378 = vsel %vm826, %v1377, 0.0
      %1379 = vadd.xlane.f32.xlu0 %v1378
      %v1380 = vpop.xlane.xlu0 %1379
      %v1381 = vrcp.pop %v1380
      %v1382 = vmul.f32 %v1377, %v1381
      %v1383 = vpack.c.bf16 %v1382, %v1382
      %v1384 = vmul.f32 %v1189, %v720
      %v1385 = vpack.c.bf16 %v1384, %v1384
      %v1387 = vsel %vm826, %v1383, 0
      %v1390 = vsel %vm877, %v1385, 0
      %1392 = vmatpush.bf16.msra.mxu0 0
      %1393 = vmatpush.bf16.msra.mxu0 0
      %1394 = vmatpush.bf16.msra.mxu0 0
      %1395 = vmatpush.bf16.msra.mxu0 0
      %1396 = vmatpush.bf16.msra.mxu0 0
      %1397 = vmatpush.bf16.msra.mxu0 0
      %1398 = vmatpush.bf16.msra.mxu0 0
      %1399 = vmatpush.bf16.msra.mxu0 %v1390
      %1400 = vmatmul.bf16.gmra.mxu0 %v1387
      %v1401 = vpop.f32.mrf.mxu0
      %v1402 = vadd.f32 0.0, %v1401
      %v1403 = vpop.f32.mrf.mxu0
      %1404 = vdwg.mxu0
      %v1405 = vadd.f32 %v1352, %v1402
      %v1406 = vld [vmem:[%s12] sm:$0xf]
      %v1407 = vld [vmem:[%s12 + $0x4] sm:$0xf]
      %v1408 = vld [vmem:[%s12 + $0x8] sm:$0xf]
      %v1409 = vld [vmem:[%s12 + $0xc] sm:$0xf]
      %v1410 = vld [vmem:[%s13] sm:$0x1]
      %v1411 = vpack.c.bf16 %v1405, %v1405
      %v1413 = vperm.slane %v1410, 0
      %v1419 = vunpack.c.l.b16 %v1406
      %v1420 = vunpack.c.l.b16 %v1407
      %v1421 = vunpack.c.l.b16 %v1408
      %v1422 = vunpack.c.l.b16 %v1409
      %v1423 = vpack.c.b16 %v1420, %v1419
      %v1424 = vpack.c.b16 %v1422, %v1421
      %v1428 = vsel %vm742, %v1411, 0
      %1430 = vmatpush.bf16.msra.mxu0 0
      %1431 = vmatpush.bf16.msra.mxu0 0
      %1432 = vmatpush.bf16.msra.mxu0 0
      %1433 = vmatpush.bf16.msra.mxu0 0
      %1434 = vmatpush.bf16.msra.mxu0 0
      %1435 = vmatpush.bf16.msra.mxu0 0
      %1436 = vmatpush.bf16.msra.mxu0 %v1424
      %1437 = vmatpush.bf16.msra.mxu0 %v1423
      %1438 = vmatmul.bf16.gmra.mxu0 %v1428
      %v1439 = vpop.f32.mrf.mxu0
      %v1440 = vadd.f32 %v1413, %v1439
      %v1441 = vpop.f32.mrf.mxu0
      %1442 = vdwg.mxu0
      %v1443 = vld [vmem:[%s14] sm:$0x1]
      %v1444 = vld [vmem:[%s15] sm:$0x1]
      %v1445 = vadd.f32 %v1440, %v1095
      %v1446 = vsel %vm742, %v1445, 0.0
      %1447 = vadd.xlane.f32.xlu0 %v1446
      %v1448 = vpop.xlane.xlu0 %1447
      %v1449 = vmul.f32 %v1448, %v1068
      %v1450 = vsub.f32 %v1445, %v1449
      %v1451 = vmul.f32 %v1450, %v1450
      %v1452 = vsel %vm742, %v1451, 0.0
      %1453 = vadd.xlane.f32.xlu0 %v1452
      %v1454 = vpop.xlane.xlu0 %1453
      %v1455 = vmul.f32 %v1454, %v1068
      %v1456 = vadd.f32 %v1455, 1e-05
      %v1457 = vrsqrt.pop %v1456
      %v1458 = vmul.f32 %v1457, %v1456
      %v1459 = vmul.f32 %v1458, %v1457
      %v1460 = vmul.f32 0.5, %v1459
      %v1461 = vsub.f32 1.5, %v1460
      %v1462 = vmul.f32 %v1457, %v1461
      %vm1463 = vweird.f32 %v1456
      %vm1464 = vweird.f32 %v1457
      %vm1465 = vmor %vm1463, %vm1464
      %v1466 = vsel %vm1465, %v1457, %v1462
      %v1467 = vmul.f32 %v1450, %v1466
      %v1469 = vperm.slane %v1443, 0
      %v1471 = vmul.f32 %v1467, %v1469
      %v1473 = vperm.slane %v1444, 0
      %v1475 = vadd.f32 %v1471, %v1473
      %v1476 = vld [vmem:[%s16] sm:$0xf]
      %v1477 = vld [vmem:[%s16 + $0x4] sm:$0xf]
      %v1478 = vld [vmem:[%s16 + $0x8] sm:$0xf]
      %v1479 = vld [vmem:[%s16 + $0xc] sm:$0xf]
      %v1480 = vld [vmem:[%s17] sm:$0x1]
      %v1481 = vpack.c.bf16 %v1475, %v1475
      %v1483 = vperm.slane %v1480, 0
      %v1489 = vunpack.c.l.b16 %v1476
      %v1490 = vunpack.c.l.b16 %v1477
      %v1491 = vunpack.c.l.b16 %v1478
      %v1492 = vunpack.c.l.b16 %v1479
      %v1493 = vpack.c.b16 %v1490, %v1489
      %v1494 = vpack.c.b16 %v1492, %v1491
      %v1498 = vsel %vm742, %v1481, 0
      %1500 = vmatpush.bf16.msra.mxu0 0
      %1501 = vmatpush.bf16.msra.mxu0 0
      %1502 = vmatpush.bf16.msra.mxu0 0
      %1503 = vmatpush.bf16.msra.mxu0 0
      %1504 = vmatpush.bf16.msra.mxu0 0
      %1505 = vmatpush.bf16.msra.mxu0 0
      %1506 = vmatpush.bf16.msra.mxu0 %v1494
      %1507 = vmatpush.bf16.msra.mxu0 %v1493
      %1508 = vmatmul.bf16.gmra.mxu0 %v1498
      %v1509 = vpop.f32.mrf.mxu0
      %v1510 = vadd.f32 %v1483, %v1509
      %v1511 = vpop.f32.mrf.mxu0
      %1512 = vdwg.mxu0
      %v1513 = vmax.f32 %v1510, 0.0
      %v1514 = vld [vmem:[%s18] sm:$0xf]
      %v1515 = vld [vmem:[%s18 + $0x4] sm:$0xf]
      %v1516 = vld [vmem:[%s18 + $0x8] sm:$0xf]
      %v1517 = vld [vmem:[%s18 + $0xc] sm:$0xf]
      %v1518 = vld [vmem:[%s18 + $0x10] sm:$0xf]
      %v1519 = vld [vmem:[%s18 + $0x14] sm:$0xf]
      %v1520 = vld [vmem:[%s18 + $0x18] sm:$0xf]
      %v1521 = vld [vmem:[%s18 + $0x1c] sm:$0xf]
      %v1522 = vld [vmem:[%s19] sm:$0x1]
      %v1523 = vpack.c.bf16 %v1513, %v1513
      %v1525 = vperm.slane %v1522, 0
      %v1535 = vunpack.c.l.b16 %v1514
      %v1536 = vunpack.c.l.b16 %v1515
      %v1537 = vunpack.c.l.b16 %v1516
      %v1538 = vunpack.c.l.b16 %v1517
      %v1539 = vunpack.c.l.b16 %v1518
      %v1540 = vunpack.c.l.b16 %v1519
      %v1541 = vunpack.c.l.b16 %v1520
      %v1542 = vunpack.c.l.b16 %v1521
      %v1543 = vpack.c.b16 %v1536, %v1535
      %v1544 = vpack.c.b16 %v1538, %v1537
      %v1545 = vpack.c.b16 %v1540, %v1539
      %v1546 = vpack.c.b16 %v1542, %v1541
      %vm1551 = vcmask 523264
      %v1553 = vsel %vm1551, %v1523, 0
      %1555 = vmatpush.bf16.msra.mxu0 0
      %1556 = vmatpush.bf16.msra.mxu0 0
      %1557 = vmatpush.bf16.msra.mxu0 0
      %1558 = vmatpush.bf16.msra.mxu0 0
      %1559 = vmatpush.bf16.msra.mxu0 %v1546
      %1560 = vmatpush.bf16.msra.mxu0 %v1545
      %1561 = vmatpush.bf16.msra.mxu0 %v1544
      %1562 = vmatpush.bf16.msra.mxu0 %v1543
      %1563 = vmatmul.bf16.gmra.mxu0 %v1553
      %v1564 = vpop.f32.mrf.mxu0
      %v1565 = vadd.f32 %v1525, %v1564
      %v1566 = vpop.f32.mrf.mxu0
      %1567 = vdwg.mxu0
      %v1568 = vld [vmem:[%s20] sm:$0x1]
      %v1569 = vld [vmem:[%s21] sm:$0x1]
      %v1570 = vadd.f32 %v1565, %v1475
      %v1571 = vsel %vm742, %v1570, 0.0
      %1572 = vadd.xlane.f32.xlu0 %v1571
      %v1573 = vpop.xlane.xlu0 %1572
      %v1574 = vmul.f32 %v1573, %v1068
      %v1575 = vsub.f32 %v1570, %v1574
      %v1576 = vmul.f32 %v1575, %v1575
      %v1577 = vsel %vm742, %v1576, 0.0
      %1578 = vadd.xlane.f32.xlu0 %v1577
      %v1579 = vpop.xlane.xlu0 %1578
      %v1580 = vmul.f32 %v1579, %v1068
      %v1581 = vadd.f32 %v1580, 1e-05
      %v1582 = vrsqrt.pop %v1581
      %v1583 = vmul.f32 %v1582, %v1581
      %v1584 = vmul.f32 %v1583, %v1582
      %v1585 = vmul.f32 0.5, %v1584
      %v1586 = vsub.f32 1.5, %v1585
      %v1587 = vmul.f32 %v1582, %v1586
      %vm1588 = vweird.f32 %v1581
      %vm1589 = vweird.f32 %v1582
      %vm1590 = vmor %vm1588, %vm1589
      %v1591 = vsel %vm1590, %v1582, %v1587
      %v1592 = vmul.f32 %v1575, %v1591
      %v1594 = vperm.slane %v1568, 0
      %v1596 = vmul.f32 %v1592, %v1594
      %v1598 = vperm.slane %v1569, 0
      %v1600 = vadd.f32 %v1596, %v1598
      %1601 = vst.msk [vmem:[%s695] sm:$0xff] %vm742, %v1600
      %p1602 = scmp.lt.s32.totalorder %s33, 1
      %s1603 = scalar_select %p1602, %s33, 1
      %s1604 = smul.addr %s1603, 8
      %s1605 = scalar_lea.vmem %s22, %s1604
      // Predicated region
      $region109: #{docking_score_predictor.4} parent=107 // pred_check
        %p1606 = pneg %p523
      $region110: #{docking_score_predictor.4} parent=107 // pred_check_branch
        %1608 = sbr.rel (%p1606) target = $region112
      $region111: #{docking_score_predictor.4} parent=107 // pred_region
        _
      $region112: #{docking_score_predictor.4} parent=107 // pred_fallthru
        _
    $region108: #{docking_score_predictor.4} parent=5 // pred_fallthru
      _
    %p1609 = scmp.le.s32.totalorder 2, %s28
    // Predicated region
    $region113: #{docking_score_predictor.4} parent=5 // pred_check
      %p1610 = pneg %p1609
    $region114: #{docking_score_predictor.4} parent=5 // pred_check_branch
      %1612 = sbr.rel (%p1610) target = $region116
    $region115: #{docking_score_predictor.4} parent=5 // pred_region
      %s1613 = ssub.s32 %s28, 2
      // Predicated region
      $region117: #{docking_score_predictor.4} parent=115 // pred_check
        %p1614 = pneg %p529
      $region118: #{docking_score_predictor.4} parent=115 // pred_check_branch
        %1616 = sbr.rel (%p1614) target = $region120
      $region119: #{docking_score_predictor.4} parent=115 // pred_region
        %p1617 = scmp.lt.s32.totalorder %s34, 1
        %s1618 = scalar_select %p1617, %s34, 1
        %s1619 = smul.addr %s1618, 8
        %s1620 = scalar_lea.vmem %s22, %s1619
      $region120: #{docking_score_predictor.4} parent=115 // pred_fallthru
        _
    $region116: #{docking_score_predictor.4} parent=5 // pred_fallthru
      _
  $region6: #{docking_score_predictor.4} parent=0 // loop_footer
    %s32 = sadd.s32 1, %s28
  $region7: #{docking_score_predictor.4} parent=0 // loop_footer_branch
    %27 = sbr.rel target = $region3
  $region8: #{docking_score_predictor.4} parent=0 // loop_exit
    _

// kernel: docking_score_predictor.3
$region0: #{docking_score_predictor.3}
  #allocation0 [shape = 'u32[]', space=smem, size = 0x4, offset = 0x4, fixed_abs, tag = 'smem constant byte address 0x4 - core index']
  #allocation1 [shape = 'u32[72,128]{1,0:T(1,128)}', space=vmem, size = 0x9000, scoped, tag = 'internal scratch']
  %s0 = inlined_call_operand.vmem [shape: f32[2,8,32], index: 0, kind: input, shape index: {}]
  %s1 = inlined_call_operand.vmem [shape: f32[2,8,32], index: 1, kind: input, shape index: {}]
  %s2 = inlined_call_operand.vmem [shape: bf16[32,96], index: 2, kind: input, shape index: {}]
  %s3 = inlined_call_operand.hbm [shape: f32[1,96], index: 3, kind: input, shape index: {}]
  %s4 = inlined_call_operand.hbm [shape: bf16[32,32], index: 4, kind: input, shape index: {}]
  %s5 = inlined_call_operand.hbm [shape: f32[1,32], index: 5, kind: input, shape index: {}]
  %s6 = inlined_call_operand.hbm [shape: f32[1,32], index: 6, kind: input, shape index: {}]
  %s7 = inlined_call_operand.hbm [shape: f32[1,32], index: 7, kind: input, shape index: {}]
  %s8 = inlined_call_operand.hbm [shape: bf16[32,32], index: 8, kind: input, shape index: {}]
  %s9 = inlined_call_operand.hbm [shape: f32[1,32], index: 9, kind: input, shape index: {}]
  %s10 = inlined_call_operand.hbm [shape: bf16[32,64], index: 10, kind: input, shape index: {}]
  %s11 = inlined_call_operand.hbm [shape: f32[1,64], index: 11, kind: input, shape index: {}]
  %s12 = inlined_call_operand.hbm [shape: bf16[32,32], index: 12, kind: input, shape index: {}]
  %s13 = inlined_call_operand.hbm [shape: f32[1,32], index: 13, kind: input, shape index: {}]
  %s14 = inlined_call_operand.hbm [shape: f32[1,32], index: 14, kind: input, shape index: {}]
  %s15 = inlined_call_operand.hbm [shape: f32[1,32], index: 15, kind: input, shape index: {}]
  %s16 = inlined_call_operand.vmem [shape: bf16[32,64], index: 16, kind: input, shape index: {}]
  %s17 = inlined_call_operand.vmem [shape: f32[1,64], index: 17, kind: input, shape index: {}]
  %s18 = inlined_call_operand.vmem [shape: bf16[64,32], index: 18, kind: input, shape index: {}]
  %s19 = inlined_call_operand.vmem [shape: f32[1,32], index: 19, kind: input, shape index: {}]
  %s20 = inlined_call_operand.vmem [shape: f32[1,32], index: 20, kind: input, shape index: {}]
  %s21 = inlined_call_operand.vmem [shape: f32[1,32], index: 21, kind: input, shape index: {}]
  %s22 = inlined_call_operand.vmem [shape: f32[2,8,32], index: 22, kind: output, shape index: {}]
  %s23 = sld [smem:[#allocation0]]
  $region173: #{docking_score_predictor.3} parent=0
    _
  %s25 = ssub.s32 1, %s23
  %s26 = scalar_select 0, %s25, %s23
  $region1: #{docking_score_predictor.3} parent=0
    #allocation2 [shape = 'u8[512]{0}', space=vmem, size = 0x400, scoped, tag = 'input window, operand 3, single buffered']
    #allocation3 [shape = 's32[2]{0}', space=sflag, size = 0x8, scoped, tag = 'scoped memory for docking_score_predictor.3']
    #allocation4 [shape = 'u8[8192]{0}', space=vmem, size = 0x2000, scoped, tag = 'input window, operand 4, single buffered']
    #allocation5 [shape = 's32[1]{0}', space=sflag, size = 0x4, scoped, tag = 'scoped memory for docking_score_predictor.3']
    #allocation6 [shape = 'u8[512]{0}', space=vmem, size = 0x400, scoped, tag = 'input window, operand 5, single buffered']
    #allocation7 [shape = 'u8[512]{0}', space=vmem, size = 0x400, scoped, tag = 'input window, operand 6, single buffered']
    #allocation8 [shape = 's32[1]{0}', space=sflag, size = 0x4, scoped, tag = 'scoped memory for docking_score_predictor.3']
    #allocation9 [shape = 'u8[512]{0}', space=vmem, size = 0x400, scoped, tag = 'input window, operand 7, single buffered']
    #allocation10 [shape = 'u8[8192]{0}', space=vmem, size = 0x2000, scoped, tag = 'input window, operand 8, single buffered']
    #allocation11 [shape = 's32[1]{0}', space=sflag, size = 0x4, scoped, tag = 'scoped memory for docking_score_predictor.3']
    #allocation12 [shape = 'u8[512]{0}', space=vmem, size = 0x400, scoped, tag = 'input window, operand 9, single buffered']
    #allocation13 [shape = 'u8[8192]{0}', space=vmem, size = 0x2000, scoped, tag = 'input window, operand 10, single buffered']
    #allocation14 [shape = 's32[1]{0}', space=sflag, size = 0x4, scoped, tag = 'scoped memory for docking_score_predictor.3']
    #allocation15 [shape = 'u8[512]{0}', space=vmem, size = 0x400, scoped, tag = 'input window, operand 11, single buffered']
    #allocation16 [shape = 'u8[8192]{0}', space=vmem, size = 0x2000, scoped, tag = 'input window, operand 12, single buffered']
    #allocation17 [shape = 's32[1]{0}', space=sflag, size = 0x4, scoped, tag = 'scoped memory for docking_score_predictor.3']
    #allocation18 [shape = 'u8[512]{0}', space=vmem, size = 0x400, scoped, tag = 'input window, operand 13, single buffered']
    #allocation19 [shape = 'u8[512]{0}', space=vmem, size = 0x400, scoped, tag = 'input window, operand 14, single buffered']
    #allocation20 [shape = 's32[1]{0}', space=sflag, size = 0x4, scoped, tag = 'scoped memory for docking_score_predictor.3']
    #allocation21 [shape = 'u8[512]{0}', space=vmem, size = 0x400, scoped, tag = 'input window, operand 15, single buffered']
    %27 = vsyncpa [#allocation3], 0
    %28 = vsyncpa [#allocation5], 0
    %29 = vsyncpa [#allocation8], 0
    %30 = vsyncpa [#allocation11], 0
    %31 = vsyncpa [#allocation14], 0
    %32 = vsyncpa [#allocation17], 0
    %33 = vsyncpa [#allocation20], 0
    loop: start=0, step=1, limit=4
    $region2: #{docking_score_predictor.3} parent=1 // loop_pre_header
      _
    $region3: #{docking_score_predictor.3} parent=1 // loop_header
      %s35 = sphi 0, %s39
      %p36 = scmp.ge.s32.totalorder %s35, 4
      %s45 = sphi 0, %s47
      %s48 = sphi 0, %s45
      %s49 = sphi 0, %s48
      %s65 = sphi 0, %s49
      %s71 = sphi 0, %s73
      %s74 = sphi 0, %s71
      %s75 = sphi 0, %s74
      %s91 = sphi 0, %s75
      %s95 = sphi 0, %s95
      %s97 = sphi 0, %s95
      %s98 = sphi 0, %s97
      %s112 = sphi 0, %s98
      %s116 = sphi 0, %s116
      %s118 = sphi 0, %s116
      %s119 = sphi 0, %s118
      %s133 = sphi 0, %s119
      %s137 = sphi 0, %s137
      %s139 = sphi 0, %s137
      %s140 = sphi 0, %s139
      %s154 = sphi 0, %s140
      %s158 = sphi 0, %s158
      %s160 = sphi 0, %s158
      %s161 = sphi 0, %s160
      %s175 = sphi 0, %s161
      %s179 = sphi 0, %s179
      %s181 = sphi 0, %s179
      %s182 = sphi 0, %s181
      %s196 = sphi 0, %s182
      %s200 = sphi 0, %s200
      %s202 = sphi 0, %s200
      %s203 = sphi 0, %s202
      %s217 = sphi 0, %s203
      %s221 = sphi 0, %s221
      %s223 = sphi 0, %s221
      %s224 = sphi 0, %s223
      %s238 = sphi 0, %s224
      %s242 = sphi 0, %s242
      %s244 = sphi 0, %s242
      %s245 = sphi 0, %s244
      %s259 = sphi 0, %s245
      %s263 = sphi 0, %s263
      %s265 = sphi 0, %s263
      %s266 = sphi 0, %s265
      %s280 = sphi 0, %s266
      %s284 = sphi 0, %s284
      %s286 = sphi 0, %s284
      %s287 = sphi 0, %s286
      %s301 = sphi 0, %s287
      %s305 = sphi 0, %s305
      %s307 = sphi 0, %s305
      %s308 = sphi 0, %s307
      %s322 = sphi 0, %s308
      %s326 = sphi 0, %s326
      %s328 = sphi 0, %s326
      %s329 = sphi 0, %s328
      %s343 = sphi 0, %s329
      %s347 = sphi 0, %s347
      %s349 = sphi 0, %s347
      %s350 = sphi 0, %s349
      %s364 = sphi 0, %s350
      %s368 = sphi 0, %s368
      %s370 = sphi 0, %s368
      %s371 = sphi 0, %s370
      %s385 = sphi 0, %s371
      %s389 = sphi 0, %s389
      %s391 = sphi 0, %s389
      %s392 = sphi 0, %s391
      %s406 = sphi 0, %s392
      %s410 = sphi 0, %s410
      %s412 = sphi 0, %s410
      %s413 = sphi 0, %s412
      %s427 = sphi 0, %s413
      %s431 = sphi 0, %s431
      %s433 = sphi 0, %s431
      %s434 = sphi 0, %s433
      %s448 = sphi 0, %s434
      %s452 = sphi 0, %s452
      %s454 = sphi 0, %s452
      %s455 = sphi 0, %s454
      %s469 = sphi 0, %s455
      %s473 = sphi 0, %s473
      %s475 = sphi 0, %s473
      %s476 = sphi 0, %s475
      %s490 = sphi 0, %s476
      %s494 = sphi 0, %s494
      %s496 = sphi 0, %s494
      %s497 = sphi 0, %s496
      %s511 = sphi 0, %s497
      %s517 = sphi 0, %s519
      %s520 = sphi 0, %s517
      %s521 = sphi 0, %s520
      %s537 = sphi 0, %s521
    $region4: #{docking_score_predictor.3} parent=1 // loop_header_branch
      %38 = sbr.rel (%p36) target = $region8
    $region5: #{docking_score_predictor.3} parent=1 // loop_body
      %s40 = ssub.s32 %s35, 1
      %s41 = ssub.s32 %s35, 2
      %s42 = sadd.s32 %s35, 1
      %s43 = ssub.s32 %s35, %s42
      %p44 = scmp.eq.s32.totalorder %s43, 0
      %s46 = sadd.s32 %s45, 1
      %s47 = scalar_select %p44, %s45, %s46
      %p50 = pneg %p44
      %p51 = scmp.eq.s32.totalorder %s35, 1
      %p52 = por %p50, %p51
      %p53 = scmp.ne.s32.totalorder %s45, %s48
      %p54 = scmp.eq.s32.totalorder %s35, 0
      %p55 = por %p53, %p54
      %p56 = scmp.ne.s32.totalorder %s45, %s48
      %p57 = scmp.eq.s32.totalorder %s40, 1
      %p58 = por %p56, %p57
      %p59 = scmp.ne.s32.totalorder %s48, %s49
      %p60 = scmp.eq.s32.totalorder %s40, 0
      %p61 = por %p59, %p60
      %p62 = scmp.ne.s32.totalorder %s48, %s49
      %p63 = scmp.eq.s32.totalorder %s41, 1
      %p64 = por %p62, %p63
      %p66 = scmp.ne.s32.totalorder %s49, %s65
      %p67 = scmp.eq.s32.totalorder %s41, 0
      %p68 = por %p66, %p67
      %s69 = ssub.s32 %s35, %s42
      %p70 = scmp.eq.s32.totalorder %s69, 0
      %s72 = sadd.s32 %s71, 1
      %s73 = scalar_select %p70, %s71, %s72
      %p76 = pneg %p70
      %p77 = scmp.eq.s32.totalorder %s35, 1
      %p78 = por %p76, %p77
      %p79 = scmp.ne.s32.totalorder %s71, %s74
      %p80 = scmp.eq.s32.totalorder %s35, 0
      %p81 = por %p79, %p80
      %p82 = scmp.ne.s32.totalorder %s71, %s74
      %p83 = scmp.eq.s32.totalorder %s40, 1
      %p84 = por %p82, %p83
      %p85 = scmp.ne.s32.totalorder %s74, %s75
      %p86 = scmp.eq.s32.totalorder %s40, 0
      %p87 = por %p85, %p86
      %p88 = scmp.ne.s32.totalorder %s74, %s75
      %p89 = scmp.eq.s32.totalorder %s41, 1
      %p90 = por %p88, %p89
      %p92 = scmp.ne.s32.totalorder %s75, %s91
      %p93 = scmp.eq.s32.totalorder %s41, 0
      %p94 = por %p92, %p93
      %s96 = sadd.s32 %s95, 1
      %p99 = scmp.eq.s32.totalorder %s35, 1
      %p100 = scmp.ne.s32.totalorder %s95, %s97
      %p101 = scmp.eq.s32.totalorder %s35, 0
      %p102 = por %p100, %p101
      %p103 = scmp.ne.s32.totalorder %s95, %s97
      %p104 = scmp.eq.s32.totalorder %s40, 1
      %p105 = por %p103, %p104
      %p106 = scmp.ne.s32.totalorder %s97, %s98
      %p107 = scmp.eq.s32.totalorder %s40, 0
      %p108 = por %p106, %p107
      %p109 = scmp.ne.s32.totalorder %s97, %s98
      %p110 = scmp.eq.s32.totalorder %s41, 1
      %p111 = por %p109, %p110
      %p113 = scmp.ne.s32.totalorder %s98, %s112
      %p114 = scmp.eq.s32.totalorder %s41, 0
      %p115 = por %p113, %p114
      %s117 = sadd.s32 %s116, 1
      %p120 = scmp.eq.s32.totalorder %s35, 1
      %p121 = scmp.ne.s32.totalorder %s116, %s118
      %p122 = scmp.eq.s32.totalorder %s35, 0
      %p123 = por %p121, %p122
      %p124 = scmp.ne.s32.totalorder %s116, %s118
      %p125 = scmp.eq.s32.totalorder %s40, 1
      %p126 = por %p124, %p125
      %p127 = scmp.ne.s32.totalorder %s118, %s119
      %p128 = scmp.eq.s32.totalorder %s40, 0
      %p129 = por %p127, %p128
      %p130 = scmp.ne.s32.totalorder %s118, %s119
      %p131 = scmp.eq.s32.totalorder %s41, 1
      %p132 = por %p130, %p131
      %p134 = scmp.ne.s32.totalorder %s119, %s133
      %p135 = scmp.eq.s32.totalorder %s41, 0
      %p136 = por %p134, %p135
      %s138 = sadd.s32 %s137, 1
      %p141 = scmp.eq.s32.totalorder %s35, 1
      %p142 = scmp.ne.s32.totalorder %s137, %s139
      %p143 = scmp.eq.s32.totalorder %s35, 0
      %p144 = por %p142, %p143
      %p145 = scmp.ne.s32.totalorder %s137, %s139
      %p146 = scmp.eq.s32.totalorder %s40, 1
      %p147 = por %p145, %p146
      %p148 = scmp.ne.s32.totalorder %s139, %s140
      %p149 = scmp.eq.s32.totalorder %s40, 0
      %p150 = por %p148, %p149
      %p151 = scmp.ne.s32.totalorder %s139, %s140
      %p152 = scmp.eq.s32.totalorder %s41, 1
      %p153 = por %p151, %p152
      %p155 = scmp.ne.s32.totalorder %s140, %s154
      %p156 = scmp.eq.s32.totalorder %s41, 0
      %p157 = por %p155, %p156
      %s159 = sadd.s32 %s158, 1
      %p162 = scmp.eq.s32.totalorder %s35, 1
      %p163 = scmp.ne.s32.totalorder %s158, %s160
      %p164 = scmp.eq.s32.totalorder %s35, 0
      %p165 = por %p163, %p164
      %p166 = scmp.ne.s32.totalorder %s158, %s160
      %p167 = scmp.eq.s32.totalorder %s40, 1
      %p168 = por %p166, %p167
      %p169 = scmp.ne.s32.totalorder %s160, %s161
      %p170 = scmp.eq.s32.totalorder %s40, 0
      %p171 = por %p169, %p170
      %p172 = scmp.ne.s32.totalorder %s160, %s161
      %p173 = scmp.eq.s32.totalorder %s41, 1
      %p174 = por %p172, %p173
      %p176 = scmp.ne.s32.totalorder %s161, %s175
      %p177 = scmp.eq.s32.totalorder %s41, 0
      %p178 = por %p176, %p177
      %s180 = sadd.s32 %s179, 1
      %p183 = scmp.eq.s32.totalorder %s35, 1
      %p184 = scmp.ne.s32.totalorder %s179, %s181
      %p185 = scmp.eq.s32.totalorder %s35, 0
      %p186 = por %p184, %p185
      %p187 = scmp.ne.s32.totalorder %s179, %s181
      %p188 = scmp.eq.s32.totalorder %s40, 1
      %p189 = por %p187, %p188
      %p190 = scmp.ne.s32.totalorder %s181, %s182
      %p191 = scmp.eq.s32.totalorder %s40, 0
      %p192 = por %p190, %p191
      %p193 = scmp.ne.s32.totalorder %s181, %s182
      %p194 = scmp.eq.s32.totalorder %s41, 1
      %p195 = por %p193, %p194
      %p197 = scmp.ne.s32.totalorder %s182, %s196
      %p198 = scmp.eq.s32.totalorder %s41, 0
      %p199 = por %p197, %p198
      %s201 = sadd.s32 %s200, 1
      %p204 = scmp.eq.s32.totalorder %s35, 1
      %p205 = scmp.ne.s32.totalorder %s200, %s202
      %p206 = scmp.eq.s32.totalorder %s35, 0
      %p207 = por %p205, %p206
      %p208 = scmp.ne.s32.totalorder %s200, %s202
      %p209 = scmp.eq.s32.totalorder %s40, 1
      %p210 = por %p208, %p209
      %p211 = scmp.ne.s32.totalorder %s202, %s203
      %p212 = scmp.eq.s32.totalorder %s40, 0
      %p213 = por %p211, %p212
      %p214 = scmp.ne.s32.totalorder %s202, %s203
      %p215 = scmp.eq.s32.totalorder %s41, 1
      %p216 = por %p214, %p215
      %p218 = scmp.ne.s32.totalorder %s203, %s217
      %p219 = scmp.eq.s32.totalorder %s41, 0
      %p220 = por %p218, %p219
      %s222 = sadd.s32 %s221, 1
      %p225 = scmp.eq.s32.totalorder %s35, 1
      %p226 = scmp.ne.s32.totalorder %s221, %s223
      %p227 = scmp.eq.s32.totalorder %s35, 0
      %p228 = por %p226, %p227
      %p229 = scmp.ne.s32.totalorder %s221, %s223
      %p230 = scmp.eq.s32.totalorder %s40, 1
      %p231 = por %p229, %p230
      %p232 = scmp.ne.s32.totalorder %s223, %s224
      %p233 = scmp.eq.s32.totalorder %s40, 0
      %p234 = por %p232, %p233
      %p235 = scmp.ne.s32.totalorder %s223, %s224
      %p236 = scmp.eq.s32.totalorder %s41, 1
      %p237 = por %p235, %p236
      %p239 = scmp.ne.s32.totalorder %s224, %s238
      %p240 = scmp.eq.s32.totalorder %s41, 0
      %p241 = por %p239, %p240
      %s243 = sadd.s32 %s242, 1
      %p246 = scmp.eq.s32.totalorder %s35, 1
      %p247 = scmp.ne.s32.totalorder %s242, %s244
      %p248 = scmp.eq.s32.totalorder %s35, 0
      %p249 = por %p247, %p248
      %p250 = scmp.ne.s32.totalorder %s242, %s244
      %p251 = scmp.eq.s32.totalorder %s40, 1
      %p252 = por %p250, %p251
      %p253 = scmp.ne.s32.totalorder %s244, %s245
      %p254 = scmp.eq.s32.totalorder %s40, 0
      %p255 = por %p253, %p254
      %p256 = scmp.ne.s32.totalorder %s244, %s245
      %p257 = scmp.eq.s32.totalorder %s41, 1
      %p258 = por %p256, %p257
      %p260 = scmp.ne.s32.totalorder %s245, %s259
      %p261 = scmp.eq.s32.totalorder %s41, 0
      %p262 = por %p260, %p261
      %s264 = sadd.s32 %s263, 1
      %p267 = scmp.eq.s32.totalorder %s35, 1
      %p268 = scmp.ne.s32.totalorder %s263, %s265
      %p269 = scmp.eq.s32.totalorder %s35, 0
      %p270 = por %p268, %p269
      %p271 = scmp.ne.s32.totalorder %s263, %s265
      %p272 = scmp.eq.s32.totalorder %s40, 1
      %p273 = por %p271, %p272
      %p274 = scmp.ne.s32.totalorder %s265, %s266
      %p275 = scmp.eq.s32.totalorder %s40, 0
      %p276 = por %p274, %p275
      %p277 = scmp.ne.s32.totalorder %s265, %s266
      %p278 = scmp.eq.s32.totalorder %s41, 1
      %p279 = por %p277, %p278
      %p281 = scmp.ne.s32.totalorder %s266, %s280
      %p282 = scmp.eq.s32.totalorder %s41, 0
      %p283 = por %p281, %p282
      %s285 = sadd.s32 %s284, 1
      %p288 = scmp.eq.s32.totalorder %s35, 1
      %p289 = scmp.ne.s32.totalorder %s284, %s286
      %p290 = scmp.eq.s32.totalorder %s35, 0
      %p291 = por %p289, %p290
      %p292 = scmp.ne.s32.totalorder %s284, %s286
      %p293 = scmp.eq.s32.totalorder %s40, 1
      %p294 = por %p292, %p293
      %p295 = scmp.ne.s32.totalorder %s286, %s287
      %p296 = scmp.eq.s32.totalorder %s40, 0
      %p297 = por %p295, %p296
      %p298 = scmp.ne.s32.totalorder %s286, %s287
      %p299 = scmp.eq.s32.totalorder %s41, 1
      %p300 = por %p298, %p299
      %p302 = scmp.ne.s32.totalorder %s287, %s301
      %p303 = scmp.eq.s32.totalorder %s41, 0
      %p304 = por %p302, %p303
      %s306 = sadd.s32 %s305, 1
      %p309 = scmp.eq.s32.totalorder %s35, 1
      %p310 = scmp.ne.s32.totalorder %s305, %s307
      %p311 = scmp.eq.s32.totalorder %s35, 0
      %p312 = por %p310, %p311
      %p313 = scmp.ne.s32.totalorder %s305, %s307
      %p314 = scmp.eq.s32.totalorder %s40, 1
      %p315 = por %p313, %p314
      %p316 = scmp.ne.s32.totalorder %s307, %s308
      %p317 = scmp.eq.s32.totalorder %s40, 0
      %p318 = por %p316, %p317
      %p319 = scmp.ne.s32.totalorder %s307, %s308
      %p320 = scmp.eq.s32.totalorder %s41, 1
      %p321 = por %p319, %p320
      %p323 = scmp.ne.s32.totalorder %s308, %s322
      %p324 = scmp.eq.s32.totalorder %s41, 0
      %p325 = por %p323, %p324
      %s327 = sadd.s32 %s326, 1
      %p330 = scmp.eq.s32.totalorder %s35, 1
      %p331 = scmp.ne.s32.totalorder %s326, %s328
      %p332 = scmp.eq.s32.totalorder %s35, 0
      %p333 = por %p331, %p332
      %p334 = scmp.ne.s32.totalorder %s326, %s328
      %p335 = scmp.eq.s32.totalorder %s40, 1
      %p336 = por %p334, %p335
      %p337 = scmp.ne.s32.totalorder %s328, %s329
      %p338 = scmp.eq.s32.totalorder %s40, 0
      %p339 = por %p337, %p338
      %p340 = scmp.ne.s32.totalorder %s328, %s329
      %p341 = scmp.eq.s32.totalorder %s41, 1
      %p342 = por %p340, %p341
      %p344 = scmp.ne.s32.totalorder %s329, %s343
      %p345 = scmp.eq.s32.totalorder %s41, 0
      %p346 = por %p344, %p345
      %s348 = sadd.s32 %s347, 1
      %p351 = scmp.eq.s32.totalorder %s35, 1
      %p352 = scmp.ne.s32.totalorder %s347, %s349
      %p353 = scmp.eq.s32.totalorder %s35, 0
      %p354 = por %p352, %p353
      %p355 = scmp.ne.s32.totalorder %s347, %s349
      %p356 = scmp.eq.s32.totalorder %s40, 1
      %p357 = por %p355, %p356
      %p358 = scmp.ne.s32.totalorder %s349, %s350
      %p359 = scmp.eq.s32.totalorder %s40, 0
      %p360 = por %p358, %p359
      %p361 = scmp.ne.s32.totalorder %s349, %s350
      %p362 = scmp.eq.s32.totalorder %s41, 1
      %p363 = por %p361, %p362
      %p365 = scmp.ne.s32.totalorder %s350, %s364
      %p366 = scmp.eq.s32.totalorder %s41, 0
      %p367 = por %p365, %p366
      %s369 = sadd.s32 %s368, 1
      %p372 = scmp.eq.s32.totalorder %s35, 1
      %p373 = scmp.ne.s32.totalorder %s368, %s370
      %p374 = scmp.eq.s32.totalorder %s35, 0
      %p375 = por %p373, %p374
      %p376 = scmp.ne.s32.totalorder %s368, %s370
      %p377 = scmp.eq.s32.totalorder %s40, 1
      %p378 = por %p376, %p377
      %p379 = scmp.ne.s32.totalorder %s370, %s371
      %p380 = scmp.eq.s32.totalorder %s40, 0
      %p381 = por %p379, %p380
      %p382 = scmp.ne.s32.totalorder %s370, %s371
      %p383 = scmp.eq.s32.totalorder %s41, 1
      %p384 = por %p382, %p383
      %p386 = scmp.ne.s32.totalorder %s371, %s385
      %p387 = scmp.eq.s32.totalorder %s41, 0
      %p388 = por %p386, %p387
      %s390 = sadd.s32 %s389, 1
      %p393 = scmp.eq.s32.totalorder %s35, 1
      %p394 = scmp.ne.s32.totalorder %s389, %s391
      %p395 = scmp.eq.s32.totalorder %s35, 0
      %p396 = por %p394, %p395
      %p397 = scmp.ne.s32.totalorder %s389, %s391
      %p398 = scmp.eq.s32.totalorder %s40, 1
      %p399 = por %p397, %p398
      %p400 = scmp.ne.s32.totalorder %s391, %s392
      %p401 = scmp.eq.s32.totalorder %s40, 0
      %p402 = por %p400, %p401
      %p403 = scmp.ne.s32.totalorder %s391, %s392
      %p404 = scmp.eq.s32.totalorder %s41, 1
      %p405 = por %p403, %p404
      %p407 = scmp.ne.s32.totalorder %s392, %s406
      %p408 = scmp.eq.s32.totalorder %s41, 0
      %p409 = por %p407, %p408
      %s411 = sadd.s32 %s410, 1
      %p414 = scmp.eq.s32.totalorder %s35, 1
      %p415 = scmp.ne.s32.totalorder %s410, %s412
      %p416 = scmp.eq.s32.totalorder %s35, 0
      %p417 = por %p415, %p416
      %p418 = scmp.ne.s32.totalorder %s410, %s412
      %p419 = scmp.eq.s32.totalorder %s40, 1
      %p420 = por %p418, %p419
      %p421 = scmp.ne.s32.totalorder %s412, %s413
      %p422 = scmp.eq.s32.totalorder %s40, 0
      %p423 = por %p421, %p422
      %p424 = scmp.ne.s32.totalorder %s412, %s413
      %p425 = scmp.eq.s32.totalorder %s41, 1
      %p426 = por %p424, %p425
      %p428 = scmp.ne.s32.totalorder %s413, %s427
      %p429 = scmp.eq.s32.totalorder %s41, 0
      %p430 = por %p428, %p429
      %s432 = sadd.s32 %s431, 1
      %p435 = scmp.eq.s32.totalorder %s35, 1
      %p436 = scmp.ne.s32.totalorder %s431, %s433
      %p437 = scmp.eq.s32.totalorder %s35, 0
      %p438 = por %p436, %p437
      %p439 = scmp.ne.s32.totalorder %s431, %s433
      %p440 = scmp.eq.s32.totalorder %s40, 1
      %p441 = por %p439, %p440
      %p442 = scmp.ne.s32.totalorder %s433, %s434
      %p443 = scmp.eq.s32.totalorder %s40, 0
      %p444 = por %p442, %p443
      %p445 = scmp.ne.s32.totalorder %s433, %s434
      %p446 = scmp.eq.s32.totalorder %s41, 1
      %p447 = por %p445, %p446
      %p449 = scmp.ne.s32.totalorder %s434, %s448
      %p450 = scmp.eq.s32.totalorder %s41, 0
      %p451 = por %p449, %p450
      %s453 = sadd.s32 %s452, 1
      %p456 = scmp.eq.s32.totalorder %s35, 1
      %p457 = scmp.ne.s32.totalorder %s452, %s454
      %p458 = scmp.eq.s32.totalorder %s35, 0
      %p459 = por %p457, %p458
      %p460 = scmp.ne.s32.totalorder %s452, %s454
      %p461 = scmp.eq.s32.totalorder %s40, 1
      %p462 = por %p460, %p461
      %p463 = scmp.ne.s32.totalorder %s454, %s455
      %p464 = scmp.eq.s32.totalorder %s40, 0
      %p465 = por %p463, %p464
      %p466 = scmp.ne.s32.totalorder %s454, %s455
      %p467 = scmp.eq.s32.totalorder %s41, 1
      %p468 = por %p466, %p467
      %p470 = scmp.ne.s32.totalorder %s455, %s469
      %p471 = scmp.eq.s32.totalorder %s41, 0
      %p472 = por %p470, %p471
      %s474 = sadd.s32 %s473, 1
      %p477 = scmp.eq.s32.totalorder %s35, 1
      %p478 = scmp.ne.s32.totalorder %s473, %s475
      %p479 = scmp.eq.s32.totalorder %s35, 0
      %p480 = por %p478, %p479
      %p481 = scmp.ne.s32.totalorder %s473, %s475
      %p482 = scmp.eq.s32.totalorder %s40, 1
      %p483 = por %p481, %p482
      %p484 = scmp.ne.s32.totalorder %s475, %s476
      %p485 = scmp.eq.s32.totalorder %s40, 0
      %p486 = por %p484, %p485
      %p487 = scmp.ne.s32.totalorder %s475, %s476
      %p488 = scmp.eq.s32.totalorder %s41, 1
      %p489 = por %p487, %p488
      %p491 = scmp.ne.s32.totalorder %s476, %s490
      %p492 = scmp.eq.s32.totalorder %s41, 0
      %p493 = por %p491, %p492
      %s495 = sadd.s32 %s494, 1
      %p498 = scmp.eq.s32.totalorder %s35, 1
      %p499 = scmp.ne.s32.totalorder %s494, %s496
      %p500 = scmp.eq.s32.totalorder %s35, 0
      %p501 = por %p499, %p500
      %p502 = scmp.ne.s32.totalorder %s494, %s496
      %p503 = scmp.eq.s32.totalorder %s40, 1
      %p504 = por %p502, %p503
      %p505 = scmp.ne.s32.totalorder %s496, %s497
      %p506 = scmp.eq.s32.totalorder %s40, 0
      %p507 = por %p505, %p506
      %p508 = scmp.ne.s32.totalorder %s496, %s497
      %p509 = scmp.eq.s32.totalorder %s41, 1
      %p510 = por %p508, %p509
      %p512 = scmp.ne.s32.totalorder %s497, %s511
      %p513 = scmp.eq.s32.totalorder %s41, 0
      %p514 = por %p512, %p513
      %s515 = ssub.s32 %s35, %s42
      %p516 = scmp.eq.s32.totalorder %s515, 0
      %s518 = sadd.s32 %s517, 1
      %s519 = scalar_select %p516, %s517, %s518
      %p522 = pneg %p516
      %p523 = scmp.eq.s32.totalorder %s35, 1
      %p524 = por %p522, %p523
      %p525 = scmp.ne.s32.totalorder %s517, %s520
      %p526 = scmp.eq.s32.totalorder %s35, 0
      %p527 = por %p525, %p526
      %p528 = scmp.ne.s32.totalorder %s517, %s520
      %p529 = scmp.eq.s32.totalorder %s40, 1
      %p530 = por %p528, %p529
      %p531 = scmp.ne.s32.totalorder %s520, %s521
      %p532 = scmp.eq.s32.totalorder %s40, 0
      %p533 = por %p531, %p532
      %p534 = scmp.ne.s32.totalorder %s520, %s521
      %p535 = scmp.eq.s32.totalorder %s41, 1
      %p536 = por %p534, %p535
      %p538 = scmp.ne.s32.totalorder %s521, %s537
      %p539 = scmp.eq.s32.totalorder %s41, 0
      %p540 = por %p538, %p539
      %p541 = scmp.le.s32.totalorder 1, %s35
      %p542 = scmp.lt.s32.totalorder %s35, 3
      %p543 = pnand %p541, %p542
      %p544 = pneg %p543
      // Predicated region
      $region9: #{docking_score_predictor.3} parent=5 // pred_check
        _
      $region10: #{docking_score_predictor.3} parent=5 // pred_check_branch
        %546 = sbr.rel (%p543) target = $region12
      $region11: #{docking_score_predictor.3} parent=5 // pred_region
        %s547 = ssub.s32 %s35, 1
        // Predicated region
        $region13: #{docking_score_predictor.3} parent=11 // pred_check
          %p548 = pneg %p108
        $region14: #{docking_score_predictor.3} parent=11 // pred_check_branch
          %550 = sbr.rel (%p548) target = $region16
        $region15: #{docking_score_predictor.3} parent=11 // pred_region
          _
        $region16: #{docking_score_predictor.3} parent=11 // pred_fallthru
          _
        // Predicated region
        $region17: #{docking_score_predictor.3} parent=11 // pred_check
          %p551 = pneg %p129
        $region18: #{docking_score_predictor.3} parent=11 // pred_check_branch
          %553 = sbr.rel (%p551) target = $region20
        $region19: #{docking_score_predictor.3} parent=11 // pred_region
          %555 = vsyncadd [#allocation3], 0
          %s557 = sshll.u32 %s3, 4
          %s558 = int_to_ptr.hbm [resolvable:$true] %s557
          %s559 = sshll.u32 [#allocation2], 4
          %s560 = int_to_ptr.vmem [resolvable:$true] %s559
          %562 = dma.hbm_to_vmem [thread:$0]  %s558, 16, %s560, [#allocation3]
        $region20: #{docking_score_predictor.3} parent=11 // pred_fallthru
          _
        // Predicated region
        $region21: #{docking_score_predictor.3} parent=11 // pred_check
          %p563 = pneg %p150
        $region22: #{docking_score_predictor.3} parent=11 // pred_check_branch
          %565 = sbr.rel (%p563) target = $region24
        $region23: #{docking_score_predictor.3} parent=11 // pred_region
          %567 = vsyncadd [#allocation5], 0
          %s568 = sshll.u32 %s4, 4
          %s569 = int_to_ptr.hbm [resolvable:$true] %s568
          %s570 = sshll.u32 [#allocation4], 4
          %s571 = int_to_ptr.vmem [resolvable:$true] %s570
          %576 = dma.hbm_to_vmem [thread:$0]  %s569, 256, %s571, [#allocation5], 64, 64, 4
        $region24: #{docking_score_predictor.3} parent=11 // pred_fallthru
          _
        // Predicated region
        $region25: #{docking_score_predictor.3} parent=11 // pred_check
          %p577 = pneg %p171
        $region26: #{docking_score_predictor.3} parent=11 // pred_check_branch
          %579 = sbr.rel (%p577) target = $region28
        $region27: #{docking_score_predictor.3} parent=11 // pred_region
          %581 = vsyncadd [#allocation5], 0
          %s583 = sshll.u32 %s5, 4
          %s584 = int_to_ptr.hbm [resolvable:$true] %s583
          %s585 = sshll.u32 [#allocation6], 4
          %s586 = int_to_ptr.vmem [resolvable:$true] %s585
          %588 = dma.hbm_to_vmem [thread:$0]  %s584, 16, %s586, [#allocation5]
        $region28: #{docking_score_predictor.3} parent=11 // pred_fallthru
          _
        // Predicated region
        $region29: #{docking_score_predictor.3} parent=11 // pred_check
          %p589 = pneg %p192
        $region30: #{docking_score_predictor.3} parent=11 // pred_check_branch
          %591 = sbr.rel (%p589) target = $region32
        $region31: #{docking_score_predictor.3} parent=11 // pred_region
          %593 = vsyncadd [#allocation8], 0
          %s595 = sshll.u32 %s6, 4
          %s596 = int_to_ptr.hbm [resolvable:$true] %s595
          %s597 = sshll.u32 [#allocation7], 4
          %s598 = int_to_ptr.vmem [resolvable:$true] %s597
          %600 = dma.hbm_to_vmem [thread:$0]  %s596, 16, %s598, [#allocation8]
        $region32: #{docking_score_predictor.3} parent=11 // pred_fallthru
          _
        // Predicated region
        $region33: #{docking_score_predictor.3} parent=11 // pred_check
          %p601 = pneg %p213
        $region34: #{docking_score_predictor.3} parent=11 // pred_check_branch
          %603 = sbr.rel (%p601) target = $region36
        $region35: #{docking_score_predictor.3} parent=11 // pred_region
          %605 = vsyncadd [#allocation8], 0
          %s607 = sshll.u32 %s7, 4
          %s608 = int_to_ptr.hbm [resolvable:$true] %s607
          %s609 = sshll.u32 [#allocation9], 4
          %s610 = int_to_ptr.vmem [resolvable:$true] %s609
          %612 = dma.hbm_to_vmem [thread:$0]  %s608, 16, %s610, [#allocation8]
        $region36: #{docking_score_predictor.3} parent=11 // pred_fallthru
          _
        // Predicated region
        $region37: #{docking_score_predictor.3} parent=11 // pred_check
          %p613 = pneg %p234
        $region38: #{docking_score_predictor.3} parent=11 // pred_check_branch
          %615 = sbr.rel (%p613) target = $region40
        $region39: #{docking_score_predictor.3} parent=11 // pred_region
          %617 = vsyncadd [#allocation11], 0
          %s618 = sshll.u32 %s8, 4
          %s619 = int_to_ptr.hbm [resolvable:$true] %s618
          %s620 = sshll.u32 [#allocation10], 4
          %s621 = int_to_ptr.vmem [resolvable:$true] %s620
          %626 = dma.hbm_to_vmem [thread:$0]  %s619, 256, %s621, [#allocation11], 64, 64, 4
        $region40: #{docking_score_predictor.3} parent=11 // pred_fallthru
          _
        // Predicated region
        $region41: #{docking_score_predictor.3} parent=11 // pred_check
          %p627 = pneg %p255
        $region42: #{docking_score_predictor.3} parent=11 // pred_check_branch
          %629 = sbr.rel (%p627) target = $region44
        $region43: #{docking_score_predictor.3} parent=11 // pred_region
          %631 = vsyncadd [#allocation11], 0
          %s633 = sshll.u32 %s9, 4
          %s634 = int_to_ptr.hbm [resolvable:$true] %s633
          %s635 = sshll.u32 [#allocation12], 4
          %s636 = int_to_ptr.vmem [resolvable:$true] %s635
          %638 = dma.hbm_to_vmem [thread:$0]  %s634, 16, %s636, [#allocation11]
        $region44: #{docking_score_predictor.3} parent=11 // pred_fallthru
          _
        // Predicated region
        $region45: #{docking_score_predictor.3} parent=11 // pred_check
          %p639 = pneg %p276
        $region46: #{docking_score_predictor.3} parent=11 // pred_check_branch
          %641 = sbr.rel (%p639) target = $region48
        $region47: #{docking_score_predictor.3} parent=11 // pred_region
          %643 = vsyncadd [#allocation14], 0
          %s644 = sshll.u32 %s10, 4
          %s645 = int_to_ptr.hbm [resolvable:$true] %s644
          %s646 = sshll.u32 [#allocation13], 4
          %s647 = int_to_ptr.vmem [resolvable:$true] %s646
          %652 = dma.hbm_to_vmem [thread:$0]  %s645, 256, %s647, [#allocation14], 64, 64, 4
        $region48: #{docking_score_predictor.3} parent=11 // pred_fallthru
          _
        // Predicated region
        $region49: #{docking_score_predictor.3} parent=11 // pred_check
          %p653 = pneg %p297
        $region50: #{docking_score_predictor.3} parent=11 // pred_check_branch
          %655 = sbr.rel (%p653) target = $region52
        $region51: #{docking_score_predictor.3} parent=11 // pred_region
          %657 = vsyncadd [#allocation14], 0
          %s659 = sshll.u32 %s11, 4
          %s660 = int_to_ptr.hbm [resolvable:$true] %s659
          %s661 = sshll.u32 [#allocation15], 4
          %s662 = int_to_ptr.vmem [resolvable:$true] %s661
          %664 = dma.hbm_to_vmem [thread:$0]  %s660, 16, %s662, [#allocation14]
        $region52: #{docking_score_predictor.3} parent=11 // pred_fallthru
          _
        // Predicated region
        $region53: #{docking_score_predictor.3} parent=11 // pred_check
          %p665 = pneg %p318
        $region54: #{docking_score_predictor.3} parent=11 // pred_check_branch
          %667 = sbr.rel (%p665) target = $region56
        $region55: #{docking_score_predictor.3} parent=11 // pred_region
          %669 = vsyncadd [#allocation17], 0
          %s670 = sshll.u32 %s12, 4
          %s671 = int_to_ptr.hbm [resolvable:$true] %s670
          %s672 = sshll.u32 [#allocation16], 4
          %s673 = int_to_ptr.vmem [resolvable:$true] %s672
          %678 = dma.hbm_to_vmem [thread:$0]  %s671, 256, %s673, [#allocation17], 64, 64, 4
        $region56: #{docking_score_predictor.3} parent=11 // pred_fallthru
          _
        // Predicated region
        $region57: #{docking_score_predictor.3} parent=11 // pred_check
          %p679 = pneg %p339
        $region58: #{docking_score_predictor.3} parent=11 // pred_check_branch
          %681 = sbr.rel (%p679) target = $region60
        $region59: #{docking_score_predictor.3} parent=11 // pred_region
          %683 = vsyncadd [#allocation17], 0
          %s685 = sshll.u32 %s13, 4
          %s686 = int_to_ptr.hbm [resolvable:$true] %s685
          %s687 = sshll.u32 [#allocation18], 4
          %s688 = int_to_ptr.vmem [resolvable:$true] %s687
          %690 = dma.hbm_to_vmem [thread:$0]  %s686, 16, %s688, [#allocation17]
        $region60: #{docking_score_predictor.3} parent=11 // pred_fallthru
          _
        // Predicated region
        $region61: #{docking_score_predictor.3} parent=11 // pred_check
          %p691 = pneg %p360
        $region62: #{docking_score_predictor.3} parent=11 // pred_check_branch
          %693 = sbr.rel (%p691) target = $region64
        $region63: #{docking_score_predictor.3} parent=11 // pred_region
          %695 = vsyncadd [#allocation20], 0
          %s697 = sshll.u32 %s14, 4
          %s698 = int_to_ptr.hbm [resolvable:$true] %s697
          %s699 = sshll.u32 [#allocation19], 4
          %s700 = int_to_ptr.vmem [resolvable:$true] %s699
          %702 = dma.hbm_to_vmem [thread:$0]  %s698, 16, %s700, [#allocation20]
        $region64: #{docking_score_predictor.3} parent=11 // pred_fallthru
          _
        // Predicated region
        $region65: #{docking_score_predictor.3} parent=11 // pred_check
          %p703 = pneg %p381
        $region66: #{docking_score_predictor.3} parent=11 // pred_check_branch
          %705 = sbr.rel (%p703) target = $region68
        $region67: #{docking_score_predictor.3} parent=11 // pred_region
          %707 = vsyncadd [#allocation20], 0
          %s709 = sshll.u32 %s15, 4
          %s710 = int_to_ptr.hbm [resolvable:$true] %s709
          %s711 = sshll.u32 [#allocation21], 4
          %s712 = int_to_ptr.vmem [resolvable:$true] %s711
          %714 = dma.hbm_to_vmem [thread:$0]  %s710, 16, %s712, [#allocation20]
        $region68: #{docking_score_predictor.3} parent=11 // pred_fallthru
          _
        // Predicated region
        $region69: #{docking_score_predictor.3} parent=11 // pred_check
          %p715 = pneg %p402
        $region70: #{docking_score_predictor.3} parent=11 // pred_check_branch
          %717 = sbr.rel (%p715) target = $region72
        $region71: #{docking_score_predictor.3} parent=11 // pred_region
          _
        $region72: #{docking_score_predictor.3} parent=11 // pred_fallthru
          _
        // Predicated region
        $region73: #{docking_score_predictor.3} parent=11 // pred_check
          %p718 = pneg %p423
        $region74: #{docking_score_predictor.3} parent=11 // pred_check_branch
          %720 = sbr.rel (%p718) target = $region76
        $region75: #{docking_score_predictor.3} parent=11 // pred_region
          _
        $region76: #{docking_score_predictor.3} parent=11 // pred_fallthru
          _
        // Predicated region
        $region77: #{docking_score_predictor.3} parent=11 // pred_check
          %p721 = pneg %p444
        $region78: #{docking_score_predictor.3} parent=11 // pred_check_branch
          %723 = sbr.rel (%p721) target = $region80
        $region79: #{docking_score_predictor.3} parent=11 // pred_region
          _
        $region80: #{docking_score_predictor.3} parent=11 // pred_fallthru
          _
        // Predicated region
        $region81: #{docking_score_predictor.3} parent=11 // pred_check
          %p724 = pneg %p465
        $region82: #{docking_score_predictor.3} parent=11 // pred_check_branch
          %726 = sbr.rel (%p724) target = $region84
        $region83: #{docking_score_predictor.3} parent=11 // pred_region
          _
        $region84: #{docking_score_predictor.3} parent=11 // pred_fallthru
          _
        // Predicated region
        $region85: #{docking_score_predictor.3} parent=11 // pred_check
          %p727 = pneg %p486
        $region86: #{docking_score_predictor.3} parent=11 // pred_check_branch
          %729 = sbr.rel (%p727) target = $region88
        $region87: #{docking_score_predictor.3} parent=11 // pred_region
          _
        $region88: #{docking_score_predictor.3} parent=11 // pred_fallthru
          _
        // Predicated region
        $region89: #{docking_score_predictor.3} parent=11 // pred_check
          %p730 = pneg %p507
        $region90: #{docking_score_predictor.3} parent=11 // pred_check_branch
          %732 = sbr.rel (%p730) target = $region92
        $region91: #{docking_score_predictor.3} parent=11 // pred_region
          _
        $region92: #{docking_score_predictor.3} parent=11 // pred_fallthru
          _
      $region12: #{docking_score_predictor.3} parent=5 // pred_fallthru
        _
      %p733 = scmp.lt.s32.totalorder %s35, 2
      // Predicated region
      $region93: #{docking_score_predictor.3} parent=5 // pred_check
        %p734 = pneg %p733
      $region94: #{docking_score_predictor.3} parent=5 // pred_check_branch
        %736 = sbr.rel (%p734) target = $region96
      $region95: #{docking_score_predictor.3} parent=5 // pred_region
        // Predicated region
        $region97: #{docking_score_predictor.3} parent=95 // pred_check
          %p737 = pneg %p55
        $region98: #{docking_score_predictor.3} parent=95 // pred_check_branch
          %739 = sbr.rel (%p737) target = $region100
        $region99: #{docking_score_predictor.3} parent=95 // pred_region
          %p740 = scmp.lt.s32.totalorder %s35, 1
          %s741 = scalar_select %p740, %s35, 1
          %s742 = smul.addr %s741, 8
          %s743 = scalar_lea.vmem %s0, %s742
        $region100: #{docking_score_predictor.3} parent=95 // pred_fallthru
          _
        // Predicated region
        $region101: #{docking_score_predictor.3} parent=95 // pred_check
          %p744 = pneg %p81
        $region102: #{docking_score_predictor.3} parent=95 // pred_check_branch
          %746 = sbr.rel (%p744) target = $region104
        $region103: #{docking_score_predictor.3} parent=95 // pred_region
          %p747 = scmp.lt.s32.totalorder %s35, 1
          %s748 = scalar_select %p747, %s35, 1
          %s749 = smul.addr %s748, 8
          %s750 = scalar_lea.vmem %s1, %s749
        $region104: #{docking_score_predictor.3} parent=95 // pred_fallthru
          _
      $region96: #{docking_score_predictor.3} parent=5 // pred_fallthru
        _
      %p751 = scmp.le.s32.totalorder 1, %s35
      %p752 = scmp.lt.s32.totalorder %s35, 3
      %p753 = pnand %p751, %p752
      %p754 = pneg %p753
      // Predicated region
      $region105: #{docking_score_predictor.3} parent=5 // pred_check
        _
      $region106: #{docking_score_predictor.3} parent=5 // pred_check_branch
        %756 = sbr.rel (%p753) target = $region108
      $region107: #{docking_score_predictor.3} parent=5 // pred_region
        %s757 = ssub.s32 %s35, 1
        // Predicated region
        $region109: #{docking_score_predictor.3} parent=107 // pred_check
          %p758 = pneg %p129
        $region110: #{docking_score_predictor.3} parent=107 // pred_check_branch
          %760 = sbr.rel (%p758) target = $region112
        $region111: #{docking_score_predictor.3} parent=107 // pred_region
          %762 = dma.done [#allocation3], 16
        $region112: #{docking_score_predictor.3} parent=107 // pred_fallthru
          _
        // Predicated region
        $region113: #{docking_score_predictor.3} parent=107 // pred_check
          %p763 = pneg %p150
        $region114: #{docking_score_predictor.3} parent=107 // pred_check_branch
          %765 = sbr.rel (%p763) target = $region116
        $region115: #{docking_score_predictor.3} parent=107 // pred_region
          %767 = dma.done [#allocation5], 256
        $region116: #{docking_score_predictor.3} parent=107 // pred_fallthru
          _
        // Predicated region
        $region117: #{docking_score_predictor.3} parent=107 // pred_check
          %p768 = pneg %p171
        $region118: #{docking_score_predictor.3} parent=107 // pred_check_branch
          %770 = sbr.rel (%p768) target = $region120
        $region119: #{docking_score_predictor.3} parent=107 // pred_region
          %772 = dma.done [#allocation5], 16
        $region120: #{docking_score_predictor.3} parent=107 // pred_fallthru
          _
        // Predicated region
        $region121: #{docking_score_predictor.3} parent=107 // pred_check
          %p773 = pneg %p192
        $region122: #{docking_score_predictor.3} parent=107 // pred_check_branch
          %775 = sbr.rel (%p773) target = $region124
        $region123: #{docking_score_predictor.3} parent=107 // pred_region
          %777 = dma.done [#allocation8], 16
        $region124: #{docking_score_predictor.3} parent=107 // pred_fallthru
          _
        // Predicated region
        $region125: #{docking_score_predictor.3} parent=107 // pred_check
          %p778 = pneg %p213
        $region126: #{docking_score_predictor.3} parent=107 // pred_check_branch
          %780 = sbr.rel (%p778) target = $region128
        $region127: #{docking_score_predictor.3} parent=107 // pred_region
          %782 = dma.done [#allocation8], 16
        $region128: #{docking_score_predictor.3} parent=107 // pred_fallthru
          _
        // Predicated region
        $region129: #{docking_score_predictor.3} parent=107 // pred_check
          %p783 = pneg %p234
        $region130: #{docking_score_predictor.3} parent=107 // pred_check_branch
          %785 = sbr.rel (%p783) target = $region132
        $region131: #{docking_score_predictor.3} parent=107 // pred_region
          %787 = dma.done [#allocation11], 256
        $region132: #{docking_score_predictor.3} parent=107 // pred_fallthru
          _
        // Predicated region
        $region133: #{docking_score_predictor.3} parent=107 // pred_check
          %p788 = pneg %p255
        $region134: #{docking_score_predictor.3} parent=107 // pred_check_branch
          %790 = sbr.rel (%p788) target = $region136
        $region135: #{docking_score_predictor.3} parent=107 // pred_region
          %792 = dma.done [#allocation11], 16
        $region136: #{docking_score_predictor.3} parent=107 // pred_fallthru
          _
        // Predicated region
        $region137: #{docking_score_predictor.3} parent=107 // pred_check
          %p793 = pneg %p276
        $region138: #{docking_score_predictor.3} parent=107 // pred_check_branch
          %795 = sbr.rel (%p793) target = $region140
        $region139: #{docking_score_predictor.3} parent=107 // pred_region
          %797 = dma.done [#allocation14], 256
        $region140: #{docking_score_predictor.3} parent=107 // pred_fallthru
          _
        // Predicated region
        $region141: #{docking_score_predictor.3} parent=107 // pred_check
          %p798 = pneg %p297
        $region142: #{docking_score_predictor.3} parent=107 // pred_check_branch
          %800 = sbr.rel (%p798) target = $region144
        $region143: #{docking_score_predictor.3} parent=107 // pred_region
          %802 = dma.done [#allocation14], 16
        $region144: #{docking_score_predictor.3} parent=107 // pred_fallthru
          _
        // Predicated region
        $region145: #{docking_score_predictor.3} parent=107 // pred_check
          %p803 = pneg %p318
        $region146: #{docking_score_predictor.3} parent=107 // pred_check_branch
          %805 = sbr.rel (%p803) target = $region148
        $region147: #{docking_score_predictor.3} parent=107 // pred_region
          %807 = dma.done [#allocation17], 256
        $region148: #{docking_score_predictor.3} parent=107 // pred_fallthru
          _
        // Predicated region
        $region149: #{docking_score_predictor.3} parent=107 // pred_check
          %p808 = pneg %p339
        $region150: #{docking_score_predictor.3} parent=107 // pred_check_branch
          %810 = sbr.rel (%p808) target = $region152
        $region151: #{docking_score_predictor.3} parent=107 // pred_region
          %812 = dma.done [#allocation17], 16
        $region152: #{docking_score_predictor.3} parent=107 // pred_fallthru
          _
        // Predicated region
        $region153: #{docking_score_predictor.3} parent=107 // pred_check
          %p813 = pneg %p360
        $region154: #{docking_score_predictor.3} parent=107 // pred_check_branch
          %815 = sbr.rel (%p813) target = $region156
        $region155: #{docking_score_predictor.3} parent=107 // pred_region
          %817 = dma.done [#allocation20], 16
        $region156: #{docking_score_predictor.3} parent=107 // pred_fallthru
          _
        // Predicated region
        $region157: #{docking_score_predictor.3} parent=107 // pred_check
          %p818 = pneg %p381
        $region158: #{docking_score_predictor.3} parent=107 // pred_check_branch
          %820 = sbr.rel (%p818) target = $region160
        $region159: #{docking_score_predictor.3} parent=107 // pred_region
          %822 = dma.done [#allocation20], 16
        $region160: #{docking_score_predictor.3} parent=107 // pred_fallthru
          _
        %p823 = scmp.lt.s32.totalorder %s40, 1
        %s824 = scalar_select %p823, %s40, 1
        %s825 = smul.addr %s824, 8
        %s826 = scalar_lea.vmem %s0, %s825
        %p827 = pneg %p61
        %p828 = pneg %p58
        %p829 = scmp.lt.s32.totalorder %s40, 1
        %s830 = scalar_select %p829, %s40, 1
        %s831 = smul.addr %s830, 8
        %s832 = scalar_lea.vmem %s1, %s831
        %p833 = pneg %p87
        %p834 = pneg %p84
        %p835 = pneg %p108
        %p836 = pneg %p105
        %p837 = pneg %p129
        %p838 = pneg %p126
        %p839 = pneg %p150
        %p840 = pneg %p147
        %p841 = pneg %p171
        %p842 = pneg %p168
        %p843 = pneg %p192
        %p844 = pneg %p189
        %p845 = pneg %p213
        %p846 = pneg %p210
        %p847 = pneg %p234
        %p848 = pneg %p231
        %p849 = pneg %p255
        %p850 = pneg %p252
        %p851 = pneg %p276
        %p852 = pneg %p273
        %p853 = pneg %p297
        %p854 = pneg %p294
        %p855 = pneg %p318
        %p856 = pneg %p315
        %p857 = pneg %p339
        %p858 = pneg %p336
        %p859 = pneg %p360
        %p860 = pneg %p357
        %p861 = pneg %p381
        %p862 = pneg %p378
        %p863 = pneg %p402
        %p864 = pneg %p399
        %p865 = pneg %p423
        %p866 = pneg %p420
        %p867 = pneg %p444
        %p868 = pneg %p441
        %p869 = pneg %p465
        %p870 = pneg %p462
        %p871 = pneg %p486
        %p872 = pneg %p483
        %p873 = pneg %p507
        %p874 = pneg %p504
        %p875 = pneg %p533
        %p876 = pneg %p530
        %p877 = scmp.lt.s32.totalorder %s40, 1
        %s878 = scalar_select %p877, %s40, 1
        %s879 = smul.addr %s878, 8
        %s880 = scalar_lea.vmem %s22, %s879
        %p881 = scmp.lt.s32.totalorder %s40, 1
        %s882 = scalar_select %p881, %s40, 1
        %s883 = smul.addr %s882, 8
        %s884 = scalar_lea.vmem %s0, %s883
        %p885 = scmp.lt.s32.totalorder %s40, 1
        %s886 = scalar_select %p885, %s40, 1
        %s887 = smul.addr %s886, 8
        %s888 = scalar_lea.vmem %s1, %s887
        %p889 = scmp.lt.s32.totalorder %s40, 1
        %s890 = scalar_select %p889, %s40, 1
        %s891 = smul.addr %s890, 8
        %s892 = scalar_lea.vmem %s22, %s891
        %v894 = vld [vmem:[%s884] sm:$0xff]
        %v895 = vld [vmem:[%s888] sm:$0xff]
        %v896 = vlaneseq
        %v897 = vand.u32 %v896, 127
        %vm898 = vcmp.ge.s32.totalorder %v897, 0
        %vm899 = vcmp.lt.s32.totalorder %v897, 8
        %vm900 = vmand %vm898, %vm899
        %v901 = vsel %vm900, 1, 0
        %v902 = vcvt.s32.f32 %v901
        %vm903 = vcmp.ge.s32.totalorder %v897, 8
        %vm904 = vcmp.lt.s32.totalorder %v897, 16
        %vm905 = vmand %vm903, %vm904
        %v906 = vsel %vm905, 1, 0
        %v907 = vcvt.s32.f32 %v906
        %vm908 = vcmp.ge.s32.totalorder %v897, 16
        %vm909 = vcmp.lt.s32.totalorder %v897, 24
        %vm910 = vmand %vm908, %vm909
        %v911 = vsel %vm910, 1, 0
        %v912 = vcvt.s32.f32 %v911
        %vm913 = vcmp.ge.s32.totalorder %v897, 24
        %vm914 = vcmp.lt.s32.totalorder %v897, 32
        %vm915 = vmand %vm913, %vm914
        %v916 = vsel %vm915, 1, 0
        %v917 = vcvt.s32.f32 %v916
        %v918 = vld [vmem:[%s2] sm:$0xf]
        %v919 = vld [vmem:[%s2 + $0x4] sm:$0xf]
        %v920 = vld [vmem:[%s2 + $0x8] sm:$0xf]
        %v921 = vld [vmem:[%s2 + $0xc] sm:$0xf]
        %v922 = vld [vmem:[#allocation2] sm:$0x1]
        %v923 = vpack.c.bf16 %v894, %v894
        %v925 = vperm.slane %v922, 0
        %v931 = vunpack.c.l.b16 %v918
        %v932 = vunpack.c.l.b16 %v919
        %v933 = vunpack.c.l.b16 %v920
        %v934 = vunpack.c.l.b16 %v921
        %v935 = vpack.c.b16 %v932, %v931
        %v936 = vpack.c.b16 %v934, %v933
        %vm939 = vcmask 261120
        %v941 = vsel %vm939, %v923, 0
        %943 = vmatpush.bf16.msra.mxu0 0
        %944 = vmatpush.bf16.msra.mxu0 0
        %945 = vmatpush.bf16.msra.mxu0 0
        %946 = vmatpush.bf16.msra.mxu0 0
        %947 = vmatpush.bf16.msra.mxu0 0
        %948 = vmatpush.bf16.msra.mxu0 0
        %949 = vmatpush.bf16.msra.mxu0 %v936
        %950 = vmatpush.bf16.msra.mxu0 %v935
        %951 = vmatmul.bf16.gmra.mxu0 %v941
        %v952 = vpop.f32.mrf.mxu0
        %v953 = vadd.f32 %v925, %v952
        %v954 = vpop.f32.mrf.mxu0
        %955 = vdwg.mxu0
        %956 = vrot.lane.b32.xlu0 %v935, 96
        %v957 = vpop.permute.xlu0 %956
        %958 = vrot.lane.b32.xlu0 %v936, 96
        %v959 = vpop.permute.xlu0 %958
        %962 = vrot.lane.b32.xlu0 %v925, 96
        %v963 = vpop.permute.xlu0 %962
        %965 = vmatpush.bf16.msra.mxu0 0
        %966 = vmatpush.bf16.msra.mxu0 0
        %967 = vmatpush.bf16.msra.mxu0 0
        %968 = vmatpush.bf16.msra.mxu0 0
        %969 = vmatpush.bf16.msra.mxu0 0
        %970 = vmatpush.bf16.msra.mxu0 0
        %971 = vmatpush.bf16.msra.mxu0 %v959
        %972 = vmatpush.bf16.msra.mxu0 %v957
        %973 = vmatmul.bf16.gmra.mxu0 %v941
        %v974 = vpop.f32.mrf.mxu0
        %v975 = vadd.f32 %v963, %v974
        %v976 = vpop.f32.mrf.mxu0
        %977 = vdwg.mxu0
        %978 = vrot.lane.b32.xlu0 %v935, 64
        %v979 = vpop.permute.xlu0 %978
        %980 = vrot.lane.b32.xlu0 %v936, 64
        %v981 = vpop.permute.xlu0 %980
        %984 = vrot.lane.b32.xlu0 %v925, 64
        %v985 = vpop.permute.xlu0 %984
        %987 = vmatpush.bf16.msra.mxu0 0
        %988 = vmatpush.bf16.msra.mxu0 0
        %989 = vmatpush.bf16.msra.mxu0 0
        %990 = vmatpush.bf16.msra.mxu0 0
        %991 = vmatpush.bf16.msra.mxu0 0
        %992 = vmatpush.bf16.msra.mxu0 0
        %993 = vmatpush.bf16.msra.mxu0 %v981
        %994 = vmatpush.bf16.msra.mxu0 %v979
        %995 = vmatmul.bf16.gmra.mxu0 %v941
        %v996 = vpop.f32.mrf.mxu0
        %v997 = vadd.f32 %v985, %v996
        %v998 = vpop.f32.mrf.mxu0
        %999 = vdwg.mxu0
        %v1000 = vpack.c.bf16 %v975, %v975
        %v1001 = vmul.f32 %v953, %v902
        %v1002 = vpack.c.bf16 %v1001, %v1001
        %v1004 = vsel %vm939, %v1002, 0
        %v1007 = vsel %vm939, %v1000, 0
        %1009 = vmatpush.bf16.xpose.msra.mxu0 0
        %1010 = vmatpush.bf16.xpose.msra.mxu0 0
        %1011 = vmatpush.bf16.xpose.msra.mxu0 0
        %1012 = vmatpush.bf16.xpose.msra.mxu0 0
        %1013 = vmatpush.bf16.xpose.msra.mxu0 0
        %1014 = vmatpush.bf16.xpose.msra.mxu0 0
        %1015 = vmatpush.bf16.xpose.msra.mxu0 0
        %1016 = vmatpush.bf16.xpose.msra.mxu0 %v1007
        %1017 = vmatmul.bf16.gmra.mxu0 %v1004
        %v1018 = vpop.f32.mrf.mxu0
        %v1019 = vadd.f32 0.0, %v1018
        %v1020 = vpop.f32.mrf.mxu0
        %1021 = vdwg.mxu0
        %v1022 = vmul.f32 %v1019, 0.35355338
        %vm1023 = vcmask 64512
        %v1024 = vsel %vm1023, %v1022, -inf
        %1025 = vmax.xlane.f32.xlu0 %v1024
        %v1026 = vpop.xlane.xlu0 %1025
        %v1027 = vsub.f32 %v1022, %v1026
        %v1028 = vmul.f32 %v1027, 1.442695
        %v1029 = vpow.pop %v1028
        %v1030 = vsel %vm1023, %v1029, 0.0
        %1031 = vadd.xlane.f32.xlu0 %v1030
        %v1032 = vpop.xlane.xlu0 %1031
        %v1033 = vrcp.pop %v1032
        %v1034 = vmul.f32 %v1029, %v1033
        %v1035 = vpack.c.bf16 %v1034, %v1034
        %v1036 = vmul.f32 %v997, %v902
        %v1037 = vpack.c.bf16 %v1036, %v1036
        %v1038 = vmul.f32 %v953, %v907
        %v1039 = vpack.c.bf16 %v1038, %v1038
        %v1041 = vsel %vm939, %v1039, 0
        %1043 = vmatpush.bf16.xpose.msra.mxu0 0
        %1044 = vmatpush.bf16.xpose.msra.mxu0 0
        %1045 = vmatpush.bf16.xpose.msra.mxu0 0
        %1046 = vmatpush.bf16.xpose.msra.mxu0 0
        %1047 = vmatpush.bf16.xpose.msra.mxu0 0
        %1048 = vmatpush.bf16.xpose.msra.mxu0 0
        %1049 = vmatpush.bf16.xpose.msra.mxu0 0
        %1050 = vmatpush.bf16.xpose.msra.mxu0 %v1007
        %1051 = vmatmul.bf16.gmra.mxu0 %v1041
        %v1052 = vpop.f32.mrf.mxu0
        %v1053 = vadd.f32 0.0, %v1052
        %v1054 = vpop.f32.mrf.mxu0
        %1055 = vdwg.mxu0
        %v1056 = vmul.f32 %v1053, 0.35355338
        %v1057 = vsel %vm1023, %v1056, -inf
        %1058 = vmax.xlane.f32.xlu0 %v1057
        %v1059 = vpop.xlane.xlu0 %1058
        %v1060 = vsub.f32 %v1056, %v1059
        %v1061 = vmul.f32 %v1060, 1.442695
        %v1062 = vpow.pop %v1061
        %v1063 = vsel %vm1023, %v1062, 0.0
        %1064 = vadd.xlane.f32.xlu0 %v1063
        %v1065 = vpop.xlane.xlu0 %1064
        %v1066 = vrcp.pop %v1065
        %v1067 = vmul.f32 %v1062, %v1066
        %v1068 = vpack.c.bf16 %v1067, %v1067
        %v1069 = vmul.f32 %v997, %v907
        %v1070 = vpack.c.bf16 %v1069, %v1069
        %v1072 = vsel %vm1023, %v1068, 0
        %vm1074 = vcmask 1043456
        %v1076 = vsel %vm1074, %v1070, 0
        %1078 = vmatpush.bf16.msra.mxu0 0
        %1079 = vmatpush.bf16.msra.mxu0 0
        %1080 = vmatpush.bf16.msra.mxu0 0
        %1081 = vmatpush.bf16.msra.mxu0 0
        %1082 = vmatpush.bf16.msra.mxu0 0
        %1083 = vmatpush.bf16.msra.mxu0 0
        %1084 = vmatpush.bf16.msra.mxu0 0
        %1085 = vmatpush.bf16.msra.mxu0 %v1076
        %1086 = vmatmul.bf16.gmra.mxu0 %v1072
        %v1087 = vpop.f32.mrf.mxu0
        %v1088 = vadd.f32 0.0, %v1087
        %v1089 = vpop.f32.mrf.mxu0
        %1090 = vdwg.mxu0
        %v1092 = vsel %vm1023, %v1035, 0
        %v1095 = vsel %vm1074, %v1037, 0
        %1097 = vmatpush.bf16.msra.mxu0 0
        %1098 = vmatpush.bf16.msra.mxu0 0
        %1099 = vmatpush.bf16.msra.mxu0 0
        %1100 = vmatpush.bf16.msra.mxu0 0
        %1101 = vmatpush.bf16.msra.mxu0 0
        %1102 = vmatpush.bf16.msra.mxu0 0
        %1103 = vmatpush.bf16.msra.mxu0 0
        %1104 = vmatpush.bf16.msra.mxu0 %v1095
        %1105 = vmatmul.bf16.gmra.mxu0 %v1092
        %v1106 = vpop.f32.mrf.mxu0
        %v1107 = vadd.f32 %v1088, %v1106
        %v1108 = vpop.f32.mrf.mxu0
        %1109 = vdwg.mxu0
        %v1110 = vmul.f32 %v953, %v912
        %v1111 = vpack.c.bf16 %v1110, %v1110
        %v1113 = vsel %vm939, %v1111, 0
        %1115 = vmatpush.bf16.xpose.msra.mxu0 0
        %1116 = vmatpush.bf16.xpose.msra.mxu0 0
        %1117 = vmatpush.bf16.xpose.msra.mxu0 0
        %1118 = vmatpush.bf16.xpose.msra.mxu0 0
        %1119 = vmatpush.bf16.xpose.msra.mxu0 0
        %1120 = vmatpush.bf16.xpose.msra.mxu0 0
        %1121 = vmatpush.bf16.xpose.msra.mxu0 0
        %1122 = vmatpush.bf16.xpose.msra.mxu0 %v1007
        %1123 = vmatmul.bf16.gmra.mxu0 %v1113
        %v1124 = vpop.f32.mrf.mxu0
        %v1125 = vadd.f32 0.0, %v1124
        %v1126 = vpop.f32.mrf.mxu0
        %1127 = vdwg.mxu0
        %v1128 = vmul.f32 %v1125, 0.35355338
        %v1129 = vsel %vm1023, %v1128, -inf
        %1130 = vmax.xlane.f32.xlu0 %v1129
        %v1131 = vpop.xlane.xlu0 %1130
        %v1132 = vsub.f32 %v1128, %v1131
        %v1133 = vmul.f32 %v1132, 1.442695
        %v1134 = vpow.pop %v1133
        %v1135 = vsel %vm1023, %v1134, 0.0
        %1136 = vadd.xlane.f32.xlu0 %v1135
        %v1137 = vpop.xlane.xlu0 %1136
        %v1138 = vrcp.pop %v1137
        %v1139 = vmul.f32 %v1134, %v1138
        %v1140 = vpack.c.bf16 %v1139, %v1139
        %v1141 = vmul.f32 %v997, %v912
        %v1142 = vpack.c.bf16 %v1141, %v1141
        %v1144 = vsel %vm1023, %v1140, 0
        %v1147 = vsel %vm1074, %v1142, 0
        %1149 = vmatpush.bf16.msra.mxu0 0
        %1150 = vmatpush.bf16.msra.mxu0 0
        %1151 = vmatpush.bf16.msra.mxu0 0
        %1152 = vmatpush.bf16.msra.mxu0 0
        %1153 = vmatpush.bf16.msra.mxu0 0
        %1154 = vmatpush.bf16.msra.mxu0 0
        %1155 = vmatpush.bf16.msra.mxu0 0
        %1156 = vmatpush.bf16.msra.mxu0 %v1147
        %1157 = vmatmul.bf16.gmra.mxu0 %v1144
        %v1158 = vpop.f32.mrf.mxu0
        %v1159 = vadd.f32 0.0, %v1158
        %v1160 = vpop.f32.mrf.mxu0
        %1161 = vdwg.mxu0
        %v1162 = vadd.f32 %v1107, %v1159
        %v1163 = vmul.f32 %v953, %v917
        %v1164 = vpack.c.bf16 %v1163, %v1163
        %v1166 = vsel %vm939, %v1164, 0
        %1168 = vmatpush.bf16.xpose.msra.mxu0 0
        %1169 = vmatpush.bf16.xpose.msra.mxu0 0
        %1170 = vmatpush.bf16.xpose.msra.mxu0 0
        %1171 = vmatpush.bf16.xpose.msra.mxu0 0
        %1172 = vmatpush.bf16.xpose.msra.mxu0 0
        %1173 = vmatpush.bf16.xpose.msra.mxu0 0
        %1174 = vmatpush.bf16.xpose.msra.mxu0 0
        %1175 = vmatpush.bf16.xpose.msra.mxu0 %v1007
        %1176 = vmatmul.bf16.gmra.mxu0 %v1166
        %v1177 = vpop.f32.mrf.mxu0
        %v1178 = vadd.f32 0.0, %v1177
        %v1179 = vpop.f32.mrf.mxu0
        %1180 = vdwg.mxu0
        %v1181 = vmul.f32 %v1178, 0.35355338
        %v1182 = vsel %vm1023, %v1181, -inf
        %1183 = vmax.xlane.f32.xlu0 %v1182
        %v1184 = vpop.xlane.xlu0 %1183
        %v1185 = vsub.f32 %v1181, %v1184
        %v1186 = vmul.f32 %v1185, 1.442695
        %v1187 = vpow.pop %v1186
        %v1188 = vsel %vm1023, %v1187, 0.0
        %1189 = vadd.xlane.f32.xlu0 %v1188
        %v1190 = vpop.xlane.xlu0 %1189
        %v1191 = vrcp.pop %v1190
        %v1192 = vmul.f32 %v1187, %v1191
        %v1193 = vpack.c.bf16 %v1192, %v1192
        %v1194 = vmul.f32 %v997, %v917
        %v1195 = vpack.c.bf16 %v1194, %v1194
        %v1197 = vsel %vm1023, %v1193, 0
        %v1200 = vsel %vm1074, %v1195, 0
        %1202 = vmatpush.bf16.msra.mxu0 0
        %1203 = vmatpush.bf16.msra.mxu0 0
        %1204 = vmatpush.bf16.msra.mxu0 0
        %1205 = vmatpush.bf16.msra.mxu0 0
        %1206 = vmatpush.bf16.msra.mxu0 0
        %1207 = vmatpush.bf16.msra.mxu0 0
        %1208 = vmatpush.bf16.msra.mxu0 0
        %1209 = vmatpush.bf16.msra.mxu0 %v1200
        %1210 = vmatmul.bf16.gmra.mxu0 %v1197
        %v1211 = vpop.f32.mrf.mxu0
        %v1212 = vadd.f32 0.0, %v1211
        %v1213 = vpop.f32.mrf.mxu0
        %1214 = vdwg.mxu0
        %v1215 = vadd.f32 %v1162, %v1212
        %v1216 = vld [vmem:[#allocation4] sm:$0xf]
        %v1217 = vld [vmem:[#allocation4 + $0x4] sm:$0xf]
        %v1218 = vld [vmem:[#allocation4 + $0x8] sm:$0xf]
        %v1219 = vld [vmem:[#allocation4 + $0xc] sm:$0xf]
        %v1220 = vld [vmem:[#allocation6] sm:$0x1]
        %v1221 = vpack.c.bf16 %v1215, %v1215
        %v1223 = vperm.slane %v1220, 0
        %v1229 = vunpack.c.l.b16 %v1216
        %v1230 = vunpack.c.l.b16 %v1217
        %v1231 = vunpack.c.l.b16 %v1218
        %v1232 = vunpack.c.l.b16 %v1219
        %v1233 = vpack.c.b16 %v1230, %v1229
        %v1234 = vpack.c.b16 %v1232, %v1231
        %v1238 = vsel %vm939, %v1221, 0
        %1240 = vmatpush.bf16.msra.mxu0 0
        %1241 = vmatpush.bf16.msra.mxu0 0
        %1242 = vmatpush.bf16.msra.mxu0 0
        %1243 = vmatpush.bf16.msra.mxu0 0
        %1244 = vmatpush.bf16.msra.mxu0 0
        %1245 = vmatpush.bf16.msra.mxu0 0
        %1246 = vmatpush.bf16.msra.mxu0 %v1234
        %1247 = vmatpush.bf16.msra.mxu0 %v1233
        %1248 = vmatmul.bf16.gmra.mxu0 %v1238
        %v1249 = vpop.f32.mrf.mxu0
        %v1250 = vadd.f32 %v1223, %v1249
        %v1251 = vpop.f32.mrf.mxu0
        %1252 = vdwg.mxu0
        %v1253 = vld [vmem:[#allocation7] sm:$0x1]
        %v1254 = vld [vmem:[#allocation9] sm:$0x1]
        %v1255 = vadd.f32 %v1250, %v894
        %v1256 = vsel %vm939, %v1255, 0.0
        %1257 = vadd.xlane.f32.xlu0 %v1256
        %v1258 = vpop.xlane.xlu0 %1257
        %v1259 = vrcp.pop 32.0
        %v1260 = vmul.f32 32.0, %v1259
        %v1261 = vsub.f32 1.0, %v1260
        %v1262 = vmul.f32 %v1259, %v1261
        %v1263 = vadd.f32 %v1259, %v1262
        %vm1264 = vweird.f32 %v1259
        %v1265 = vsel %vm1264, %v1259, %v1263
        %v1266 = vmul.f32 %v1258, %v1265
        %v1267 = vsub.f32 %v1255, %v1266
        %v1268 = vmul.f32 %v1267, %v1267
        %v1269 = vsel %vm939, %v1268, 0.0
        %1270 = vadd.xlane.f32.xlu0 %v1269
        %v1271 = vpop.xlane.xlu0 %1270
        %v1272 = vmul.f32 %v1271, %v1265
        %v1273 = vadd.f32 %v1272, 1e-05
        %v1274 = vrsqrt.pop %v1273
        %v1275 = vmul.f32 %v1274, %v1273
        %v1276 = vmul.f32 %v1275, %v1274
        %v1277 = vmul.f32 0.5, %v1276
        %v1278 = vsub.f32 1.5, %v1277
        %v1279 = vmul.f32 %v1274, %v1278
        %vm1280 = vweird.f32 %v1273
        %vm1281 = vweird.f32 %v1274
        %vm1282 = vmor %vm1280, %vm1281
        %v1283 = vsel %vm1282, %v1274, %v1279
        %v1284 = vmul.f32 %v1267, %v1283
        %v1286 = vperm.slane %v1253, 0
        %v1288 = vmul.f32 %v1284, %v1286
        %v1290 = vperm.slane %v1254, 0
        %v1292 = vadd.f32 %v1288, %v1290
        %v1293 = vld [vmem:[#allocation10] sm:$0xf]
        %v1294 = vld [vmem:[#allocation10 + $0x4] sm:$0xf]
        %v1295 = vld [vmem:[#allocation10 + $0x8] sm:$0xf]
        %v1296 = vld [vmem:[#allocation10 + $0xc] sm:$0xf]
        %v1297 = vld [vmem:[#allocation12] sm:$0x1]
        %v1298 = vpack.c.bf16 %v1292, %v1292
        %v1300 = vperm.slane %v1297, 0
        %v1306 = vunpack.c.l.b16 %v1293
        %v1307 = vunpack.c.l.b16 %v1294
        %v1308 = vunpack.c.l.b16 %v1295
        %v1309 = vunpack.c.l.b16 %v1296
        %v1310 = vpack.c.b16 %v1307, %v1306
        %v1311 = vpack.c.b16 %v1309, %v1308
        %v1315 = vsel %vm939, %v1298, 0
        %1317 = vmatpush.bf16.msra.mxu0 0
        %1318 = vmatpush.bf16.msra.mxu0 0
        %1319 = vmatpush.bf16.msra.mxu0 0
        %1320 = vmatpush.bf16.msra.mxu0 0
        %1321 = vmatpush.bf16.msra.mxu0 0
        %1322 = vmatpush.bf16.msra.mxu0 0
        %1323 = vmatpush.bf16.msra.mxu0 %v1311
        %1324 = vmatpush.bf16.msra.mxu0 %v1310
        %1325 = vmatmul.bf16.gmra.mxu0 %v1315
        %v1326 = vpop.f32.mrf.mxu0
        %v1327 = vadd.f32 %v1300, %v1326
        %v1328 = vpop.f32.mrf.mxu0
        %1329 = vdwg.mxu0
        %v1330 = vld [vmem:[#allocation13] sm:$0xf]
        %v1331 = vld [vmem:[#allocation13 + $0x4] sm:$0xf]
        %v1332 = vld [vmem:[#allocation13 + $0x8] sm:$0xf]
        %v1333 = vld [vmem:[#allocation13 + $0xc] sm:$0xf]
        %v1334 = vld [vmem:[#allocation15] sm:$0x1]
        %v1335 = vpack.c.bf16 %v895, %v895
        %v1337 = vperm.slane %v1334, 0
        %v1343 = vunpack.c.l.b16 %v1330
        %v1344 = vunpack.c.l.b16 %v1331
        %v1345 = vunpack.c.l.b16 %v1332
        %v1346 = vunpack.c.l.b16 %v1333
        %v1347 = vpack.c.b16 %v1344, %v1343
        %v1348 = vpack.c.b16 %v1346, %v1345
        %v1352 = vsel %vm939, %v1335, 0
        %1354 = vmatpush.bf16.msra.mxu0 0
        %1355 = vmatpush.bf16.msra.mxu0 0
        %1356 = vmatpush.bf16.msra.mxu0 0
        %1357 = vmatpush.bf16.msra.mxu0 0
        %1358 = vmatpush.bf16.msra.mxu0 0
        %1359 = vmatpush.bf16.msra.mxu0 0
        %1360 = vmatpush.bf16.msra.mxu0 %v1348
        %1361 = vmatpush.bf16.msra.mxu0 %v1347
        %1362 = vmatmul.bf16.gmra.mxu0 %v1352
        %v1363 = vpop.f32.mrf.mxu0
        %v1364 = vadd.f32 %v1337, %v1363
        %v1365 = vpop.f32.mrf.mxu0
        %1366 = vdwg.mxu0
        %1367 = vrot.lane.b32.xlu0 %v1347, 96
        %v1368 = vpop.permute.xlu0 %1367
        %1369 = vrot.lane.b32.xlu0 %v1348, 96
        %v1370 = vpop.permute.xlu0 %1369
        %1373 = vrot.lane.b32.xlu0 %v1337, 96
        %v1374 = vpop.permute.xlu0 %1373
        %1376 = vmatpush.bf16.msra.mxu0 0
        %1377 = vmatpush.bf16.msra.mxu0 0
        %1378 = vmatpush.bf16.msra.mxu0 0
        %1379 = vmatpush.bf16.msra.mxu0 0
        %1380 = vmatpush.bf16.msra.mxu0 0
        %1381 = vmatpush.bf16.msra.mxu0 0
        %1382 = vmatpush.bf16.msra.mxu0 %v1370
        %1383 = vmatpush.bf16.msra.mxu0 %v1368
        %1384 = vmatmul.bf16.gmra.mxu0 %v1352
        %v1385 = vpop.f32.mrf.mxu0
        %v1386 = vadd.f32 %v1374, %v1385
        %v1387 = vpop.f32.mrf.mxu0
        %1388 = vdwg.mxu0
        %v1389 = vpack.c.bf16 %v1364, %v1364
        %v1390 = vmul.f32 %v1327, %v902
        %v1391 = vpack.c.bf16 %v1390, %v1390
        %v1393 = vsel %vm939, %v1391, 0
        %v1396 = vsel %vm939, %v1389, 0
        %1398 = vmatpush.bf16.xpose.msra.mxu0 0
        %1399 = vmatpush.bf16.xpose.msra.mxu0 0
        %1400 = vmatpush.bf16.xpose.msra.mxu0 0
        %1401 = vmatpush.bf16.xpose.msra.mxu0 0
        %1402 = vmatpush.bf16.xpose.msra.mxu0 0
        %1403 = vmatpush.bf16.xpose.msra.mxu0 0
        %1404 = vmatpush.bf16.xpose.msra.mxu0 0
        %1405 = vmatpush.bf16.xpose.msra.mxu0 %v1396
        %1406 = vmatmul.bf16.gmra.mxu0 %v1393
        %v1407 = vpop.f32.mrf.mxu0
        %v1408 = vadd.f32 0.0, %v1407
        %v1409 = vpop.f32.mrf.mxu0
        %1410 = vdwg.mxu0
        %v1411 = vmul.f32 %v1408, 0.35355338
        %v1412 = vsel %vm1023, %v1411, -inf
        %1413 = vmax.xlane.f32.xlu0 %v1412
        %v1414 = vpop.xlane.xlu0 %1413
        %v1415 = vsub.f32 %v1411, %v1414
        %v1416 = vmul.f32 %v1415, 1.442695
        %v1417 = vpow.pop %v1416
        %v1418 = vsel %vm1023, %v1417, 0.0
        %1419 = vadd.xlane.f32.xlu0 %v1418
        %v1420 = vpop.xlane.xlu0 %1419
        %v1421 = vrcp.pop %v1420
        %v1422 = vmul.f32 %v1417, %v1421
        %v1423 = vpack.c.bf16 %v1422, %v1422
        %v1424 = vmul.f32 %v1386, %v902
        %v1425 = vpack.c.bf16 %v1424, %v1424
        %v1426 = vmul.f32 %v1327, %v907
        %v1427 = vpack.c.bf16 %v1426, %v1426
        %v1429 = vsel %vm939, %v1427, 0
        %1431 = vmatpush.bf16.xpose.msra.mxu0 0
        %1432 = vmatpush.bf16.xpose.msra.mxu0 0
        %1433 = vmatpush.bf16.xpose.msra.mxu0 0
        %1434 = vmatpush.bf16.xpose.msra.mxu0 0
        %1435 = vmatpush.bf16.xpose.msra.mxu0 0
        %1436 = vmatpush.bf16.xpose.msra.mxu0 0
        %1437 = vmatpush.bf16.xpose.msra.mxu0 0
        %1438 = vmatpush.bf16.xpose.msra.mxu0 %v1396
        %1439 = vmatmul.bf16.gmra.mxu0 %v1429
        %v1440 = vpop.f32.mrf.mxu0
        %v1441 = vadd.f32 0.0, %v1440
        %v1442 = vpop.f32.mrf.mxu0
        %1443 = vdwg.mxu0
        %v1444 = vmul.f32 %v1441, 0.35355338
        %v1445 = vsel %vm1023, %v1444, -inf
        %1446 = vmax.xlane.f32.xlu0 %v1445
        %v1447 = vpop.xlane.xlu0 %1446
        %v1448 = vsub.f32 %v1444, %v1447
        %v1449 = vmul.f32 %v1448, 1.442695
        %v1450 = vpow.pop %v1449
        %v1451 = vsel %vm1023, %v1450, 0.0
        %1452 = vadd.xlane.f32.xlu0 %v1451
        %v1453 = vpop.xlane.xlu0 %1452
        %v1454 = vrcp.pop %v1453
        %v1455 = vmul.f32 %v1450, %v1454
        %v1456 = vpack.c.bf16 %v1455, %v1455
        %v1457 = vmul.f32 %v1386, %v907
        %v1458 = vpack.c.bf16 %v1457, %v1457
        %v1460 = vsel %vm1023, %v1456, 0
        %v1463 = vsel %vm1074, %v1458, 0
        %1465 = vmatpush.bf16.msra.mxu0 0
        %1466 = vmatpush.bf16.msra.mxu0 0
        %1467 = vmatpush.bf16.msra.mxu0 0
        %1468 = vmatpush.bf16.msra.mxu0 0
        %1469 = vmatpush.bf16.msra.mxu0 0
        %1470 = vmatpush.bf16.msra.mxu0 0
        %1471 = vmatpush.bf16.msra.mxu0 0
        %1472 = vmatpush.bf16.msra.mxu0 %v1463
        %1473 = vmatmul.bf16.gmra.mxu0 %v1460
        %v1474 = vpop.f32.mrf.mxu0
        %v1475 = vadd.f32 0.0, %v1474
        %v1476 = vpop.f32.mrf.mxu0
        %1477 = vdwg.mxu0
        %v1479 = vsel %vm1023, %v1423, 0
        %v1482 = vsel %vm1074, %v1425, 0
        %1484 = vmatpush.bf16.msra.mxu0 0
        %1485 = vmatpush.bf16.msra.mxu0 0
        %1486 = vmatpush.bf16.msra.mxu0 0
        %1487 = vmatpush.bf16.msra.mxu0 0
        %1488 = vmatpush.bf16.msra.mxu0 0
        %1489 = vmatpush.bf16.msra.mxu0 0
        %1490 = vmatpush.bf16.msra.mxu0 0
        %1491 = vmatpush.bf16.msra.mxu0 %v1482
        %1492 = vmatmul.bf16.gmra.mxu0 %v1479
        %v1493 = vpop.f32.mrf.mxu0
        %v1494 = vadd.f32 %v1475, %v1493
        %v1495 = vpop.f32.mrf.mxu0
        %1496 = vdwg.mxu0
        %v1497 = vmul.f32 %v1327, %v912
        %v1498 = vpack.c.bf16 %v1497, %v1497
        %v1500 = vsel %vm939, %v1498, 0
        %1502 = vmatpush.bf16.xpose.msra.mxu0 0
        %1503 = vmatpush.bf16.xpose.msra.mxu0 0
        %1504 = vmatpush.bf16.xpose.msra.mxu0 0
        %1505 = vmatpush.bf16.xpose.msra.mxu0 0
        %1506 = vmatpush.bf16.xpose.msra.mxu0 0
        %1507 = vmatpush.bf16.xpose.msra.mxu0 0
        %1508 = vmatpush.bf16.xpose.msra.mxu0 0
        %1509 = vmatpush.bf16.xpose.msra.mxu0 %v1396
        %1510 = vmatmul.bf16.gmra.mxu0 %v1500
        %v1511 = vpop.f32.mrf.mxu0
        %v1512 = vadd.f32 0.0, %v1511
        %v1513 = vpop.f32.mrf.mxu0
        %1514 = vdwg.mxu0
        %v1515 = vmul.f32 %v1512, 0.35355338
        %v1516 = vsel %vm1023, %v1515, -inf
        %1517 = vmax.xlane.f32.xlu0 %v1516
        %v1518 = vpop.xlane.xlu0 %1517
        %v1519 = vsub.f32 %v1515, %v1518
        %v1520 = vmul.f32 %v1519, 1.442695
        %v1521 = vpow.pop %v1520
        %v1522 = vsel %vm1023, %v1521, 0.0
        %1523 = vadd.xlane.f32.xlu0 %v1522
        %v1524 = vpop.xlane.xlu0 %1523
        %v1525 = vrcp.pop %v1524
        %v1526 = vmul.f32 %v1521, %v1525
        %v1527 = vpack.c.bf16 %v1526, %v1526
        %v1528 = vmul.f32 %v1386, %v912
        %v1529 = vpack.c.bf16 %v1528, %v1528
        %v1531 = vsel %vm1023, %v1527, 0
        %v1534 = vsel %vm1074, %v1529, 0
        %1536 = vmatpush.bf16.msra.mxu0 0
        %1537 = vmatpush.bf16.msra.mxu0 0
        %1538 = vmatpush.bf16.msra.mxu0 0
        %1539 = vmatpush.bf16.msra.mxu0 0
        %1540 = vmatpush.bf16.msra.mxu0 0
        %1541 = vmatpush.bf16.msra.mxu0 0
        %1542 = vmatpush.bf16.msra.mxu0 0
        %1543 = vmatpush.bf16.msra.mxu0 %v1534
        %1544 = vmatmul.bf16.gmra.mxu0 %v1531
        %v1545 = vpop.f32.mrf.mxu0
        %v1546 = vadd.f32 0.0, %v1545
        %v1547 = vpop.f32.mrf.mxu0
        %1548 = vdwg.mxu0
        %v1549 = vadd.f32 %v1494, %v1546
        %v1550 = vmul.f32 %v1327, %v917
        %v1551 = vpack.c.bf16 %v1550, %v1550
        %v1553 = vsel %vm939, %v1551, 0
        %1555 = vmatpush.bf16.xpose.msra.mxu0 0
        %1556 = vmatpush.bf16.xpose.msra.mxu0 0
        %1557 = vmatpush.bf16.xpose.msra.mxu0 0
        %1558 = vmatpush.bf16.xpose.msra.mxu0 0
        %1559 = vmatpush.bf16.xpose.msra.mxu0 0
        %1560 = vmatpush.bf16.xpose.msra.mxu0 0
        %1561 = vmatpush.bf16.xpose.msra.mxu0 0
        %1562 = vmatpush.bf16.xpose.msra.mxu0 %v1396
        %1563 = vmatmul.bf16.gmra.mxu0 %v1553
        %v1564 = vpop.f32.mrf.mxu0
        %v1565 = vadd.f32 0.0, %v1564
        %v1566 = vpop.f32.mrf.mxu0
        %1567 = vdwg.mxu0
        %v1568 = vmul.f32 %v1565, 0.35355338
        %v1569 = vsel %vm1023, %v1568, -inf
        %1570 = vmax.xlane.f32.xlu0 %v1569
        %v1571 = vpop.xlane.xlu0 %1570
        %v1572 = vsub.f32 %v1568, %v1571
        %v1573 = vmul.f32 %v1572, 1.442695
        %v1574 = vpow.pop %v1573
        %v1575 = vsel %vm1023, %v1574, 0.0
        %1576 = vadd.xlane.f32.xlu0 %v1575
        %v1577 = vpop.xlane.xlu0 %1576
        %v1578 = vrcp.pop %v1577
        %v1579 = vmul.f32 %v1574, %v1578
        %v1580 = vpack.c.bf16 %v1579, %v1579
        %v1581 = vmul.f32 %v1386, %v917
        %v1582 = vpack.c.bf16 %v1581, %v1581
        %v1584 = vsel %vm1023, %v1580, 0
        %v1587 = vsel %vm1074, %v1582, 0
        %1589 = vmatpush.bf16.msra.mxu0 0
        %1590 = vmatpush.bf16.msra.mxu0 0
        %1591 = vmatpush.bf16.msra.mxu0 0
        %1592 = vmatpush.bf16.msra.mxu0 0
        %1593 = vmatpush.bf16.msra.mxu0 0
        %1594 = vmatpush.bf16.msra.mxu0 0
        %1595 = vmatpush.bf16.msra.mxu0 0
        %1596 = vmatpush.bf16.msra.mxu0 %v1587
        %1597 = vmatmul.bf16.gmra.mxu0 %v1584
        %v1598 = vpop.f32.mrf.mxu0
        %v1599 = vadd.f32 0.0, %v1598
        %v1600 = vpop.f32.mrf.mxu0
        %1601 = vdwg.mxu0
        %v1602 = vadd.f32 %v1549, %v1599
        %v1603 = vld [vmem:[#allocation16] sm:$0xf]
        %v1604 = vld [vmem:[#allocation16 + $0x4] sm:$0xf]
        %v1605 = vld [vmem:[#allocation16 + $0x8] sm:$0xf]
        %v1606 = vld [vmem:[#allocation16 + $0xc] sm:$0xf]
        %v1607 = vld [vmem:[#allocation18] sm:$0x1]
        %v1608 = vpack.c.bf16 %v1602, %v1602
        %v1610 = vperm.slane %v1607, 0
        %v1616 = vunpack.c.l.b16 %v1603
        %v1617 = vunpack.c.l.b16 %v1604
        %v1618 = vunpack.c.l.b16 %v1605
        %v1619 = vunpack.c.l.b16 %v1606
        %v1620 = vpack.c.b16 %v1617, %v1616
        %v1621 = vpack.c.b16 %v1619, %v1618
        %v1625 = vsel %vm939, %v1608, 0
        %1627 = vmatpush.bf16.msra.mxu0 0
        %1628 = vmatpush.bf16.msra.mxu0 0
        %1629 = vmatpush.bf16.msra.mxu0 0
        %1630 = vmatpush.bf16.msra.mxu0 0
        %1631 = vmatpush.bf16.msra.mxu0 0
        %1632 = vmatpush.bf16.msra.mxu0 0
        %1633 = vmatpush.bf16.msra.mxu0 %v1621
        %1634 = vmatpush.bf16.msra.mxu0 %v1620
        %1635 = vmatmul.bf16.gmra.mxu0 %v1625
        %v1636 = vpop.f32.mrf.mxu0
        %v1637 = vadd.f32 %v1610, %v1636
        %v1638 = vpop.f32.mrf.mxu0
        %1639 = vdwg.mxu0
        %v1640 = vld [vmem:[#allocation19] sm:$0x1]
        %v1641 = vld [vmem:[#allocation21] sm:$0x1]
        %v1642 = vadd.f32 %v1637, %v1292
        %v1643 = vsel %vm939, %v1642, 0.0
        %1644 = vadd.xlane.f32.xlu0 %v1643
        %v1645 = vpop.xlane.xlu0 %1644
        %v1646 = vmul.f32 %v1645, %v1265
        %v1647 = vsub.f32 %v1642, %v1646
        %v1648 = vmul.f32 %v1647, %v1647
        %v1649 = vsel %vm939, %v1648, 0.0
        %1650 = vadd.xlane.f32.xlu0 %v1649
        %v1651 = vpop.xlane.xlu0 %1650
        %v1652 = vmul.f32 %v1651, %v1265
        %v1653 = vadd.f32 %v1652, 1e-05
        %v1654 = vrsqrt.pop %v1653
        %v1655 = vmul.f32 %v1654, %v1653
        %v1656 = vmul.f32 %v1655, %v1654
        %v1657 = vmul.f32 0.5, %v1656
        %v1658 = vsub.f32 1.5, %v1657
        %v1659 = vmul.f32 %v1654, %v1658
        %vm1660 = vweird.f32 %v1653
        %vm1661 = vweird.f32 %v1654
        %vm1662 = vmor %vm1660, %vm1661
        %v1663 = vsel %vm1662, %v1654, %v1659
        %v1664 = vmul.f32 %v1647, %v1663
        %v1666 = vperm.slane %v1640, 0
        %v1668 = vmul.f32 %v1664, %v1666
        %v1670 = vperm.slane %v1641, 0
        %v1672 = vadd.f32 %v1668, %v1670
        %v1673 = vld [vmem:[%s16] sm:$0xf]
        %v1674 = vld [vmem:[%s16 + $0x4] sm:$0xf]
        %v1675 = vld [vmem:[%s16 + $0x8] sm:$0xf]
        %v1676 = vld [vmem:[%s16 + $0xc] sm:$0xf]
        %v1677 = vld [vmem:[%s17] sm:$0x1]
        %v1678 = vpack.c.bf16 %v1672, %v1672
        %v1680 = vperm.slane %v1677, 0
        %v1686 = vunpack.c.l.b16 %v1673
        %v1687 = vunpack.c.l.b16 %v1674
        %v1688 = vunpack.c.l.b16 %v1675
        %v1689 = vunpack.c.l.b16 %v1676
        %v1690 = vpack.c.b16 %v1687, %v1686
        %v1691 = vpack.c.b16 %v1689, %v1688
        %v1695 = vsel %vm939, %v1678, 0
        %1697 = vmatpush.bf16.msra.mxu0 0
        %1698 = vmatpush.bf16.msra.mxu0 0
        %1699 = vmatpush.bf16.msra.mxu0 0
        %1700 = vmatpush.bf16.msra.mxu0 0
        %1701 = vmatpush.bf16.msra.mxu0 0
        %1702 = vmatpush.bf16.msra.mxu0 0
        %1703 = vmatpush.bf16.msra.mxu0 %v1691
        %1704 = vmatpush.bf16.msra.mxu0 %v1690
        %1705 = vmatmul.bf16.gmra.mxu0 %v1695
        %v1706 = vpop.f32.mrf.mxu0
        %v1707 = vadd.f32 %v1680, %v1706
        %v1708 = vpop.f32.mrf.mxu0
        %1709 = vdwg.mxu0
        %v1710 = vmax.f32 %v1707, 0.0
        %v1711 = vld [vmem:[%s18] sm:$0xf]
        %v1712 = vld [vmem:[%s18 + $0x4] sm:$0xf]
        %v1713 = vld [vmem:[%s18 + $0x8] sm:$0xf]
        %v1714 = vld [vmem:[%s18 + $0xc] sm:$0xf]
        %v1715 = vld [vmem:[%s18 + $0x10] sm:$0xf]
        %v1716 = vld [vmem:[%s18 + $0x14] sm:$0xf]
        %v1717 = vld [vmem:[%s18 + $0x18] sm:$0xf]
        %v1718 = vld [vmem:[%s18 + $0x1c] sm:$0xf]
        %v1719 = vld [vmem:[%s19] sm:$0x1]
        %v1720 = vpack.c.bf16 %v1710, %v1710
        %v1722 = vperm.slane %v1719, 0
        %v1732 = vunpack.c.l.b16 %v1711
        %v1733 = vunpack.c.l.b16 %v1712
        %v1734 = vunpack.c.l.b16 %v1713
        %v1735 = vunpack.c.l.b16 %v1714
        %v1736 = vunpack.c.l.b16 %v1715
        %v1737 = vunpack.c.l.b16 %v1716
        %v1738 = vunpack.c.l.b16 %v1717
        %v1739 = vunpack.c.l.b16 %v1718
        %v1740 = vpack.c.b16 %v1733, %v1732
        %v1741 = vpack.c.b16 %v1735, %v1734
        %v1742 = vpack.c.b16 %v1737, %v1736
        %v1743 = vpack.c.b16 %v1739, %v1738
        %vm1748 = vcmask 523264
        %v1750 = vsel %vm1748, %v1720, 0
        %1752 = vmatpush.bf16.msra.mxu0 0
        %1753 = vmatpush.bf16.msra.mxu0 0
        %1754 = vmatpush.bf16.msra.mxu0 0
        %1755 = vmatpush.bf16.msra.mxu0 0
        %1756 = vmatpush.bf16.msra.mxu0 %v1743
        %1757 = vmatpush.bf16.msra.mxu0 %v1742
        %1758 = vmatpush.bf16.msra.mxu0 %v1741
        %1759 = vmatpush.bf16.msra.mxu0 %v1740
        %1760 = vmatmul.bf16.gmra.mxu0 %v1750
        %v1761 = vpop.f32.mrf.mxu0
        %v1762 = vadd.f32 %v1722, %v1761
        %v1763 = vpop.f32.mrf.mxu0
        %1764 = vdwg.mxu0
        %v1765 = vld [vmem:[%s20] sm:$0x1]
        %v1766 = vld [vmem:[%s21] sm:$0x1]
        %v1767 = vadd.f32 %v1762, %v1672
        %v1768 = vsel %vm939, %v1767, 0.0
        %1769 = vadd.xlane.f32.xlu0 %v1768
        %v1770 = vpop.xlane.xlu0 %1769
        %v1771 = vmul.f32 %v1770, %v1265
        %v1772 = vsub.f32 %v1767, %v1771
        %v1773 = vmul.f32 %v1772, %v1772
        %v1774 = vsel %vm939, %v1773, 0.0
        %1775 = vadd.xlane.f32.xlu0 %v1774
        %v1776 = vpop.xlane.xlu0 %1775
        %v1777 = vmul.f32 %v1776, %v1265
        %v1778 = vadd.f32 %v1777, 1e-05
        %v1779 = vrsqrt.pop %v1778
        %v1780 = vmul.f32 %v1779, %v1778
        %v1781 = vmul.f32 %v1780, %v1779
        %v1782 = vmul.f32 0.5, %v1781
        %v1783 = vsub.f32 1.5, %v1782
        %v1784 = vmul.f32 %v1779, %v1783
        %vm1785 = vweird.f32 %v1778
        %vm1786 = vweird.f32 %v1779
        %vm1787 = vmor %vm1785, %vm1786
        %v1788 = vsel %vm1787, %v1779, %v1784
        %v1789 = vmul.f32 %v1772, %v1788
        %v1791 = vperm.slane %v1765, 0
        %v1793 = vmul.f32 %v1789, %v1791
        %v1795 = vperm.slane %v1766, 0
        %v1797 = vadd.f32 %v1793, %v1795
        %1798 = vst.msk [vmem:[%s892] sm:$0xff] %vm939, %v1797
        %p1799 = scmp.lt.s32.totalorder %s40, 1
        %s1800 = scalar_select %p1799, %s40, 1
        %s1801 = smul.addr %s1800, 8
        %s1802 = scalar_lea.vmem %s22, %s1801
        // Predicated region
        $region161: #{docking_score_predictor.3} parent=107 // pred_check
          %p1803 = pneg %p530
        $region162: #{docking_score_predictor.3} parent=107 // pred_check_branch
          %1805 = sbr.rel (%p1803) target = $region164
        $region163: #{docking_score_predictor.3} parent=107 // pred_region
          _
        $region164: #{docking_score_predictor.3} parent=107 // pred_fallthru
          _
      $region108: #{docking_score_predictor.3} parent=5 // pred_fallthru
        _
      %p1806 = scmp.le.s32.totalorder 2, %s35
      // Predicated region
      $region165: #{docking_score_predictor.3} parent=5 // pred_check
        %p1807 = pneg %p1806
      $region166: #{docking_score_predictor.3} parent=5 // pred_check_branch
        %1809 = sbr.rel (%p1807) target = $region168
      $region167: #{docking_score_predictor.3} parent=5 // pred_region
        %s1810 = ssub.s32 %s35, 2
        // Predicated region
        $region169: #{docking_score_predictor.3} parent=167 // pred_check
          %p1811 = pneg %p536
        $region170: #{docking_score_predictor.3} parent=167 // pred_check_branch
          %1813 = sbr.rel (%p1811) target = $region172
        $region171: #{docking_score_predictor.3} parent=167 // pred_region
          %p1814 = scmp.lt.s32.totalorder %s41, 1
          %s1815 = scalar_select %p1814, %s41, 1
          %s1816 = smul.addr %s1815, 8
          %s1817 = scalar_lea.vmem %s22, %s1816
        $region172: #{docking_score_predictor.3} parent=167 // pred_fallthru
          _
      $region168: #{docking_score_predictor.3} parent=5 // pred_fallthru
        _
    $region6: #{docking_score_predictor.3} parent=1 // loop_footer
      %s39 = sadd.s32 1, %s35
    $region7: #{docking_score_predictor.3} parent=1 // loop_footer_branch
      %34 = sbr.rel target = $region3
    $region8: #{docking_score_predictor.3} parent=1 // loop_exit
      _
    %1818 = vsyncpa [#allocation3], 1
    %s1819 = scalar_lea.sflag [#allocation3], 1
    %1820 = vsyncpa %s1819, 1
    %1821 = vsyncpa [#allocation5], 1
    %1822 = vsyncpa [#allocation8], 1
    %1823 = vsyncpa [#allocation11], 1
    %1824 = vsyncpa [#allocation14], 1
    %1825 = vsyncpa [#allocation17], 1
    %1826 = vsyncpa [#allocation20], 1

</llo_original>
